<compile_context>
chip_gen: v7x
topology: tpu7x:2x2x1
jax: 0.10.0
libtpu: 0.0.40
codegen_flags: <defaults>
</compile_context>

<pallas_src>
import jax
import jax.numpy as jnp
from jax.experimental import pallas as pl
from jax.experimental.pallas import tpu as pltpu


def decoder_forward(x1, x2, x3=None, params=None, *, eps=1e-5):
    """Pallas Decoder.forward (use_pmm=False path). x1:(N,Cin,H,W), x2:(N,Cout,2H,2W) NCHW."""
    # TODO(synk): PossibilityMinMaxLayer (pmm1/pmm2, use_pmm=True path) is not defined in the
    #             spec; only the default use_pmm=False branch is implemented, so x3 is ignored.
    del x3
    wt, bt, w3, b3, bn_g, bn_b, bn_mean, bn_var = params
    N, Cin, H, W = x1.shape
    Cout = wt.shape[1]
    assert x2.shape == (N, Cout, 2 * H, 2 * W)

    Wp = W + 2                    # padded row pitch (half resolution)
    L_scr = (H + 3) * Wp          # rows of padded+flattened half-res images (+1 slack row)
    L_out = H * Wp                # output rows per parity (each row keeps 2 junk columns)
    C4 = 4 * Cout

    # ---------------- wrapper-side layout + parameter folding (plain XLA glue) -------------
    # x1: NCHW -> NHWC, append constant-1 channel (carries the deconv bias through the
    # matmul and is zero in the padding), zero-pad (1,2)x(1,1), flatten rows.
    x1_nhwc = jnp.transpose(x1, (0, 2, 3, 1))
    x1_aug = jnp.concatenate([x1_nhwc, jnp.ones((N, H, W, 1), x1.dtype)], axis=-1)
    x1_flat = jnp.pad(x1_aug, ((0, 0), (1, 2), (1, 1), (0, 0))).reshape(N, L_scr, Cin + 1)

    # x2 (skip): NCHW -> parity split at half resolution -> zero-pad -> flatten rows.
    # x2p[n, 2p+q, i, j, c] = x2[n, c, 2i+p, 2j+q]
    x2p = x2.reshape(N, Cout, H, 2, W, 2)
    x2p = jnp.transpose(x2p, (0, 3, 5, 2, 4, 1)).reshape(N, 4, H, W, Cout)
    x2_flat = jnp.pad(x2p, ((0, 0), (0, 0), (1, 2), (1, 1), (0, 0))).reshape(N, 4, L_scr, Cout)

    # ConvTranspose2d weights, parity-major on the lane axis, bias as an extra input row.
    wt_mat = jnp.transpose(wt, (0, 2, 3, 1)).reshape(Cin, C4)        # [ci, (2a+b)*Cout + co]
    wt_aug = jnp.concatenate([wt_mat, jnp.tile(bt, (4,)).reshape(1, C4)], axis=0)

    # 3x3 conv weights combined per (row-shift, col-shift) patch across the 4 output parities.
    w3_up = jnp.transpose(w3[:, :Cout], (1, 2, 3, 0))                # (Cin_up, 3, 3, Cout)
    w3_sk = jnp.transpose(w3[:, Cout:], (1, 2, 3, 0))                # (Cin_skip, 3, 3, Cout)
    zer = jnp.zeros((Cout, Cout), w3.dtype)
    a_rows, b_rows, starts, parities = [], [], [], []
    for t_r in (-1, 0, 1, 2):                # full-res row offset 2i + t_r
        rho, p = t_r // 2, t_r % 2
        for t_c in (-1, 0, 1, 2):            # full-res col offset 2j + t_c
            sig, q = t_c // 2, t_c % 2
            starts.append((1 + rho) * Wp + (1 + sig))
            parities.append(2 * p + q)
            ab, bb = [], []
            for a in (0, 1):
                for b in (0, 1):
                    u, v = t_r + 1 - a, t_c + 1 - b
                    if 0 <= u <= 2 and 0 <= v <= 2:
                        ab.append(w3_up[:, u, v, :]); bb.append(w3_sk[:, u, v, :])
                    else:
                        ab.append(zer); bb.append(zer)
            a_rows.append(jnp.concatenate(ab, axis=-1))
            b_rows.append(jnp.concatenate(bb, axis=-1))
    A_comb = jnp.stack(a_rows)   # (16, Cout, 4*Cout): weights hitting the deconv half
    B_comb = jnp.stack(b_rows)   # (16, Cout, 4*Cout): weights hitting the skip half

    # fold conv bias + eval-mode BatchNorm into one affine, tiled over the 4 parity blocks.
    # TODO(synk): BatchNorm2d uses eval-mode running statistics; training-mode batch stats
    #             are not computed in-kernel.
    scale = bn_g / jnp.sqrt(bn_var + eps)
    shift = bn_b + (b3 - bn_mean) * scale
    scale4 = jnp.tile(scale, (4,)).reshape(1, C4)
    shift4 = jnp.tile(shift, (4,)).reshape(1, C4)

    def kernel(x1_ref, x2_ref, wt_ref, a_ref, b_ref, scale_ref, shift_ref, o_ref, up_scr):
        # ConvTranspose2d(k=2,s=2) + bias for all 4 output parities in ONE matmul; the
        # padded layout of x1 makes the halo rows/cols of every parity image exactly zero.
        up_all = jnp.dot(x1_ref[0], wt_ref[...], preferred_element_type=jnp.float32)
        for pq in range(4):
            up_scr[pq] = up_all[:, pq * Cout:(pq + 1) * Cout]

        # 3x3 conv (pad=1) over concat([up, skip]) as 16 shifted contiguous-row matmuls,
        # each producing all 4 output parities (4*Cout lanes) at once.
        acc = jnp.zeros((L_out, C4), jnp.float32)
        for idx in range(16):
            s, pq = starts[idx], parities[idx]
            acc = acc + jnp.dot(up_scr[pq, s:s + L_out, :], a_ref[idx],
                                preferred_element_type=jnp.float32)
            acc = acc + jnp.dot(x2_ref[0, pq, s:s + L_out, :], b_ref[idx],
                                preferred_element_type=jnp.float32)

        # folded conv-bias + BatchNorm(eval) + ReLU, single lane-dense store
        o_ref[0] = jnp.maximum(acc * scale_ref[0] + shift_ref[0], 0.0)

    out = pl.pallas_call(
        kernel,
        out_shape=jax.ShapeDtypeStruct((N, L_out, C4), jnp.float32),
        grid_spec=pltpu.PrefetchScalarGridSpec(
            num_scalar_prefetch=0,
            grid=(N,),
            in_specs=[
                pl.BlockSpec((1, L_scr, Cin + 1), lambda n: (n, 0, 0)),
                pl.BlockSpec((1, 4, L_scr, Cout), lambda n: (n, 0, 0, 0)),
                pl.BlockSpec((Cin + 1, C4), lambda n: (0, 0)),
                pl.BlockSpec((16, Cout, C4), lambda n: (0, 0, 0)),
                pl.BlockSpec((16, Cout, C4), lambda n: (0, 0, 0)),
                pl.BlockSpec((1, C4), lambda n: (0, 0)),
                pl.BlockSpec((1, C4), lambda n: (0, 0)),
            ],
            out_specs=pl.BlockSpec((1, L_out, C4), lambda n: (n, 0, 0)),
            scratch_shapes=[pltpu.VMEM((4, L_scr, Cout), jnp.float32)],
        ),
        compiler_params=pltpu.CompilerParams(dimension_semantics=("parallel",)),
    )(x1_flat, x2_flat, wt_aug, A_comb, B_comb, scale4, shift4)

    # drop the 2 junk columns per row and un-interleave parities in the single NCHW transpose
    out = out.reshape(N, H, Wp, 2, 2, Cout)[:, :, :W]
    out = jnp.transpose(out, (0, 5, 1, 3, 2, 4)).reshape(N, Cout, 2 * H, 2 * W)
    return out


def reference_decoder(x1, x2, params, *, eps=1e-5):
    """Pure-JAX reference (independent formulation) for a sanity check."""
    wt, bt, w3, b3, bn_g, bn_b, bn_mean, bn_var = params
    N, Cin, H, W = x1.shape
    Cout = wt.shape[1]
    hi = jax.lax.Precision.HIGHEST
    up = jnp.einsum('nchw,coab->nohawb', x1, wt, precision=hi)
    up = up.reshape(N, Cout, 2 * H, 2 * W) + bt[None, :, None, None]
    xcat = jnp.concatenate([up, x2], axis=1)
    conv = jax.lax.conv_general_dilated(
        xcat, w3, window_strides=(1, 1), padding=((1, 1), (1, 1)),
        dimension_numbers=('NCHW', 'OIHW', 'NCHW'), precision=hi)
    conv = conv + b3[None, :, None, None]
    y = (conv - bn_mean[None, :, None, None]) / jnp.sqrt(bn_var[None, :, None, None] + eps)
    y = y * bn_g[None, :, None, None] + bn_b[None, :, None, None]
    return jnp.maximum(y, 0.0)


if __name__ == "__main__":
    key = jax.random.PRNGKey(0)
    ks = jax.random.split(key, 12)
    N, Cin, Cout, H, W = 2, 8, 8, 8, 8

    x1 = jax.random.normal(ks[0], (N, Cin, H, W), jnp.float32)
    x2 = jax.random.normal(ks[1], (N, Cout, 2 * H, 2 * W), jnp.float32)
    x3 = jax.random.normal(ks[2], (N, Cout, 2 * H, 2 * W), jnp.float32)   # unused (use_pmm=False)

    wt = 0.3 * jax.random.normal(ks[3], (Cin, Cout, 2, 2), jnp.float32)   # ConvTranspose2d weight
    bt = 0.1 * jax.random.normal(ks[4], (Cout,), jnp.float32)
    w3 = 0.2 * jax.random.normal(ks[5], (Cout, 2 * Cout, 3, 3), jnp.float32)  # Conv2d weight (OIHW)
    b3 = 0.1 * jax.random.normal(ks[6], (Cout,), jnp.float32)
    bn_g = 1.0 + 0.1 * jax.random.normal(ks[7], (Cout,), jnp.float32)
    bn_b = 0.1 * jax.random.normal(ks[8], (Cout,), jnp.float32)
    bn_mean = 0.1 * jax.random.normal(ks[9], (Cout,), jnp.float32)
    bn_var = 0.5 + jax.random.uniform(ks[10], (Cout,), jnp.float32, 0.0, 1.0)

    params = (wt, bt, w3, b3, bn_g, bn_b, bn_mean, bn_var)

    out = jax.block_until_ready(decoder_forward(x1, x2, x3, params))
    ref = jax.block_until_ready(reference_decoder(x1, x2, params))

    assert out.shape == (N, Cout, 2 * H, 2 * W), out.shape
    max_err = float(jnp.max(jnp.abs(out - ref)))
    assert jnp.allclose(out, ref, atol=2e-3, rtol=2e-3), max_err
    print("KERNEL_OK")
</pallas_src>

<mosaic_0001>
module attributes {stable_mosaic.version = 11 : i64} {
  func.func @kernel(%arg0: i32, %arg1: memref<1x110x9xf32, #tpu.memory_space<vmem>>, %arg2: memref<1x4x110x8xf32, #tpu.memory_space<vmem>>, %arg3: memref<9x32xf32, #tpu.memory_space<vmem>>, %arg4: memref<16x8x32xf32, #tpu.memory_space<vmem>>, %arg5: memref<16x8x32xf32, #tpu.memory_space<vmem>>, %arg6: memref<1x32xf32, #tpu.memory_space<vmem>>, %arg7: memref<1x32xf32, #tpu.memory_space<vmem>>, %arg8: memref<1x80x32xf32, #tpu.memory_space<vmem>>, %arg9: memref<4x110x8xf32, #tpu.memory_space<vmem>>) attributes {dimension_semantics = [#tpu.dimension_semantics<parallel>], iteration_bounds = array<i64: 2>, scalar_prefetch = 0 : i64, scratch_operands = 1 : i64, tpu.core_type = #tpu.core_type<tc>, window_params = [{transform_indices = @transform_0, window_bounds = array<i64: 1, 110, 9>}, {transform_indices = @transform_1, window_bounds = array<i64: 1, 4, 110, 8>}, {pipeline_mode = #tpu.pipeline_mode<synchronous>, transform_indices = @transform_2, window_bounds = array<i64: 9, 32>}, {pipeline_mode = #tpu.pipeline_mode<synchronous>, transform_indices = @transform_3, window_bounds = array<i64: 16, 8, 32>}, {pipeline_mode = #tpu.pipeline_mode<synchronous>, transform_indices = @transform_4, window_bounds = array<i64: 16, 8, 32>}, {pipeline_mode = #tpu.pipeline_mode<synchronous>, transform_indices = @transform_5, window_bounds = array<i64: 1, 32>}, {pipeline_mode = #tpu.pipeline_mode<synchronous>, transform_indices = @transform_6, window_bounds = array<i64: 1, 32>}, {transform_indices = @transform_7, window_bounds = array<i64: 1, 80, 32>}]} {
    %c0 = arith.constant 0 : index
    %c0_0 = arith.constant 0 : index
    %c0_1 = arith.constant 0 : index
    %0 = vector.load %arg1[%c0, %c0_0, %c0_1] : memref<1x110x9xf32, #tpu.memory_space<vmem>>, vector<1x110x9xf32>
    %1 = vector.shape_cast %0 : vector<1x110x9xf32> to vector<110x9xf32>
    %c0_2 = arith.constant 0 : index
    %c0_3 = arith.constant 0 : index
    %2 = vector.load %arg3[%c0_2, %c0_3] : memref<9x32xf32, #tpu.memory_space<vmem>>, vector<9x32xf32>
    %cst = arith.constant dense<0.000000e+00> : vector<110x32xf32>
    %3 = tpu.matmul %1, %2, %cst {dimension_numbers = #tpu.dot_dimension_numbers<[1], [0], [0], [1], [0, 0, 1, 1], [], []>} : vector<110x9xf32>, vector<9x32xf32>, vector<110x32xf32> -> vector<110x32xf32>
    %4 = vector.extract_strided_slice %3 {offsets = [0, 0], sizes = [110, 8], strides = [1, 1]} : vector<110x32xf32> to vector<110x8xf32>
    %c0_4 = arith.constant 0 : index
    %c0_5 = arith.constant 0 : index
    %c0_6 = arith.constant 0 : index
    %5 = vector.load %arg9[%c0_4, %c0_5, %c0_6] : memref<4x110x8xf32, #tpu.memory_space<vmem>>, vector<1x110x8xf32>
    %6 = vector.shape_cast %5 : vector<1x110x8xf32> to vector<110x8xf32>
    %7 = vector.shape_cast %4 : vector<110x8xf32> to vector<1x110x8xf32>
    tpu.vector_store %arg9[%c0_4, %c0_5, %c0_6], %7 {strides = array<i32>} : memref<4x110x8xf32, #tpu.memory_space<vmem>>, vector<1x110x8xf32>,
    %8 = vector.extract_strided_slice %3 {offsets = [0, 8], sizes = [110, 8], strides = [1, 1]} : vector<110x32xf32> to vector<110x8xf32>
    %c1 = arith.constant 1 : index
    %c0_7 = arith.constant 0 : index
    %c0_8 = arith.constant 0 : index
    %9 = vector.load %arg9[%c1, %c0_7, %c0_8] : memref<4x110x8xf32, #tpu.memory_space<vmem>>, vector<1x110x8xf32>
    %10 = vector.shape_cast %9 : vector<1x110x8xf32> to vector<110x8xf32>
    %11 = vector.shape_cast %8 : vector<110x8xf32> to vector<1x110x8xf32>
    tpu.vector_store %arg9[%c1, %c0_7, %c0_8], %11 {strides = array<i32>} : memref<4x110x8xf32, #tpu.memory_space<vmem>>, vector<1x110x8xf32>,
    %12 = vector.extract_strided_slice %3 {offsets = [0, 16], sizes = [110, 8], strides = [1, 1]} : vector<110x32xf32> to vector<110x8xf32>
    %c2 = arith.constant 2 : index
    %c0_9 = arith.constant 0 : index
    %c0_10 = arith.constant 0 : index
    %13 = vector.load %arg9[%c2, %c0_9, %c0_10] : memref<4x110x8xf32, #tpu.memory_space<vmem>>, vector<1x110x8xf32>
    %14 = vector.shape_cast %13 : vector<1x110x8xf32> to vector<110x8xf32>
    %15 = vector.shape_cast %12 : vector<110x8xf32> to vector<1x110x8xf32>
    tpu.vector_store %arg9[%c2, %c0_9, %c0_10], %15 {strides = array<i32>} : memref<4x110x8xf32, #tpu.memory_space<vmem>>, vector<1x110x8xf32>,
    %16 = vector.extract_strided_slice %3 {offsets = [0, 24], sizes = [110, 8], strides = [1, 1]} : vector<110x32xf32> to vector<110x8xf32>
    %c3 = arith.constant 3 : index
    %c0_11 = arith.constant 0 : index
    %c0_12 = arith.constant 0 : index
    %17 = vector.load %arg9[%c3, %c0_11, %c0_12] : memref<4x110x8xf32, #tpu.memory_space<vmem>>, vector<1x110x8xf32>
    %18 = vector.shape_cast %17 : vector<1x110x8xf32> to vector<110x8xf32>
    %19 = vector.shape_cast %16 : vector<110x8xf32> to vector<1x110x8xf32>
    tpu.vector_store %arg9[%c3, %c0_11, %c0_12], %19 {strides = array<i32>} : memref<4x110x8xf32, #tpu.memory_space<vmem>>, vector<1x110x8xf32>,
    %cst_13 = arith.constant 0.000000e+00 : f32
    %20 = vector.broadcast %cst_13 : f32 to vector<80x32xf32>
    %c3_14 = arith.constant 3 : index
    %c0_15 = arith.constant 0 : index
    %c0_16 = arith.constant 0 : index
    %21 = vector.load %arg9[%c3_14, %c0_15, %c0_16] : memref<4x110x8xf32, #tpu.memory_space<vmem>>, vector<1x80x8xf32>
    %22 = vector.shape_cast %21 : vector<1x80x8xf32> to vector<80x8xf32>
    %c0_17 = arith.constant 0 : index
    %c0_18 = arith.constant 0 : index
    %c0_19 = arith.constant 0 : index
    %23 = vector.load %arg4[%c0_17, %c0_18, %c0_19] : memref<16x8x32xf32, #tpu.memory_space<vmem>>, vector<1x8x32xf32>
    %24 = vector.shape_cast %23 : vector<1x8x32xf32> to vector<8x32xf32>
    %cst_20 = arith.constant dense<0.000000e+00> : vector<80x32xf32>
    %25 = tpu.matmul %22, %24, %cst_20 {dimension_numbers = #tpu.dot_dimension_numbers<[1], [0], [0], [1], [0, 0, 1, 1], [], []>} : vector<80x8xf32>, vector<8x32xf32>, vector<80x32xf32> -> vector<80x32xf32>
    %26 = arith.addf %20, %25 : vector<80x32xf32>
    %c0_21 = arith.constant 0 : index
    %c3_22 = arith.constant 3 : index
    %c0_23 = arith.constant 0 : index
    %c0_24 = arith.constant 0 : index
    %27 = vector.load %arg2[%c0_21, %c3_22, %c0_23, %c0_24] : memref<1x4x110x8xf32, #tpu.memory_space<vmem>>, vector<1x1x80x8xf32>
    %28 = vector.shape_cast %27 : vector<1x1x80x8xf32> to vector<80x8xf32>
    %c0_25 = arith.constant 0 : index
    %c0_26 = arith.constant 0 : index
    %c0_27 = arith.constant 0 : index
    %29 = vector.load %arg5[%c0_25, %c0_26, %c0_27] : memref<16x8x32xf32, #tpu.memory_space<vmem>>, vector<1x8x32xf32>
    %30 = vector.shape_cast %29 : vector<1x8x32xf32> to vector<8x32xf32>
    %cst_28 = arith.constant dense<0.000000e+00> : vector<80x32xf32>
    %31 = tpu.matmul %28, %30, %cst_28 {dimension_numbers = #tpu.dot_dimension_numbers<[1], [0], [0], [1], [0, 0, 1, 1], [], []>} : vector<80x8xf32>, vector<8x32xf32>, vector<80x32xf32> -> vector<80x32xf32>
    %32 = arith.addf %26, %31 : vector<80x32xf32>
    %c2_29 = arith.constant 2 : index
    %c1_30 = arith.constant 1 : index
    %c0_31 = arith.constant 0 : index
    %33 = vector.load %arg9[%c2_29, %c1_30, %c0_31] : memref<4x110x8xf32, #tpu.memory_space<vmem>>, vector<1x80x8xf32>
    %34 = vector.shape_cast %33 : vector<1x80x8xf32> to vector<80x8xf32>
    %c1_32 = arith.constant 1 : index
    %c0_33 = arith.constant 0 : index
    %c0_34 = arith.constant 0 : index
    %35 = vector.load %arg4[%c1_32, %c0_33, %c0_34] : memref<16x8x32xf32, #tpu.memory_space<vmem>>, vector<1x8x32xf32>
    %36 = vector.shape_cast %35 : vector<1x8x32xf32> to vector<8x32xf32>
    %cst_35 = arith.constant dense<0.000000e+00> : vector<80x32xf32>
    %37 = tpu.matmul %34, %36, %cst_35 {dimension_numbers = #tpu.dot_dimension_numbers<[1], [0], [0], [1], [0, 0, 1, 1], [], []>} : vector<80x8xf32>, vector<8x32xf32>, vector<80x32xf32> -> vector<80x32xf32>
    %38 = arith.addf %32, %37 : vector<80x32xf32>
    %c0_36 = arith.constant 0 : index
    %c2_37 = arith.constant 2 : index
    %c1_38 = arith.constant 1 : index
    %c0_39 = arith.constant 0 : index
    %39 = vector.load %arg2[%c0_36, %c2_37, %c1_38, %c0_39] : memref<1x4x110x8xf32, #tpu.memory_space<vmem>>, vector<1x1x80x8xf32>
    %40 = vector.shape_cast %39 : vector<1x1x80x8xf32> to vector<80x8xf32>
    %c1_40 = arith.constant 1 : index
    %c0_41 = arith.constant 0 : index
    %c0_42 = arith.constant 0 : index
    %41 = vector.load %arg5[%c1_40, %c0_41, %c0_42] : memref<16x8x32xf32, #tpu.memory_space<vmem>>, vector<1x8x32xf32>
    %42 = vector.shape_cast %41 : vector<1x8x32xf32> to vector<8x32xf32>
    %cst_43 = arith.constant dense<0.000000e+00> : vector<80x32xf32>
    %43 = tpu.matmul %40, %42, %cst_43 {dimension_numbers = #tpu.dot_dimension_numbers<[1], [0], [0], [1], [0, 0, 1, 1], [], []>} : vector<80x8xf32>, vector<8x32xf32>, vector<80x32xf32> -> vector<80x32xf32>
    %44 = arith.addf %38, %43 : vector<80x32xf32>
    %c3_44 = arith.constant 3 : index
    %c1_45 = arith.constant 1 : index
    %c0_46 = arith.constant 0 : index
    %45 = vector.load %arg9[%c3_44, %c1_45, %c0_46] : memref<4x110x8xf32, #tpu.memory_space<vmem>>, vector<1x80x8xf32>
    %46 = vector.shape_cast %45 : vector<1x80x8xf32> to vector<80x8xf32>
    %c2_47 = arith.constant 2 : index
    %c0_48 = arith.constant 0 : index
    %c0_49 = arith.constant 0 : index
    %47 = vector.load %arg4[%c2_47, %c0_48, %c0_49] : memref<16x8x32xf32, #tpu.memory_space<vmem>>, vector<1x8x32xf32>
    %48 = vector.shape_cast %47 : vector<1x8x32xf32> to vector<8x32xf32>
    %cst_50 = arith.constant dense<0.000000e+00> : vector<80x32xf32>
    %49 = tpu.matmul %46, %48, %cst_50 {dimension_numbers = #tpu.dot_dimension_numbers<[1], [0], [0], [1], [0, 0, 1, 1], [], []>} : vector<80x8xf32>, vector<8x32xf32>, vector<80x32xf32> -> vector<80x32xf32>
    %50 = arith.addf %44, %49 : vector<80x32xf32>
    %c0_51 = arith.constant 0 : index
    %c3_52 = arith.constant 3 : index
    %c1_53 = arith.constant 1 : index
    %c0_54 = arith.constant 0 : index
    %51 = vector.load %arg2[%c0_51, %c3_52, %c1_53, %c0_54] : memref<1x4x110x8xf32, #tpu.memory_space<vmem>>, vector<1x1x80x8xf32>
    %52 = vector.shape_cast %51 : vector<1x1x80x8xf32> to vector<80x8xf32>
    %c2_55 = arith.constant 2 : index
    %c0_56 = arith.constant 0 : index
    %c0_57 = arith.constant 0 : index
    %53 = vector.load %arg5[%c2_55, %c0_56, %c0_57] : memref<16x8x32xf32, #tpu.memory_space<vmem>>, vector<1x8x32xf32>
    %54 = vector.shape_cast %53 : vector<1x8x32xf32> to vector<8x32xf32>
    %cst_58 = arith.constant dense<0.000000e+00> : vector<80x32xf32>
    %55 = tpu.matmul %52, %54, %cst_58 {dimension_numbers = #tpu.dot_dimension_numbers<[1], [0], [0], [1], [0, 0, 1, 1], [], []>} : vector<80x8xf32>, vector<8x32xf32>, vector<80x32xf32> -> vector<80x32xf32>
    %56 = arith.addf %50, %55 : vector<80x32xf32>
    %c2_59 = arith.constant 2 : index
    %c2_60 = arith.constant 2 : index
    %c0_61 = arith.constant 0 : index
    %57 = vector.load %arg9[%c2_59, %c2_60, %c0_61] : memref<4x110x8xf32, #tpu.memory_space<vmem>>, vector<1x80x8xf32>
    %58 = vector.shape_cast %57 : vector<1x80x8xf32> to vector<80x8xf32>
    %c3_62 = arith.constant 3 : index
    %c0_63 = arith.constant 0 : index
    %c0_64 = arith.constant 0 : index
    %59 = vector.load %arg4[%c3_62, %c0_63, %c0_64] : memref<16x8x32xf32, #tpu.memory_space<vmem>>, vector<1x8x32xf32>
    %60 = vector.shape_cast %59 : vector<1x8x32xf32> to vector<8x32xf32>
    %cst_65 = arith.constant dense<0.000000e+00> : vector<80x32xf32>
    %61 = tpu.matmul %58, %60, %cst_65 {dimension_numbers = #tpu.dot_dimension_numbers<[1], [0], [0], [1], [0, 0, 1, 1], [], []>} : vector<80x8xf32>, vector<8x32xf32>, vector<80x32xf32> -> vector<80x32xf32>
    %62 = arith.addf %56, %61 : vector<80x32xf32>
    %c0_66 = arith.constant 0 : index
    %c2_67 = arith.constant 2 : index
    %c2_68 = arith.constant 2 : index
    %c0_69 = arith.constant 0 : index
    %63 = vector.load %arg2[%c0_66, %c2_67, %c2_68, %c0_69] : memref<1x4x110x8xf32, #tpu.memory_space<vmem>>, vector<1x1x80x8xf32>
    %64 = vector.shape_cast %63 : vector<1x1x80x8xf32> to vector<80x8xf32>
    %c3_70 = arith.constant 3 : index
    %c0_71 = arith.constant 0 : index
    %c0_72 = arith.constant 0 : index
    %65 = vector.load %arg5[%c3_70, %c0_71, %c0_72] : memref<16x8x32xf32, #tpu.memory_space<vmem>>, vector<1x8x32xf32>
    %66 = vector.shape_cast %65 : vector<1x8x32xf32> to vector<8x32xf32>
    %cst_73 = arith.constant dense<0.000000e+00> : vector<80x32xf32>
    %67 = tpu.matmul %64, %66, %cst_73 {dimension_numbers = #tpu.dot_dimension_numbers<[1], [0], [0], [1], [0, 0, 1, 1], [], []>} : vector<80x8xf32>, vector<8x32xf32>, vector<80x32xf32> -> vector<80x32xf32>
    %68 = arith.addf %62, %67 : vector<80x32xf32>
    %c1_74 = arith.constant 1 : index
    %c10 = arith.constant 10 : index
    %c0_75 = arith.constant 0 : index
    %69 = vector.load %arg9[%c1_74, %c10, %c0_75] : memref<4x110x8xf32, #tpu.memory_space<vmem>>, vector<1x80x8xf32>
    %70 = vector.shape_cast %69 : vector<1x80x8xf32> to vector<80x8xf32>
    %c4 = arith.constant 4 : index
    %c0_76 = arith.constant 0 : index
    %c0_77 = arith.constant 0 : index
    %71 = vector.load %arg4[%c4, %c0_76, %c0_77] : memref<16x8x32xf32, #tpu.memory_space<vmem>>, vector<1x8x32xf32>
    %72 = vector.shape_cast %71 : vector<1x8x32xf32> to vector<8x32xf32>
    %cst_78 = arith.constant dense<0.000000e+00> : vector<80x32xf32>
    %73 = tpu.matmul %70, %72, %cst_78 {dimension_numbers = #tpu.dot_dimension_numbers<[1], [0], [0], [1], [0, 0, 1, 1], [], []>} : vector<80x8xf32>, vector<8x32xf32>, vector<80x32xf32> -> vector<80x32xf32>
    %74 = arith.addf %68, %73 : vector<80x32xf32>
    %c0_79 = arith.constant 0 : index
    %c1_80 = arith.constant 1 : index
    %c10_81 = arith.constant 10 : index
    %c0_82 = arith.constant 0 : index
    %75 = vector.load %arg2[%c0_79, %c1_80, %c10_81, %c0_82] : memref<1x4x110x8xf32, #tpu.memory_space<vmem>>, vector<1x1x80x8xf32>
    %76 = vector.shape_cast %75 : vector<1x1x80x8xf32> to vector<80x8xf32>
    %c4_83 = arith.constant 4 : index
    %c0_84 = arith.constant 0 : index
    %c0_85 = arith.constant 0 : index
    %77 = vector.load %arg5[%c4_83, %c0_84, %c0_85] : memref<16x8x32xf32, #tpu.memory_space<vmem>>, vector<1x8x32xf32>
    %78 = vector.shape_cast %77 : vector<1x8x32xf32> to vector<8x32xf32>
    %cst_86 = arith.constant dense<0.000000e+00> : vector<80x32xf32>
    %79 = tpu.matmul %76, %78, %cst_86 {dimension_numbers = #tpu.dot_dimension_numbers<[1], [0], [0], [1], [0, 0, 1, 1], [], []>} : vector<80x8xf32>, vector<8x32xf32>, vector<80x32xf32> -> vector<80x32xf32>
    %80 = arith.addf %74, %79 : vector<80x32xf32>
    %c0_87 = arith.constant 0 : index
    %c11 = arith.constant 11 : index
    %c0_88 = arith.constant 0 : index
    %81 = vector.load %arg9[%c0_87, %c11, %c0_88] : memref<4x110x8xf32, #tpu.memory_space<vmem>>, vector<1x80x8xf32>
    %82 = vector.shape_cast %81 : vector<1x80x8xf32> to vector<80x8xf32>
    %c5 = arith.constant 5 : index
    %c0_89 = arith.constant 0 : index
    %c0_90 = arith.constant 0 : index
    %83 = vector.load %arg4[%c5, %c0_89, %c0_90] : memref<16x8x32xf32, #tpu.memory_space<vmem>>, vector<1x8x32xf32>
    %84 = vector.shape_cast %83 : vector<1x8x32xf32> to vector<8x32xf32>
    %cst_91 = arith.constant dense<0.000000e+00> : vector<80x32xf32>
    %85 = tpu.matmul %82, %84, %cst_91 {dimension_numbers = #tpu.dot_dimension_numbers<[1], [0], [0], [1], [0, 0, 1, 1], [], []>} : vector<80x8xf32>, vector<8x32xf32>, vector<80x32xf32> -> vector<80x32xf32>
    %86 = arith.addf %80, %85 : vector<80x32xf32>
    %c0_92 = arith.constant 0 : index
    %c0_93 = arith.constant 0 : index
    %c11_94 = arith.constant 11 : index
    %c0_95 = arith.constant 0 : index
    %87 = vector.load %arg2[%c0_92, %c0_93, %c11_94, %c0_95] : memref<1x4x110x8xf32, #tpu.memory_space<vmem>>, vector<1x1x80x8xf32>
    %88 = vector.shape_cast %87 : vector<1x1x80x8xf32> to vector<80x8xf32>
    %c5_96 = arith.constant 5 : index
    %c0_97 = arith.constant 0 : index
    %c0_98 = arith.constant 0 : index
    %89 = vector.load %arg5[%c5_96, %c0_97, %c0_98] : memref<16x8x32xf32, #tpu.memory_space<vmem>>, vector<1x8x32xf32>
    %90 = vector.shape_cast %89 : vector<1x8x32xf32> to vector<8x32xf32>
    %cst_99 = arith.constant dense<0.000000e+00> : vector<80x32xf32>
    %91 = tpu.matmul %88, %90, %cst_99 {dimension_numbers = #tpu.dot_dimension_numbers<[1], [0], [0], [1], [0, 0, 1, 1], [], []>} : vector<80x8xf32>, vector<8x32xf32>, vector<80x32xf32> -> vector<80x32xf32>
    %92 = arith.addf %86, %91 : vector<80x32xf32>
    %c1_100 = arith.constant 1 : index
    %c11_101 = arith.constant 11 : index
    %c0_102 = arith.constant 0 : index
    %93 = vector.load %arg9[%c1_100, %c11_101, %c0_102] : memref<4x110x8xf32, #tpu.memory_space<vmem>>, vector<1x80x8xf32>
    %94 = vector.shape_cast %93 : vector<1x80x8xf32> to vector<80x8xf32>
    %c6 = arith.constant 6 : index
    %c0_103 = arith.constant 0 : index
    %c0_104 = arith.constant 0 : index
    %95 = vector.load %arg4[%c6, %c0_103, %c0_104] : memref<16x8x32xf32, #tpu.memory_space<vmem>>, vector<1x8x32xf32>
    %96 = vector.shape_cast %95 : vector<1x8x32xf32> to vector<8x32xf32>
    %cst_105 = arith.constant dense<0.000000e+00> : vector<80x32xf32>
    %97 = tpu.matmul %94, %96, %cst_105 {dimension_numbers = #tpu.dot_dimension_numbers<[1], [0], [0], [1], [0, 0, 1, 1], [], []>} : vector<80x8xf32>, vector<8x32xf32>, vector<80x32xf32> -> vector<80x32xf32>
    %98 = arith.addf %92, %97 : vector<80x32xf32>
    %c0_106 = arith.constant 0 : index
    %c1_107 = arith.constant 1 : index
    %c11_108 = arith.constant 11 : index
    %c0_109 = arith.constant 0 : index
    %99 = vector.load %arg2[%c0_106, %c1_107, %c11_108, %c0_109] : memref<1x4x110x8xf32, #tpu.memory_space<vmem>>, vector<1x1x80x8xf32>
    %100 = vector.shape_cast %99 : vector<1x1x80x8xf32> to vector<80x8xf32>
    %c6_110 = arith.constant 6 : index
    %c0_111 = arith.constant 0 : index
    %c0_112 = arith.constant 0 : index
    %101 = vector.load %arg5[%c6_110, %c0_111, %c0_112] : memref<16x8x32xf32, #tpu.memory_space<vmem>>, vector<1x8x32xf32>
    %102 = vector.shape_cast %101 : vector<1x8x32xf32> to vector<8x32xf32>
    %cst_113 = arith.constant dense<0.000000e+00> : vector<80x32xf32>
    %103 = tpu.matmul %100, %102, %cst_113 {dimension_numbers = #tpu.dot_dimension_numbers<[1], [0], [0], [1], [0, 0, 1, 1], [], []>} : vector<80x8xf32>, vector<8x32xf32>, vector<80x32xf32> -> vector<80x32xf32>
    %104 = arith.addf %98, %103 : vector<80x32xf32>
    %c0_114 = arith.constant 0 : index
    %c12 = arith.constant 12 : index
    %c0_115 = arith.constant 0 : index
    %105 = vector.load %arg9[%c0_114, %c12, %c0_115] : memref<4x110x8xf32, #tpu.memory_space<vmem>>, vector<1x80x8xf32>
    %106 = vector.shape_cast %105 : vector<1x80x8xf32> to vector<80x8xf32>
    %c7 = arith.constant 7 : index
    %c0_116 = arith.constant 0 : index
    %c0_117 = arith.constant 0 : index
    %107 = vector.load %arg4[%c7, %c0_116, %c0_117] : memref<16x8x32xf32, #tpu.memory_space<vmem>>, vector<1x8x32xf32>
    %108 = vector.shape_cast %107 : vector<1x8x32xf32> to vector<8x32xf32>
    %cst_118 = arith.constant dense<0.000000e+00> : vector<80x32xf32>
    %109 = tpu.matmul %106, %108, %cst_118 {dimension_numbers = #tpu.dot_dimension_numbers<[1], [0], [0], [1], [0, 0, 1, 1], [], []>} : vector<80x8xf32>, vector<8x32xf32>, vector<80x32xf32> -> vector<80x32xf32>
    %110 = arith.addf %104, %109 : vector<80x32xf32>
    %c0_119 = arith.constant 0 : index
    %c0_120 = arith.constant 0 : index
    %c12_121 = arith.constant 12 : index
    %c0_122 = arith.constant 0 : index
    %111 = vector.load %arg2[%c0_119, %c0_120, %c12_121, %c0_122] : memref<1x4x110x8xf32, #tpu.memory_space<vmem>>, vector<1x1x80x8xf32>
    %112 = vector.shape_cast %111 : vector<1x1x80x8xf32> to vector<80x8xf32>
    %c7_123 = arith.constant 7 : index
    %c0_124 = arith.constant 0 : index
    %c0_125 = arith.constant 0 : index
    %113 = vector.load %arg5[%c7_123, %c0_124, %c0_125] : memref<16x8x32xf32, #tpu.memory_space<vmem>>, vector<1x8x32xf32>
    %114 = vector.shape_cast %113 : vector<1x8x32xf32> to vector<8x32xf32>
    %cst_126 = arith.constant dense<0.000000e+00> : vector<80x32xf32>
    %115 = tpu.matmul %112, %114, %cst_126 {dimension_numbers = #tpu.dot_dimension_numbers<[1], [0], [0], [1], [0, 0, 1, 1], [], []>} : vector<80x8xf32>, vector<8x32xf32>, vector<80x32xf32> -> vector<80x32xf32>
    %116 = arith.addf %110, %115 : vector<80x32xf32>
    %c3_127 = arith.constant 3 : index
    %c10_128 = arith.constant 10 : index
    %c0_129 = arith.constant 0 : index
    %117 = vector.load %arg9[%c3_127, %c10_128, %c0_129] : memref<4x110x8xf32, #tpu.memory_space<vmem>>, vector<1x80x8xf32>
    %118 = vector.shape_cast %117 : vector<1x80x8xf32> to vector<80x8xf32>
    %c8 = arith.constant 8 : index
    %c0_130 = arith.constant 0 : index
    %c0_131 = arith.constant 0 : index
    %119 = vector.load %arg4[%c8, %c0_130, %c0_131] : memref<16x8x32xf32, #tpu.memory_space<vmem>>, vector<1x8x32xf32>
    %120 = vector.shape_cast %119 : vector<1x8x32xf32> to vector<8x32xf32>
    %cst_132 = arith.constant dense<0.000000e+00> : vector<80x32xf32>
    %121 = tpu.matmul %118, %120, %cst_132 {dimension_numbers = #tpu.dot_dimension_numbers<[1], [0], [0], [1], [0, 0, 1, 1], [], []>} : vector<80x8xf32>, vector<8x32xf32>, vector<80x32xf32> -> vector<80x32xf32>
    %122 = arith.addf %116, %121 : vector<80x32xf32>
    %c0_133 = arith.constant 0 : index
    %c3_134 = arith.constant 3 : index
    %c10_135 = arith.constant 10 : index
    %c0_136 = arith.constant 0 : index
    %123 = vector.load %arg2[%c0_133, %c3_134, %c10_135, %c0_136] : memref<1x4x110x8xf32, #tpu.memory_space<vmem>>, vector<1x1x80x8xf32>
    %124 = vector.shape_cast %123 : vector<1x1x80x8xf32> to vector<80x8xf32>
    %c8_137 = arith.constant 8 : index
    %c0_138 = arith.constant 0 : index
    %c0_139 = arith.constant 0 : index
    %125 = vector.load %arg5[%c8_137, %c0_138, %c0_139] : memref<16x8x32xf32, #tpu.memory_space<vmem>>, vector<1x8x32xf32>
    %126 = vector.shape_cast %125 : vector<1x8x32xf32> to vector<8x32xf32>
    %cst_140 = arith.constant dense<0.000000e+00> : vector<80x32xf32>
    %127 = tpu.matmul %124, %126, %cst_140 {dimension_numbers = #tpu.dot_dimension_numbers<[1], [0], [0], [1], [0, 0, 1, 1], [], []>} : vector<80x8xf32>, vector<8x32xf32>, vector<80x32xf32> -> vector<80x32xf32>
    %128 = arith.addf %122, %127 : vector<80x32xf32>
    %c2_141 = arith.constant 2 : index
    %c11_142 = arith.constant 11 : index
    %c0_143 = arith.constant 0 : index
    %129 = vector.load %arg9[%c2_141, %c11_142, %c0_143] : memref<4x110x8xf32, #tpu.memory_space<vmem>>, vector<1x80x8xf32>
    %130 = vector.shape_cast %129 : vector<1x80x8xf32> to vector<80x8xf32>
    %c9 = arith.constant 9 : index
    %c0_144 = arith.constant 0 : index
    %c0_145 = arith.constant 0 : index
    %131 = vector.load %arg4[%c9, %c0_144, %c0_145] : memref<16x8x32xf32, #tpu.memory_space<vmem>>, vector<1x8x32xf32>
    %132 = vector.shape_cast %131 : vector<1x8x32xf32> to vector<8x32xf32>
    %cst_146 = arith.constant dense<0.000000e+00> : vector<80x32xf32>
    %133 = tpu.matmul %130, %132, %cst_146 {dimension_numbers = #tpu.dot_dimension_numbers<[1], [0], [0], [1], [0, 0, 1, 1], [], []>} : vector<80x8xf32>, vector<8x32xf32>, vector<80x32xf32> -> vector<80x32xf32>
    %134 = arith.addf %128, %133 : vector<80x32xf32>
    %c0_147 = arith.constant 0 : index
    %c2_148 = arith.constant 2 : index
    %c11_149 = arith.constant 11 : index
    %c0_150 = arith.constant 0 : index
    %135 = vector.load %arg2[%c0_147, %c2_148, %c11_149, %c0_150] : memref<1x4x110x8xf32, #tpu.memory_space<vmem>>, vector<1x1x80x8xf32>
    %136 = vector.shape_cast %135 : vector<1x1x80x8xf32> to vector<80x8xf32>
    %c9_151 = arith.constant 9 : index
    %c0_152 = arith.constant 0 : index
    %c0_153 = arith.constant 0 : index
    %137 = vector.load %arg5[%c9_151, %c0_152, %c0_153] : memref<16x8x32xf32, #tpu.memory_space<vmem>>, vector<1x8x32xf32>
    %138 = vector.shape_cast %137 : vector<1x8x32xf32> to vector<8x32xf32>
    %cst_154 = arith.constant dense<0.000000e+00> : vector<80x32xf32>
    %139 = tpu.matmul %136, %138, %cst_154 {dimension_numbers = #tpu.dot_dimension_numbers<[1], [0], [0], [1], [0, 0, 1, 1], [], []>} : vector<80x8xf32>, vector<8x32xf32>, vector<80x32xf32> -> vector<80x32xf32>
    %140 = arith.addf %134, %139 : vector<80x32xf32>
    %c3_155 = arith.constant 3 : index
    %c11_156 = arith.constant 11 : index
    %c0_157 = arith.constant 0 : index
    %141 = vector.load %arg9[%c3_155, %c11_156, %c0_157] : memref<4x110x8xf32, #tpu.memory_space<vmem>>, vector<1x80x8xf32>
    %142 = vector.shape_cast %141 : vector<1x80x8xf32> to vector<80x8xf32>
    %c10_158 = arith.constant 10 : index
    %c0_159 = arith.constant 0 : index
    %c0_160 = arith.constant 0 : index
    %143 = vector.load %arg4[%c10_158, %c0_159, %c0_160] : memref<16x8x32xf32, #tpu.memory_space<vmem>>, vector<1x8x32xf32>
    %144 = vector.shape_cast %143 : vector<1x8x32xf32> to vector<8x32xf32>
    %cst_161 = arith.constant dense<0.000000e+00> : vector<80x32xf32>
    %145 = tpu.matmul %142, %144, %cst_161 {dimension_numbers = #tpu.dot_dimension_numbers<[1], [0], [0], [1], [0, 0, 1, 1], [], []>} : vector<80x8xf32>, vector<8x32xf32>, vector<80x32xf32> -> vector<80x32xf32>
    %146 = arith.addf %140, %145 : vector<80x32xf32>
    %c0_162 = arith.constant 0 : index
    %c3_163 = arith.constant 3 : index
    %c11_164 = arith.constant 11 : index
    %c0_165 = arith.constant 0 : index
    %147 = vector.load %arg2[%c0_162, %c3_163, %c11_164, %c0_165] : memref<1x4x110x8xf32, #tpu.memory_space<vmem>>, vector<1x1x80x8xf32>
    %148 = vector.shape_cast %147 : vector<1x1x80x8xf32> to vector<80x8xf32>
    %c10_166 = arith.constant 10 : index
    %c0_167 = arith.constant 0 : index
    %c0_168 = arith.constant 0 : index
    %149 = vector.load %arg5[%c10_166, %c0_167, %c0_168] : memref<16x8x32xf32, #tpu.memory_space<vmem>>, vector<1x8x32xf32>
    %150 = vector.shape_cast %149 : vector<1x8x32xf32> to vector<8x32xf32>
    %cst_169 = arith.constant dense<0.000000e+00> : vector<80x32xf32>
    %151 = tpu.matmul %148, %150, %cst_169 {dimension_numbers = #tpu.dot_dimension_numbers<[1], [0], [0], [1], [0, 0, 1, 1], [], []>} : vector<80x8xf32>, vector<8x32xf32>, vector<80x32xf32> -> vector<80x32xf32>
    %152 = arith.addf %146, %151 : vector<80x32xf32>
    %c2_170 = arith.constant 2 : index
    %c12_171 = arith.constant 12 : index
    %c0_172 = arith.constant 0 : index
    %153 = vector.load %arg9[%c2_170, %c12_171, %c0_172] : memref<4x110x8xf32, #tpu.memory_space<vmem>>, vector<1x80x8xf32>
    %154 = vector.shape_cast %153 : vector<1x80x8xf32> to vector<80x8xf32>
    %c11_173 = arith.constant 11 : index
    %c0_174 = arith.constant 0 : index
    %c0_175 = arith.constant 0 : index
    %155 = vector.load %arg4[%c11_173, %c0_174, %c0_175] : memref<16x8x32xf32, #tpu.memory_space<vmem>>, vector<1x8x32xf32>
    %156 = vector.shape_cast %155 : vector<1x8x32xf32> to vector<8x32xf32>
    %cst_176 = arith.constant dense<0.000000e+00> : vector<80x32xf32>
    %157 = tpu.matmul %154, %156, %cst_176 {dimension_numbers = #tpu.dot_dimension_numbers<[1], [0], [0], [1], [0, 0, 1, 1], [], []>} : vector<80x8xf32>, vector<8x32xf32>, vector<80x32xf32> -> vector<80x32xf32>
    %158 = arith.addf %152, %157 : vector<80x32xf32>
    %c0_177 = arith.constant 0 : index
    %c2_178 = arith.constant 2 : index
    %c12_179 = arith.constant 12 : index
    %c0_180 = arith.constant 0 : index
    %159 = vector.load %arg2[%c0_177, %c2_178, %c12_179, %c0_180] : memref<1x4x110x8xf32, #tpu.memory_space<vmem>>, vector<1x1x80x8xf32>
    %160 = vector.shape_cast %159 : vector<1x1x80x8xf32> to vector<80x8xf32>
    %c11_181 = arith.constant 11 : index
    %c0_182 = arith.constant 0 : index
    %c0_183 = arith.constant 0 : index
    %161 = vector.load %arg5[%c11_181, %c0_182, %c0_183] : memref<16x8x32xf32, #tpu.memory_space<vmem>>, vector<1x8x32xf32>
    %162 = vector.shape_cast %161 : vector<1x8x32xf32> to vector<8x32xf32>
    %cst_184 = arith.constant dense<0.000000e+00> : vector<80x32xf32>
    %163 = tpu.matmul %160, %162, %cst_184 {dimension_numbers = #tpu.dot_dimension_numbers<[1], [0], [0], [1], [0, 0, 1, 1], [], []>} : vector<80x8xf32>, vector<8x32xf32>, vector<80x32xf32> -> vector<80x32xf32>
    %164 = arith.addf %158, %163 : vector<80x32xf32>
    %c1_185 = arith.constant 1 : index
    %c20 = arith.constant 20 : index
    %c0_186 = arith.constant 0 : index
    %165 = vector.load %arg9[%c1_185, %c20, %c0_186] : memref<4x110x8xf32, #tpu.memory_space<vmem>>, vector<1x80x8xf32>
    %166 = vector.shape_cast %165 : vector<1x80x8xf32> to vector<80x8xf32>
    %c12_187 = arith.constant 12 : index
    %c0_188 = arith.constant 0 : index
    %c0_189 = arith.constant 0 : index
    %167 = vector.load %arg4[%c12_187, %c0_188, %c0_189] : memref<16x8x32xf32, #tpu.memory_space<vmem>>, vector<1x8x32xf32>
    %168 = vector.shape_cast %167 : vector<1x8x32xf32> to vector<8x32xf32>
    %cst_190 = arith.constant dense<0.000000e+00> : vector<80x32xf32>
    %169 = tpu.matmul %166, %168, %cst_190 {dimension_numbers = #tpu.dot_dimension_numbers<[1], [0], [0], [1], [0, 0, 1, 1], [], []>} : vector<80x8xf32>, vector<8x32xf32>, vector<80x32xf32> -> vector<80x32xf32>
    %170 = arith.addf %164, %169 : vector<80x32xf32>
    %c0_191 = arith.constant 0 : index
    %c1_192 = arith.constant 1 : index
    %c20_193 = arith.constant 20 : index
    %c0_194 = arith.constant 0 : index
    %171 = vector.load %arg2[%c0_191, %c1_192, %c20_193, %c0_194] : memref<1x4x110x8xf32, #tpu.memory_space<vmem>>, vector<1x1x80x8xf32>
    %172 = vector.shape_cast %171 : vector<1x1x80x8xf32> to vector<80x8xf32>
    %c12_195 = arith.constant 12 : index
    %c0_196 = arith.constant 0 : index
    %c0_197 = arith.constant 0 : index
    %173 = vector.load %arg5[%c12_195, %c0_196, %c0_197] : memref<16x8x32xf32, #tpu.memory_space<vmem>>, vector<1x8x32xf32>
    %174 = vector.shape_cast %173 : vector<1x8x32xf32> to vector<8x32xf32>
    %cst_198 = arith.constant dense<0.000000e+00> : vector<80x32xf32>
    %175 = tpu.matmul %172, %174, %cst_198 {dimension_numbers = #tpu.dot_dimension_numbers<[1], [0], [0], [1], [0, 0, 1, 1], [], []>} : vector<80x8xf32>, vector<8x32xf32>, vector<80x32xf32> -> vector<80x32xf32>
    %176 = arith.addf %170, %175 : vector<80x32xf32>
    %c0_199 = arith.constant 0 : index
    %c21 = arith.constant 21 : index
    %c0_200 = arith.constant 0 : index
    %177 = vector.load %arg9[%c0_199, %c21, %c0_200] : memref<4x110x8xf32, #tpu.memory_space<vmem>>, vector<1x80x8xf32>
    %178 = vector.shape_cast %177 : vector<1x80x8xf32> to vector<80x8xf32>
    %c13 = arith.constant 13 : index
    %c0_201 = arith.constant 0 : index
    %c0_202 = arith.constant 0 : index
    %179 = vector.load %arg4[%c13, %c0_201, %c0_202] : memref<16x8x32xf32, #tpu.memory_space<vmem>>, vector<1x8x32xf32>
    %180 = vector.shape_cast %179 : vector<1x8x32xf32> to vector<8x32xf32>
    %cst_203 = arith.constant dense<0.000000e+00> : vector<80x32xf32>
    %181 = tpu.matmul %178, %180, %cst_203 {dimension_numbers = #tpu.dot_dimension_numbers<[1], [0], [0], [1], [0, 0, 1, 1], [], []>} : vector<80x8xf32>, vector<8x32xf32>, vector<80x32xf32> -> vector<80x32xf32>
    %182 = arith.addf %176, %181 : vector<80x32xf32>
    %c0_204 = arith.constant 0 : index
    %c0_205 = arith.constant 0 : index
    %c21_206 = arith.constant 21 : index
    %c0_207 = arith.constant 0 : index
    %183 = vector.load %arg2[%c0_204, %c0_205, %c21_206, %c0_207] : memref<1x4x110x8xf32, #tpu.memory_space<vmem>>, vector<1x1x80x8xf32>
    %184 = vector.shape_cast %183 : vector<1x1x80x8xf32> to vector<80x8xf32>
    %c13_208 = arith.constant 13 : index
    %c0_209 = arith.constant 0 : index
    %c0_210 = arith.constant 0 : index
    %185 = vector.load %arg5[%c13_208, %c0_209, %c0_210] : memref<16x8x32xf32, #tpu.memory_space<vmem>>, vector<1x8x32xf32>
    %186 = vector.shape_cast %185 : vector<1x8x32xf32> to vector<8x32xf32>
    %cst_211 = arith.constant dense<0.000000e+00> : vector<80x32xf32>
    %187 = tpu.matmul %184, %186, %cst_211 {dimension_numbers = #tpu.dot_dimension_numbers<[1], [0], [0], [1], [0, 0, 1, 1], [], []>} : vector<80x8xf32>, vector<8x32xf32>, vector<80x32xf32> -> vector<80x32xf32>
    %188 = arith.addf %182, %187 : vector<80x32xf32>
    %c1_212 = arith.constant 1 : index
    %c21_213 = arith.constant 21 : index
    %c0_214 = arith.constant 0 : index
    %189 = vector.load %arg9[%c1_212, %c21_213, %c0_214] : memref<4x110x8xf32, #tpu.memory_space<vmem>>, vector<1x80x8xf32>
    %190 = vector.shape_cast %189 : vector<1x80x8xf32> to vector<80x8xf32>
    %c14 = arith.constant 14 : index
    %c0_215 = arith.constant 0 : index
    %c0_216 = arith.constant 0 : index
    %191 = vector.load %arg4[%c14, %c0_215, %c0_216] : memref<16x8x32xf32, #tpu.memory_space<vmem>>, vector<1x8x32xf32>
    %192 = vector.shape_cast %191 : vector<1x8x32xf32> to vector<8x32xf32>
    %cst_217 = arith.constant dense<0.000000e+00> : vector<80x32xf32>
    %193 = tpu.matmul %190, %192, %cst_217 {dimension_numbers = #tpu.dot_dimension_numbers<[1], [0], [0], [1], [0, 0, 1, 1], [], []>} : vector<80x8xf32>, vector<8x32xf32>, vector<80x32xf32> -> vector<80x32xf32>
    %194 = arith.addf %188, %193 : vector<80x32xf32>
    %c0_218 = arith.constant 0 : index
    %c1_219 = arith.constant 1 : index
    %c21_220 = arith.constant 21 : index
    %c0_221 = arith.constant 0 : index
    %195 = vector.load %arg2[%c0_218, %c1_219, %c21_220, %c0_221] : memref<1x4x110x8xf32, #tpu.memory_space<vmem>>, vector<1x1x80x8xf32>
    %196 = vector.shape_cast %195 : vector<1x1x80x8xf32> to vector<80x8xf32>
    %c14_222 = arith.constant 14 : index
    %c0_223 = arith.constant 0 : index
    %c0_224 = arith.constant 0 : index
    %197 = vector.load %arg5[%c14_222, %c0_223, %c0_224] : memref<16x8x32xf32, #tpu.memory_space<vmem>>, vector<1x8x32xf32>
    %198 = vector.shape_cast %197 : vector<1x8x32xf32> to vector<8x32xf32>
    %cst_225 = arith.constant dense<0.000000e+00> : vector<80x32xf32>
    %199 = tpu.matmul %196, %198, %cst_225 {dimension_numbers = #tpu.dot_dimension_numbers<[1], [0], [0], [1], [0, 0, 1, 1], [], []>} : vector<80x8xf32>, vector<8x32xf32>, vector<80x32xf32> -> vector<80x32xf32>
    %200 = arith.addf %194, %199 : vector<80x32xf32>
    %c0_226 = arith.constant 0 : index
    %c22 = arith.constant 22 : index
    %c0_227 = arith.constant 0 : index
    %201 = vector.load %arg9[%c0_226, %c22, %c0_227] : memref<4x110x8xf32, #tpu.memory_space<vmem>>, vector<1x80x8xf32>
    %202 = vector.shape_cast %201 : vector<1x80x8xf32> to vector<80x8xf32>
    %c15 = arith.constant 15 : index
    %c0_228 = arith.constant 0 : index
    %c0_229 = arith.constant 0 : index
    %203 = vector.load %arg4[%c15, %c0_228, %c0_229] : memref<16x8x32xf32, #tpu.memory_space<vmem>>, vector<1x8x32xf32>
    %204 = vector.shape_cast %203 : vector<1x8x32xf32> to vector<8x32xf32>
    %cst_230 = arith.constant dense<0.000000e+00> : vector<80x32xf32>
    %205 = tpu.matmul %202, %204, %cst_230 {dimension_numbers = #tpu.dot_dimension_numbers<[1], [0], [0], [1], [0, 0, 1, 1], [], []>} : vector<80x8xf32>, vector<8x32xf32>, vector<80x32xf32> -> vector<80x32xf32>
    %206 = arith.addf %200, %205 : vector<80x32xf32>
    %c0_231 = arith.constant 0 : index
    %c0_232 = arith.constant 0 : index
    %c22_233 = arith.constant 22 : index
    %c0_234 = arith.constant 0 : index
    %207 = vector.load %arg2[%c0_231, %c0_232, %c22_233, %c0_234] : memref<1x4x110x8xf32, #tpu.memory_space<vmem>>, vector<1x1x80x8xf32>
    %208 = vector.shape_cast %207 : vector<1x1x80x8xf32> to vector<80x8xf32>
    %c15_235 = arith.constant 15 : index
    %c0_236 = arith.constant 0 : index
    %c0_237 = arith.constant 0 : index
    %209 = vector.load %arg5[%c15_235, %c0_236, %c0_237] : memref<16x8x32xf32, #tpu.memory_space<vmem>>, vector<1x8x32xf32>
    %210 = vector.shape_cast %209 : vector<1x8x32xf32> to vector<8x32xf32>
    %cst_238 = arith.constant dense<0.000000e+00> : vector<80x32xf32>
    %211 = tpu.matmul %208, %210, %cst_238 {dimension_numbers = #tpu.dot_dimension_numbers<[1], [0], [0], [1], [0, 0, 1, 1], [], []>} : vector<80x8xf32>, vector<8x32xf32>, vector<80x32xf32> -> vector<80x32xf32>
    %212 = arith.addf %206, %211 : vector<80x32xf32>
    %c0_239 = arith.constant 0 : index
    %c0_240 = arith.constant 0 : index
    %213 = vector.load %arg6[%c0_239, %c0_240] : memref<1x32xf32, #tpu.memory_space<vmem>>, vector<1x32xf32>
    %214 = vector.shape_cast %213 : vector<1x32xf32> to vector<32xf32>
    %215 = vector.shape_cast %214 : vector<32xf32> to vector<1x32xf32>
    %216 = vector.broadcast %215 : vector<1x32xf32> to vector<80x32xf32>
    %217 = arith.mulf %212, %216 : vector<80x32xf32>
    %c0_241 = arith.constant 0 : index
    %c0_242 = arith.constant 0 : index
    %218 = vector.load %arg7[%c0_241, %c0_242] : memref<1x32xf32, #tpu.memory_space<vmem>>, vector<1x32xf32>
    %219 = vector.shape_cast %218 : vector<1x32xf32> to vector<32xf32>
    %220 = vector.shape_cast %219 : vector<32xf32> to vector<1x32xf32>
    %221 = vector.broadcast %220 : vector<1x32xf32> to vector<80x32xf32>
    %222 = arith.addf %217, %221 : vector<80x32xf32>
    %cst_243 = arith.constant 0.000000e+00 : f32
    %223 = vector.broadcast %cst_243 : f32 to vector<80x32xf32>
    %224 = arith.maximumf %222, %223 : vector<80x32xf32>
    %c0_244 = arith.constant 0 : index
    %c0_245 = arith.constant 0 : index
    %c0_246 = arith.constant 0 : index
    %225 = vector.load %arg8[%c0_244, %c0_245, %c0_246] : memref<1x80x32xf32, #tpu.memory_space<vmem>>, vector<1x80x32xf32>
    %226 = vector.shape_cast %225 : vector<1x80x32xf32> to vector<80x32xf32>
    %227 = vector.shape_cast %224 : vector<80x32xf32> to vector<1x80x32xf32>
    tpu.vector_store %arg8[%c0_244, %c0_245, %c0_246], %227 {strides = array<i32>} : memref<1x80x32xf32, #tpu.memory_space<vmem>>, vector<1x80x32xf32>,
    return
  }
  func.func @transform_0(%arg0: i32) -> (i32, i32, i32) {
    %c0_i32 = arith.constant 0 : i32
    %c0_i32_0 = arith.constant 0 : i32
    %c0_i32_1 = arith.constant 0 : i32
    return %arg0, %c0_i32, %c0_i32_0 : i32, i32, i32
  }
  func.func @transform_1(%arg0: i32) -> (i32, i32, i32, i32) {
    %c0_i32 = arith.constant 0 : i32
    %c0_i32_0 = arith.constant 0 : i32
    %c0_i32_1 = arith.constant 0 : i32
    %c0_i32_2 = arith.constant 0 : i32
    return %arg0, %c0_i32, %c0_i32_0, %c0_i32_1 : i32, i32, i32, i32
  }
  func.func @transform_2(%arg0: i32) -> (i32, i32) {
    %c0_i32 = arith.constant 0 : i32
    %c0_i32_0 = arith.constant 0 : i32
    %c0_i32_1 = arith.constant 0 : i32
    return %c0_i32, %c0_i32_0 : i32, i32
  }
  func.func @transform_3(%arg0: i32) -> (i32, i32, i32) {
    %c0_i32 = arith.constant 0 : i32
    %c0_i32_0 = arith.constant 0 : i32
    %c0_i32_1 = arith.constant 0 : i32
    %c0_i32_2 = arith.constant 0 : i32
    return %c0_i32, %c0_i32_0, %c0_i32_1 : i32, i32, i32
  }
  func.func @transform_4(%arg0: i32) -> (i32, i32, i32) {
    %c0_i32 = arith.constant 0 : i32
    %c0_i32_0 = arith.constant 0 : i32
    %c0_i32_1 = arith.constant 0 : i32
    %c0_i32_2 = arith.constant 0 : i32
    return %c0_i32, %c0_i32_0, %c0_i32_1 : i32, i32, i32
  }
  func.func @transform_5(%arg0: i32) -> (i32, i32) {
    %c0_i32 = arith.constant 0 : i32
    %c0_i32_0 = arith.constant 0 : i32
    %c0_i32_1 = arith.constant 0 : i32
    return %c0_i32, %c0_i32_0 : i32, i32
  }
  func.func @transform_6(%arg0: i32) -> (i32, i32) {
    %c0_i32 = arith.constant 0 : i32
    %c0_i32_0 = arith.constant 0 : i32
    %c0_i32_1 = arith.constant 0 : i32
    return %c0_i32, %c0_i32_0 : i32, i32
  }
  func.func @transform_7(%arg0: i32) -> (i32, i32, i32) {
    %c0_i32 = arith.constant 0 : i32
    %c0_i32_0 = arith.constant 0 : i32
    %c0_i32_1 = arith.constant 0 : i32
    return %arg0, %c0_i32, %c0_i32_0 : i32, i32, i32
  }
}

</mosaic_0001>

<llo_original>
// kernel: tpu_custom_call.1
$region0: #{tpu_custom_call.1}
  #allocation0 [shape = 'u32[]', space=smem, size = 0x4, offset = 0x4, fixed_abs, tag = 'smem constant byte address 0x4 - core index']
  #allocation1 [shape = 'u32[144,128]{1,0:T(1,128)}', space=vmem, size = 0x12000, scoped, tag = 'internal scratch']
  #allocation2 [shape = 'f32[4,110,8]{2,1,0:T(8,128)}', space=vmem, size = 0x38000, scoped, tag = 'scratch operand']
  %s0 = inlined_call_operand.vmem [shape: f32[2,110,9], index: 0, kind: input, shape index: {}]
  %s1 = inlined_call_operand.vmem [shape: f32[2,4,110,8], index: 1, kind: input, shape index: {}]
  %s2 = inlined_call_operand.vmem [shape: f32[9,32], index: 2, kind: input, shape index: {}]
  %s3 = inlined_call_operand.vmem [shape: f32[16,8,32], index: 3, kind: input, shape index: {}]
  %s4 = inlined_call_operand.vmem [shape: f32[16,8,32], index: 4, kind: input, shape index: {}]
  %s5 = inlined_call_operand.vmem [shape: f32[1,32], index: 5, kind: input, shape index: {}]
  %s6 = inlined_call_operand.vmem [shape: f32[1,32], index: 6, kind: input, shape index: {}]
  %s7 = inlined_call_operand.vmem [shape: f32[2,80,32], index: 7, kind: output, shape index: {}]
  %s8 = sld [smem:[#allocation0]]
  $region61: #{tpu_custom_call.1} parent=0
    _
  %s10 = ssub.s32 1, %s8
  %s11 = scalar_select 0, %s10, %s8
  loop: start=0, step=1, limit=4
  $region2: #{tpu_custom_call.1} parent=0 // loop_pre_header
    _
  $region3: #{tpu_custom_call.1} parent=0 // loop_header
    %s13 = sphi 0, %s17
    %p14 = scmp.ge.s32.totalorder %s13, 4
    %s23 = sphi 0, %s25
    %s26 = sphi 0, %s23
    %s27 = sphi 0, %s26
    %s43 = sphi 0, %s27
    %s49 = sphi 0, %s51
    %s52 = sphi 0, %s49
    %s53 = sphi 0, %s52
    %s69 = sphi 0, %s53
    %s73 = sphi 0, %s73
    %s75 = sphi 0, %s73
    %s76 = sphi 0, %s75
    %s90 = sphi 0, %s76
    %s94 = sphi 0, %s94
    %s96 = sphi 0, %s94
    %s97 = sphi 0, %s96
    %s111 = sphi 0, %s97
    %s115 = sphi 0, %s115
    %s117 = sphi 0, %s115
    %s118 = sphi 0, %s117
    %s132 = sphi 0, %s118
    %s136 = sphi 0, %s136
    %s138 = sphi 0, %s136
    %s139 = sphi 0, %s138
    %s153 = sphi 0, %s139
    %s157 = sphi 0, %s157
    %s159 = sphi 0, %s157
    %s160 = sphi 0, %s159
    %s174 = sphi 0, %s160
    %s180 = sphi 0, %s182
    %s183 = sphi 0, %s180
    %s184 = sphi 0, %s183
    %s200 = sphi 0, %s184
  $region4: #{tpu_custom_call.1} parent=0 // loop_header_branch
    %16 = sbr.rel (%p14) target = $region8
  $region5: #{tpu_custom_call.1} parent=0 // loop_body
    %s18 = ssub.s32 %s13, 1
    %s19 = ssub.s32 %s13, 2
    %s20 = sadd.s32 %s13, 1
    %s21 = ssub.s32 %s13, %s20
    %p22 = scmp.eq.s32.totalorder %s21, 0
    %s24 = sadd.s32 %s23, 1
    %s25 = scalar_select %p22, %s23, %s24
    %p28 = pneg %p22
    %p29 = scmp.eq.s32.totalorder %s13, 1
    %p30 = por %p28, %p29
    %p31 = scmp.ne.s32.totalorder %s23, %s26
    %p32 = scmp.eq.s32.totalorder %s13, 0
    %p33 = por %p31, %p32
    %p34 = scmp.ne.s32.totalorder %s23, %s26
    %p35 = scmp.eq.s32.totalorder %s18, 1
    %p36 = por %p34, %p35
    %p37 = scmp.ne.s32.totalorder %s26, %s27
    %p38 = scmp.eq.s32.totalorder %s18, 0
    %p39 = por %p37, %p38
    %p40 = scmp.ne.s32.totalorder %s26, %s27
    %p41 = scmp.eq.s32.totalorder %s19, 1
    %p42 = por %p40, %p41
    %p44 = scmp.ne.s32.totalorder %s27, %s43
    %p45 = scmp.eq.s32.totalorder %s19, 0
    %p46 = por %p44, %p45
    %s47 = ssub.s32 %s13, %s20
    %p48 = scmp.eq.s32.totalorder %s47, 0
    %s50 = sadd.s32 %s49, 1
    %s51 = scalar_select %p48, %s49, %s50
    %p54 = pneg %p48
    %p55 = scmp.eq.s32.totalorder %s13, 1
    %p56 = por %p54, %p55
    %p57 = scmp.ne.s32.totalorder %s49, %s52
    %p58 = scmp.eq.s32.totalorder %s13, 0
    %p59 = por %p57, %p58
    %p60 = scmp.ne.s32.totalorder %s49, %s52
    %p61 = scmp.eq.s32.totalorder %s18, 1
    %p62 = por %p60, %p61
    %p63 = scmp.ne.s32.totalorder %s52, %s53
    %p64 = scmp.eq.s32.totalorder %s18, 0
    %p65 = por %p63, %p64
    %p66 = scmp.ne.s32.totalorder %s52, %s53
    %p67 = scmp.eq.s32.totalorder %s19, 1
    %p68 = por %p66, %p67
    %p70 = scmp.ne.s32.totalorder %s53, %s69
    %p71 = scmp.eq.s32.totalorder %s19, 0
    %p72 = por %p70, %p71
    %s74 = sadd.s32 %s73, 1
    %p77 = scmp.eq.s32.totalorder %s13, 1
    %p78 = scmp.ne.s32.totalorder %s73, %s75
    %p79 = scmp.eq.s32.totalorder %s13, 0
    %p80 = por %p78, %p79
    %p81 = scmp.ne.s32.totalorder %s73, %s75
    %p82 = scmp.eq.s32.totalorder %s18, 1
    %p83 = por %p81, %p82
    %p84 = scmp.ne.s32.totalorder %s75, %s76
    %p85 = scmp.eq.s32.totalorder %s18, 0
    %p86 = por %p84, %p85
    %p87 = scmp.ne.s32.totalorder %s75, %s76
    %p88 = scmp.eq.s32.totalorder %s19, 1
    %p89 = por %p87, %p88
    %p91 = scmp.ne.s32.totalorder %s76, %s90
    %p92 = scmp.eq.s32.totalorder %s19, 0
    %p93 = por %p91, %p92
    %s95 = sadd.s32 %s94, 1
    %p98 = scmp.eq.s32.totalorder %s13, 1
    %p99 = scmp.ne.s32.totalorder %s94, %s96
    %p100 = scmp.eq.s32.totalorder %s13, 0
    %p101 = por %p99, %p100
    %p102 = scmp.ne.s32.totalorder %s94, %s96
    %p103 = scmp.eq.s32.totalorder %s18, 1
    %p104 = por %p102, %p103
    %p105 = scmp.ne.s32.totalorder %s96, %s97
    %p106 = scmp.eq.s32.totalorder %s18, 0
    %p107 = por %p105, %p106
    %p108 = scmp.ne.s32.totalorder %s96, %s97
    %p109 = scmp.eq.s32.totalorder %s19, 1
    %p110 = por %p108, %p109
    %p112 = scmp.ne.s32.totalorder %s97, %s111
    %p113 = scmp.eq.s32.totalorder %s19, 0
    %p114 = por %p112, %p113
    %s116 = sadd.s32 %s115, 1
    %p119 = scmp.eq.s32.totalorder %s13, 1
    %p120 = scmp.ne.s32.totalorder %s115, %s117
    %p121 = scmp.eq.s32.totalorder %s13, 0
    %p122 = por %p120, %p121
    %p123 = scmp.ne.s32.totalorder %s115, %s117
    %p124 = scmp.eq.s32.totalorder %s18, 1
    %p125 = por %p123, %p124
    %p126 = scmp.ne.s32.totalorder %s117, %s118
    %p127 = scmp.eq.s32.totalorder %s18, 0
    %p128 = por %p126, %p127
    %p129 = scmp.ne.s32.totalorder %s117, %s118
    %p130 = scmp.eq.s32.totalorder %s19, 1
    %p131 = por %p129, %p130
    %p133 = scmp.ne.s32.totalorder %s118, %s132
    %p134 = scmp.eq.s32.totalorder %s19, 0
    %p135 = por %p133, %p134
    %s137 = sadd.s32 %s136, 1
    %p140 = scmp.eq.s32.totalorder %s13, 1
    %p141 = scmp.ne.s32.totalorder %s136, %s138
    %p142 = scmp.eq.s32.totalorder %s13, 0
    %p143 = por %p141, %p142
    %p144 = scmp.ne.s32.totalorder %s136, %s138
    %p145 = scmp.eq.s32.totalorder %s18, 1
    %p146 = por %p144, %p145
    %p147 = scmp.ne.s32.totalorder %s138, %s139
    %p148 = scmp.eq.s32.totalorder %s18, 0
    %p149 = por %p147, %p148
    %p150 = scmp.ne.s32.totalorder %s138, %s139
    %p151 = scmp.eq.s32.totalorder %s19, 1
    %p152 = por %p150, %p151
    %p154 = scmp.ne.s32.totalorder %s139, %s153
    %p155 = scmp.eq.s32.totalorder %s19, 0
    %p156 = por %p154, %p155
    %s158 = sadd.s32 %s157, 1
    %p161 = scmp.eq.s32.totalorder %s13, 1
    %p162 = scmp.ne.s32.totalorder %s157, %s159
    %p163 = scmp.eq.s32.totalorder %s13, 0
    %p164 = por %p162, %p163
    %p165 = scmp.ne.s32.totalorder %s157, %s159
    %p166 = scmp.eq.s32.totalorder %s18, 1
    %p167 = por %p165, %p166
    %p168 = scmp.ne.s32.totalorder %s159, %s160
    %p169 = scmp.eq.s32.totalorder %s18, 0
    %p170 = por %p168, %p169
    %p171 = scmp.ne.s32.totalorder %s159, %s160
    %p172 = scmp.eq.s32.totalorder %s19, 1
    %p173 = por %p171, %p172
    %p175 = scmp.ne.s32.totalorder %s160, %s174
    %p176 = scmp.eq.s32.totalorder %s19, 0
    %p177 = por %p175, %p176
    %s178 = ssub.s32 %s13, %s20
    %p179 = scmp.eq.s32.totalorder %s178, 0
    %s181 = sadd.s32 %s180, 1
    %s182 = scalar_select %p179, %s180, %s181
    %p185 = pneg %p179
    %p186 = scmp.eq.s32.totalorder %s13, 1
    %p187 = por %p185, %p186
    %p188 = scmp.ne.s32.totalorder %s180, %s183
    %p189 = scmp.eq.s32.totalorder %s13, 0
    %p190 = por %p188, %p189
    %p191 = scmp.ne.s32.totalorder %s180, %s183
    %p192 = scmp.eq.s32.totalorder %s18, 1
    %p193 = por %p191, %p192
    %p194 = scmp.ne.s32.totalorder %s183, %s184
    %p195 = scmp.eq.s32.totalorder %s18, 0
    %p196 = por %p194, %p195
    %p197 = scmp.ne.s32.totalorder %s183, %s184
    %p198 = scmp.eq.s32.totalorder %s19, 1
    %p199 = por %p197, %p198
    %p201 = scmp.ne.s32.totalorder %s184, %s200
    %p202 = scmp.eq.s32.totalorder %s19, 0
    %p203 = por %p201, %p202
    %p204 = scmp.le.s32.totalorder 1, %s13
    %p205 = scmp.lt.s32.totalorder %s13, 3
    %p206 = pnand %p204, %p205
    %p207 = pneg %p206
    // Predicated region
    $region9: #{tpu_custom_call.1} parent=5 // pred_check
      _
    $region10: #{tpu_custom_call.1} parent=5 // pred_check_branch
      %209 = sbr.rel (%p206) target = $region12
    $region11: #{tpu_custom_call.1} parent=5 // pred_region
      %s210 = ssub.s32 %s13, 1
      // Predicated region
      $region13: #{tpu_custom_call.1} parent=11 // pred_check
        %p211 = pneg %p86
      $region14: #{tpu_custom_call.1} parent=11 // pred_check_branch
        %213 = sbr.rel (%p211) target = $region16
      $region15: #{tpu_custom_call.1} parent=11 // pred_region
        _
      $region16: #{tpu_custom_call.1} parent=11 // pred_fallthru
        _
      // Predicated region
      $region17: #{tpu_custom_call.1} parent=11 // pred_check
        %p214 = pneg %p107
      $region18: #{tpu_custom_call.1} parent=11 // pred_check_branch
        %216 = sbr.rel (%p214) target = $region20
      $region19: #{tpu_custom_call.1} parent=11 // pred_region
        _
      $region20: #{tpu_custom_call.1} parent=11 // pred_fallthru
        _
      // Predicated region
      $region21: #{tpu_custom_call.1} parent=11 // pred_check
        %p217 = pneg %p128
      $region22: #{tpu_custom_call.1} parent=11 // pred_check_branch
        %219 = sbr.rel (%p217) target = $region24
      $region23: #{tpu_custom_call.1} parent=11 // pred_region
        _
      $region24: #{tpu_custom_call.1} parent=11 // pred_fallthru
        _
      // Predicated region
      $region25: #{tpu_custom_call.1} parent=11 // pred_check
        %p220 = pneg %p149
      $region26: #{tpu_custom_call.1} parent=11 // pred_check_branch
        %222 = sbr.rel (%p220) target = $region28
      $region27: #{tpu_custom_call.1} parent=11 // pred_region
        _
      $region28: #{tpu_custom_call.1} parent=11 // pred_fallthru
        _
      // Predicated region
      $region29: #{tpu_custom_call.1} parent=11 // pred_check
        %p223 = pneg %p170
      $region30: #{tpu_custom_call.1} parent=11 // pred_check_branch
        %225 = sbr.rel (%p223) target = $region32
      $region31: #{tpu_custom_call.1} parent=11 // pred_region
        _
      $region32: #{tpu_custom_call.1} parent=11 // pred_fallthru
        _
    $region12: #{tpu_custom_call.1} parent=5 // pred_fallthru
      _
    %p226 = scmp.lt.s32.totalorder %s13, 2
    // Predicated region
    $region33: #{tpu_custom_call.1} parent=5 // pred_check
      %p227 = pneg %p226
    $region34: #{tpu_custom_call.1} parent=5 // pred_check_branch
      %229 = sbr.rel (%p227) target = $region36
    $region35: #{tpu_custom_call.1} parent=5 // pred_region
      // Predicated region
      $region37: #{tpu_custom_call.1} parent=35 // pred_check
        %p230 = pneg %p33
      $region38: #{tpu_custom_call.1} parent=35 // pred_check_branch
        %232 = sbr.rel (%p230) target = $region40
      $region39: #{tpu_custom_call.1} parent=35 // pred_region
        %p233 = scmp.lt.s32.totalorder %s13, 1
        %s234 = scalar_select %p233, %s13, 1
        %s235 = smul.addr %s234, 14
        %s236 = smul.addr %s235, 8
        %s237 = scalar_lea.vmem %s0, %s236
      $region40: #{tpu_custom_call.1} parent=35 // pred_fallthru
        _
      // Predicated region
      $region41: #{tpu_custom_call.1} parent=35 // pred_check
        %p238 = pneg %p59
      $region42: #{tpu_custom_call.1} parent=35 // pred_check_branch
        %240 = sbr.rel (%p238) target = $region44
      $region43: #{tpu_custom_call.1} parent=35 // pred_region
        %p241 = scmp.lt.s32.totalorder %s13, 1
        %s242 = scalar_select %p241, %s13, 1
        %s243 = smul.addr %s242, 56
        %s244 = smul.addr %s243, 8
        %s245 = scalar_lea.vmem %s1, %s244
      $region44: #{tpu_custom_call.1} parent=35 // pred_fallthru
        _
    $region36: #{tpu_custom_call.1} parent=5 // pred_fallthru
      _
    %p246 = scmp.le.s32.totalorder 1, %s13
    %p247 = scmp.lt.s32.totalorder %s13, 3
    %p248 = pnand %p246, %p247
    %p249 = pneg %p248
    // Predicated region
    $region45: #{tpu_custom_call.1} parent=5 // pred_check
      _
    $region46: #{tpu_custom_call.1} parent=5 // pred_check_branch
      %251 = sbr.rel (%p248) target = $region48
    $region47: #{tpu_custom_call.1} parent=5 // pred_region
      %s252 = ssub.s32 %s13, 1
      %p253 = scmp.lt.s32.totalorder %s18, 1
      %s254 = scalar_select %p253, %s18, 1
      %s255 = smul.addr %s254, 14
      %s256 = smul.addr %s255, 8
      %s257 = scalar_lea.vmem %s0, %s256
      %p258 = pneg %p39
      %p259 = pneg %p36
      %p260 = scmp.lt.s32.totalorder %s18, 1
      %s261 = scalar_select %p260, %s18, 1
      %s262 = smul.addr %s261, 56
      %s263 = smul.addr %s262, 8
      %s264 = scalar_lea.vmem %s1, %s263
      %p265 = pneg %p65
      %p266 = pneg %p62
      %p267 = pneg %p86
      %p268 = pneg %p83
      %p269 = pneg %p107
      %p270 = pneg %p104
      %p271 = pneg %p128
      %p272 = pneg %p125
      %p273 = pneg %p149
      %p274 = pneg %p146
      %p275 = pneg %p170
      %p276 = pneg %p167
      %p277 = pneg %p196
      %p278 = pneg %p193
      %p279 = scmp.lt.s32.totalorder %s18, 1
      %s280 = scalar_select %p279, %s18, 1
      %s281 = smul.addr %s280, 10
      %s282 = smul.addr %s281, 8
      %s283 = scalar_lea.vmem %s7, %s282
      %p284 = scmp.lt.s32.totalorder %s18, 1
      %s285 = scalar_select %p284, %s18, 1
      %s286 = smul.addr %s285, 14
      %s287 = smul.addr %s286, 8
      %s288 = scalar_lea.vmem %s0, %s287
      %p289 = scmp.lt.s32.totalorder %s18, 1
      %s290 = scalar_select %p289, %s18, 1
      %s291 = smul.addr %s290, 56
      %s292 = smul.addr %s291, 8
      %s293 = scalar_lea.vmem %s1, %s292
      %p294 = scmp.lt.s32.totalorder %s18, 1
      %s295 = scalar_select %p294, %s18, 1
      %s296 = smul.addr %s295, 10
      %s297 = smul.addr %s296, 8
      %s298 = scalar_lea.vmem %s7, %s297
      %v299 = vld [vmem:[%s288] sm:$0xff]
      %v300 = vld [vmem:[%s288 + $0x8] sm:$0xff]
      %v301 = vld [vmem:[%s288 + $0x10] sm:$0xff]
      %v302 = vld [vmem:[%s288 + $0x18] sm:$0xff]
      %v303 = vld [vmem:[%s288 + $0x20] sm:$0xff]
      %v304 = vld [vmem:[%s288 + $0x28] sm:$0xff]
      %v305 = vld [vmem:[%s288 + $0x30] sm:$0xff]
      %v306 = vld [vmem:[%s288 + $0x38] sm:$0xff]
      %v307 = vld [vmem:[%s288 + $0x40] sm:$0xff]
      %v308 = vld [vmem:[%s288 + $0x48] sm:$0xff]
      %v309 = vld [vmem:[%s288 + $0x50] sm:$0xff]
      %v310 = vld [vmem:[%s288 + $0x58] sm:$0xff]
      %v311 = vld [vmem:[%s288 + $0x60] sm:$0xff]
      %v312 = vld [vmem:[%s288 + $0x68] sm:$0x3f]
      %v313 = vld [vmem:[%s2] sm:$0xff]
      %v314 = vld [vmem:[%s2 + $0x8] sm:$0x1]
      %vm315 = vcmask 72704
      %v317 = vsel %vm315, %v299, 0
      %v320 = vsel %vm315, %v300, 0
      %v323 = vsel %vm315, %v301, 0
      %v326 = vsel %vm315, %v302, 0
      %v329 = vsel %vm315, %v303, 0
      %v332 = vsel %vm315, %v304, 0
      %v335 = vsel %vm315, %v305, 0
      %v338 = vsel %vm315, %v306, 0
      %v341 = vsel %vm315, %v307, 0
      %v344 = vsel %vm315, %v308, 0
      %v347 = vsel %vm315, %v309, 0
      %v350 = vsel %vm315, %v310, 0
      %v353 = vsel %vm315, %v311, 0
      %v356 = vsel %vm315, %v312, 0
      %vm358 = vcmask 1040384
      %v360 = vsel %vm358, %v314, 0
      %362 = vmatprep.subr.mxu0 0.0
      %363 = vmatpush1.msra.mxu0 %v313
      %364 = vmatprep.subr.mxu0 0.0
      %365 = vmatpush1.msra.mxu0 %v360
      %366 = vmatprep.subr.mxu0 0.0
      %367 = vmatpush1.msra.mxu0 0.0
      %368 = vmatprep.subr.mxu0 0.0
      %369 = vmatpush1.msra.mxu0 0.0
      %370 = vmatprep.subr.mxu0 0.0
      %371 = vmatpush1.msra.mxu0 0.0
      %372 = vmatprep.subr.mxu0 0.0
      %373 = vmatpush1.msra.mxu0 0.0
      %374 = vmatprep.subr.mxu0 0.0
      %375 = vmatpush1.msra.mxu0 0.0
      %376 = vmatprep.subr.mxu0 0.0
      %377 = vmatpush1.msra.mxu0 0.0
      %378 = vmatprep.subr.mxu0 0.0
      %379 = vmatpush1.msra.mxu0 0.0
      %380 = vmatprep.subr.mxu0 0.0
      %381 = vmatpush1.msra.mxu0 0.0
      %382 = vmatprep.subr.mxu0 0.0
      %383 = vmatpush1.msra.mxu0 0.0
      %384 = vmatprep.subr.mxu0 0.0
      %385 = vmatpush1.msra.mxu0 0.0
      %386 = vmatprep.subr.mxu0 0.0
      %387 = vmatpush1.msra.mxu0 0.0
      %388 = vmatprep.subr.mxu0 0.0
      %389 = vmatpush1.msra.mxu0 0.0
      %390 = vmatprep.subr.mxu0 0.0
      %391 = vmatpush1.msra.mxu0 0.0
      %392 = vmatprep.subr.mxu0 0.0
      %393 = vmatpush1.msra.mxu0 0.0
      %394 = vmatprep.subr.mxu0 0.0
      %395 = vmatpush1.msra.mxu0 0.0
      %396 = vmatprep.subr.mxu0 0.0
      %397 = vmatpush1.msra.mxu0 0.0
      %398 = vmatprep.subr.mxu0 0.0
      %399 = vmatpush1.msra.mxu0 0.0
      %400 = vmatprep.subr.mxu0 0.0
      %401 = vmatpush1.msra.mxu0 0.0
      %402 = vmatprep.subr.mxu0 0.0
      %403 = vmatpush1.msra.mxu0 0.0
      %404 = vmatprep.subr.mxu0 0.0
      %405 = vmatpush1.msra.mxu0 0.0
      %406 = vmatprep.subr.mxu0 0.0
      %407 = vmatpush1.msra.mxu0 0.0
      %408 = vmatprep.subr.mxu0 0.0
      %409 = vmatpush1.msra.mxu0 0.0
      %410 = vmatprep.subr.mxu0 0.0
      %411 = vmatpush1.msra.mxu0 0.0
      %412 = vmatprep.subr.mxu0 0.0
      %413 = vmatpush1.msra.mxu0 0.0
      %414 = vmatprep.subr.mxu0 0.0
      %415 = vmatpush1.msra.mxu0 0.0
      %416 = vmatprep.subr.mxu0 0.0
      %417 = vmatpush1.msra.mxu0 0.0
      %418 = vmatprep.subr.mxu0 0.0
      %419 = vmatpush1.msra.mxu0 0.0
      %420 = vmatprep.subr.mxu0 0.0
      %421 = vmatpush1.msra.mxu0 0.0
      %422 = vmatprep.subr.mxu0 0.0
      %423 = vmatpush1.msra.mxu0 0.0
      %424 = vmatprep.subr.mxu0 0.0
      %425 = vmatpush1.msra.mxu0 0.0
      %426 = vmatprep.mubr.f32.mxu0 0.0
      %427 = vmatmul.mubr.f32.gmra.mrb[0].mxu0 %v317
      %v428 = vpop.f32.mrb[0].mxu0
      %v429 = vadd.f32 0.0, %v428
      %v430 = vpop.f32.mrb[0].mxu0
      %431 = vmatprep.mubr.f32.mxu0 0.0
      %432 = vmatmul.mubr.f32.gmra.mrb[0].mxu0 %v320
      %v433 = vpop.f32.mrb[0].mxu0
      %v434 = vadd.f32 0.0, %v433
      %v435 = vpop.f32.mrb[0].mxu0
      %436 = vmatprep.mubr.f32.mxu0 0.0
      %437 = vmatmul.mubr.f32.gmra.mrb[0].mxu0 %v323
      %v438 = vpop.f32.mrb[0].mxu0
      %v439 = vadd.f32 0.0, %v438
      %v440 = vpop.f32.mrb[0].mxu0
      %441 = vmatprep.mubr.f32.mxu0 0.0
      %442 = vmatmul.mubr.f32.gmra.mrb[0].mxu0 %v326
      %v443 = vpop.f32.mrb[0].mxu0
      %v444 = vadd.f32 0.0, %v443
      %v445 = vpop.f32.mrb[0].mxu0
      %446 = vmatprep.mubr.f32.mxu0 0.0
      %447 = vmatmul.mubr.f32.gmra.mrb[0].mxu0 %v329
      %v448 = vpop.f32.mrb[0].mxu0
      %v449 = vadd.f32 0.0, %v448
      %v450 = vpop.f32.mrb[0].mxu0
      %451 = vmatprep.mubr.f32.mxu0 0.0
      %452 = vmatmul.mubr.f32.gmra.mrb[0].mxu0 %v332
      %v453 = vpop.f32.mrb[0].mxu0
      %v454 = vadd.f32 0.0, %v453
      %v455 = vpop.f32.mrb[0].mxu0
      %456 = vmatprep.mubr.f32.mxu0 0.0
      %457 = vmatmul.mubr.f32.gmra.mrb[0].mxu0 %v335
      %v458 = vpop.f32.mrb[0].mxu0
      %v459 = vadd.f32 0.0, %v458
      %v460 = vpop.f32.mrb[0].mxu0
      %461 = vmatprep.mubr.f32.mxu0 0.0
      %462 = vmatmul.mubr.f32.gmra.mrb[0].mxu0 %v338
      %v463 = vpop.f32.mrb[0].mxu0
      %v464 = vadd.f32 0.0, %v463
      %v465 = vpop.f32.mrb[0].mxu0
      %466 = vmatprep.mubr.f32.mxu0 0.0
      %467 = vmatmul.mubr.f32.gmra.mrb[0].mxu0 %v341
      %v468 = vpop.f32.mrb[0].mxu0
      %v469 = vadd.f32 0.0, %v468
      %v470 = vpop.f32.mrb[0].mxu0
      %471 = vmatprep.mubr.f32.mxu0 0.0
      %472 = vmatmul.mubr.f32.gmra.mrb[0].mxu0 %v344
      %v473 = vpop.f32.mrb[0].mxu0
      %v474 = vadd.f32 0.0, %v473
      %v475 = vpop.f32.mrb[0].mxu0
      %476 = vmatprep.mubr.f32.mxu0 0.0
      %477 = vmatmul.mubr.f32.gmra.mrb[0].mxu0 %v347
      %v478 = vpop.f32.mrb[0].mxu0
      %v479 = vadd.f32 0.0, %v478
      %v480 = vpop.f32.mrb[0].mxu0
      %481 = vmatprep.mubr.f32.mxu0 0.0
      %482 = vmatmul.mubr.f32.gmra.mrb[0].mxu0 %v350
      %v483 = vpop.f32.mrb[0].mxu0
      %v484 = vadd.f32 0.0, %v483
      %v485 = vpop.f32.mrb[0].mxu0
      %486 = vmatprep.mubr.f32.mxu0 0.0
      %487 = vmatmul.mubr.f32.gmra.mrb[0].mxu0 %v353
      %v488 = vpop.f32.mrb[0].mxu0
      %v489 = vadd.f32 0.0, %v488
      %v490 = vpop.f32.mrb[0].mxu0
      %491 = vmatprep.mubr.f32.mxu0 0.0
      %492 = vmatmul.mubr.f32.gmra.mrb[0].mxu0 %v356
      %v493 = vpop.f32.mrb[0].mxu0
      %v494 = vadd.f32 0.0, %v493
      %v495 = vpop.f32.mrb[0].mxu0
      %496 = vdwg.mxu0
      %vm497 = vcmask 64512
      %498 = vst.msk [vmem:[#allocation2] sm:$0xff] %vm497, %v429
      %499 = vst.msk [vmem:[#allocation2 + $0x8] sm:$0xff] %vm497, %v434
      %500 = vst.msk [vmem:[#allocation2 + $0x10] sm:$0xff] %vm497, %v439
      %501 = vst.msk [vmem:[#allocation2 + $0x18] sm:$0xff] %vm497, %v444
      %502 = vst.msk [vmem:[#allocation2 + $0x20] sm:$0xff] %vm497, %v449
      %503 = vst.msk [vmem:[#allocation2 + $0x28] sm:$0xff] %vm497, %v454
      %504 = vst.msk [vmem:[#allocation2 + $0x30] sm:$0xff] %vm497, %v459
      %505 = vst.msk [vmem:[#allocation2 + $0x38] sm:$0xff] %vm497, %v464
      %506 = vst.msk [vmem:[#allocation2 + $0x40] sm:$0xff] %vm497, %v469
      %507 = vst.msk [vmem:[#allocation2 + $0x48] sm:$0xff] %vm497, %v474
      %508 = vst.msk [vmem:[#allocation2 + $0x50] sm:$0xff] %vm497, %v479
      %509 = vst.msk [vmem:[#allocation2 + $0x58] sm:$0xff] %vm497, %v484
      %510 = vst.msk [vmem:[#allocation2 + $0x60] sm:$0xff] %vm497, %v489
      %vm511 = vcmask 62464
      %512 = vst.msk [vmem:[#allocation2 + $0x68] sm:$0x3f] %vm511, %v494
      %527 = vrot.lane.b32.xlu0 %v429, 120
      %v528 = vpop.permute.xlu0 %527
      %529 = vrot.lane.b32.xlu0 %v434, 120
      %v530 = vpop.permute.xlu0 %529
      %531 = vrot.lane.b32.xlu0 %v439, 120
      %v532 = vpop.permute.xlu0 %531
      %533 = vrot.lane.b32.xlu0 %v444, 120
      %v534 = vpop.permute.xlu0 %533
      %535 = vrot.lane.b32.xlu0 %v449, 120
      %v536 = vpop.permute.xlu0 %535
      %537 = vrot.lane.b32.xlu0 %v454, 120
      %v538 = vpop.permute.xlu0 %537
      %539 = vrot.lane.b32.xlu0 %v459, 120
      %v540 = vpop.permute.xlu0 %539
      %541 = vrot.lane.b32.xlu0 %v464, 120
      %v542 = vpop.permute.xlu0 %541
      %543 = vrot.lane.b32.xlu0 %v469, 120
      %v544 = vpop.permute.xlu0 %543
      %545 = vrot.lane.b32.xlu0 %v474, 120
      %v546 = vpop.permute.xlu0 %545
      %547 = vrot.lane.b32.xlu0 %v479, 120
      %v548 = vpop.permute.xlu0 %547
      %549 = vrot.lane.b32.xlu0 %v484, 120
      %v550 = vpop.permute.xlu0 %549
      %551 = vrot.lane.b32.xlu0 %v489, 120
      %v552 = vpop.permute.xlu0 %551
      %553 = vrot.lane.b32.xlu0 %v494, 120
      %v554 = vpop.permute.xlu0 %553
      %s569 = scalar_lea.vmem [#allocation2], 112
      %570 = vst.msk [vmem:[%s569] sm:$0xff] %vm497, %v528
      %571 = vst.msk [vmem:[%s569 + $0x8] sm:$0xff] %vm497, %v530
      %572 = vst.msk [vmem:[%s569 + $0x10] sm:$0xff] %vm497, %v532
      %573 = vst.msk [vmem:[%s569 + $0x18] sm:$0xff] %vm497, %v534
      %574 = vst.msk [vmem:[%s569 + $0x20] sm:$0xff] %vm497, %v536
      %575 = vst.msk [vmem:[%s569 + $0x28] sm:$0xff] %vm497, %v538
      %576 = vst.msk [vmem:[%s569 + $0x30] sm:$0xff] %vm497, %v540
      %577 = vst.msk [vmem:[%s569 + $0x38] sm:$0xff] %vm497, %v542
      %578 = vst.msk [vmem:[%s569 + $0x40] sm:$0xff] %vm497, %v544
      %579 = vst.msk [vmem:[%s569 + $0x48] sm:$0xff] %vm497, %v546
      %580 = vst.msk [vmem:[%s569 + $0x50] sm:$0xff] %vm497, %v548
      %581 = vst.msk [vmem:[%s569 + $0x58] sm:$0xff] %vm497, %v550
      %582 = vst.msk [vmem:[%s569 + $0x60] sm:$0xff] %vm497, %v552
      %583 = vst.msk [vmem:[%s569 + $0x68] sm:$0x3f] %vm511, %v554
      %584 = vrot.lane.b32.xlu0 %v429, 112
      %v585 = vpop.permute.xlu0 %584
      %586 = vrot.lane.b32.xlu0 %v434, 112
      %v587 = vpop.permute.xlu0 %586
      %588 = vrot.lane.b32.xlu0 %v439, 112
      %v589 = vpop.permute.xlu0 %588
      %590 = vrot.lane.b32.xlu0 %v444, 112
      %v591 = vpop.permute.xlu0 %590
      %592 = vrot.lane.b32.xlu0 %v449, 112
      %v593 = vpop.permute.xlu0 %592
      %594 = vrot.lane.b32.xlu0 %v454, 112
      %v595 = vpop.permute.xlu0 %594
      %596 = vrot.lane.b32.xlu0 %v459, 112
      %v597 = vpop.permute.xlu0 %596
      %598 = vrot.lane.b32.xlu0 %v464, 112
      %v599 = vpop.permute.xlu0 %598
      %600 = vrot.lane.b32.xlu0 %v469, 112
      %v601 = vpop.permute.xlu0 %600
      %602 = vrot.lane.b32.xlu0 %v474, 112
      %v603 = vpop.permute.xlu0 %602
      %604 = vrot.lane.b32.xlu0 %v479, 112
      %v605 = vpop.permute.xlu0 %604
      %606 = vrot.lane.b32.xlu0 %v484, 112
      %v607 = vpop.permute.xlu0 %606
      %608 = vrot.lane.b32.xlu0 %v489, 112
      %v609 = vpop.permute.xlu0 %608
      %610 = vrot.lane.b32.xlu0 %v494, 112
      %v611 = vpop.permute.xlu0 %610
      %s626 = scalar_lea.vmem [#allocation2], 224
      %627 = vst.msk [vmem:[%s626] sm:$0xff] %vm497, %v585
      %628 = vst.msk [vmem:[%s626 + $0x8] sm:$0xff] %vm497, %v587
      %629 = vst.msk [vmem:[%s626 + $0x10] sm:$0xff] %vm497, %v589
      %630 = vst.msk [vmem:[%s626 + $0x18] sm:$0xff] %vm497, %v591
      %631 = vst.msk [vmem:[%s626 + $0x20] sm:$0xff] %vm497, %v593
      %632 = vst.msk [vmem:[%s626 + $0x28] sm:$0xff] %vm497, %v595
      %633 = vst.msk [vmem:[%s626 + $0x30] sm:$0xff] %vm497, %v597
      %634 = vst.msk [vmem:[%s626 + $0x38] sm:$0xff] %vm497, %v599
      %635 = vst.msk [vmem:[%s626 + $0x40] sm:$0xff] %vm497, %v601
      %636 = vst.msk [vmem:[%s626 + $0x48] sm:$0xff] %vm497, %v603
      %637 = vst.msk [vmem:[%s626 + $0x50] sm:$0xff] %vm497, %v605
      %638 = vst.msk [vmem:[%s626 + $0x58] sm:$0xff] %vm497, %v607
      %639 = vst.msk [vmem:[%s626 + $0x60] sm:$0xff] %vm497, %v609
      %640 = vst.msk [vmem:[%s626 + $0x68] sm:$0x3f] %vm511, %v611
      %641 = vrot.lane.b32.xlu0 %v429, 104
      %v642 = vpop.permute.xlu0 %641
      %643 = vrot.lane.b32.xlu0 %v434, 104
      %v644 = vpop.permute.xlu0 %643
      %645 = vrot.lane.b32.xlu0 %v439, 104
      %v646 = vpop.permute.xlu0 %645
      %647 = vrot.lane.b32.xlu0 %v444, 104
      %v648 = vpop.permute.xlu0 %647
      %649 = vrot.lane.b32.xlu0 %v449, 104
      %v650 = vpop.permute.xlu0 %649
      %651 = vrot.lane.b32.xlu0 %v454, 104
      %v652 = vpop.permute.xlu0 %651
      %653 = vrot.lane.b32.xlu0 %v459, 104
      %v654 = vpop.permute.xlu0 %653
      %655 = vrot.lane.b32.xlu0 %v464, 104
      %v656 = vpop.permute.xlu0 %655
      %657 = vrot.lane.b32.xlu0 %v469, 104
      %v658 = vpop.permute.xlu0 %657
      %659 = vrot.lane.b32.xlu0 %v474, 104
      %v660 = vpop.permute.xlu0 %659
      %661 = vrot.lane.b32.xlu0 %v479, 104
      %v662 = vpop.permute.xlu0 %661
      %663 = vrot.lane.b32.xlu0 %v484, 104
      %v664 = vpop.permute.xlu0 %663
      %665 = vrot.lane.b32.xlu0 %v489, 104
      %v666 = vpop.permute.xlu0 %665
      %667 = vrot.lane.b32.xlu0 %v494, 104
      %v668 = vpop.permute.xlu0 %667
      %s683 = scalar_lea.vmem [#allocation2], 336
      %684 = vst.msk [vmem:[%s683] sm:$0xff] %vm497, %v642
      %685 = vst.msk [vmem:[%s683 + $0x8] sm:$0xff] %vm497, %v644
      %686 = vst.msk [vmem:[%s683 + $0x10] sm:$0xff] %vm497, %v646
      %687 = vst.msk [vmem:[%s683 + $0x18] sm:$0xff] %vm497, %v648
      %688 = vst.msk [vmem:[%s683 + $0x20] sm:$0xff] %vm497, %v650
      %689 = vst.msk [vmem:[%s683 + $0x28] sm:$0xff] %vm497, %v652
      %690 = vst.msk [vmem:[%s683 + $0x30] sm:$0xff] %vm497, %v654
      %691 = vst.msk [vmem:[%s683 + $0x38] sm:$0xff] %vm497, %v656
      %692 = vst.msk [vmem:[%s683 + $0x40] sm:$0xff] %vm497, %v658
      %693 = vst.msk [vmem:[%s683 + $0x48] sm:$0xff] %vm497, %v660
      %694 = vst.msk [vmem:[%s683 + $0x50] sm:$0xff] %vm497, %v662
      %695 = vst.msk [vmem:[%s683 + $0x58] sm:$0xff] %vm497, %v664
      %696 = vst.msk [vmem:[%s683 + $0x60] sm:$0xff] %vm497, %v666
      %697 = vst.msk [vmem:[%s683 + $0x68] sm:$0x3f] %vm511, %v668
      %v698 = vld [vmem:[%s683] sm:$0xff]
      %v699 = vld [vmem:[%s683 + $0x8] sm:$0xff]
      %v700 = vld [vmem:[%s683 + $0x10] sm:$0xff]
      %v701 = vld [vmem:[%s683 + $0x18] sm:$0xff]
      %v702 = vld [vmem:[%s683 + $0x20] sm:$0xff]
      %v703 = vld [vmem:[%s683 + $0x28] sm:$0xff]
      %v704 = vld [vmem:[%s683 + $0x30] sm:$0xff]
      %v705 = vld [vmem:[%s683 + $0x38] sm:$0xff]
      %v706 = vld [vmem:[%s683 + $0x40] sm:$0xff]
      %v707 = vld [vmem:[%s683 + $0x48] sm:$0xff]
      %v708 = vld [vmem:[%s3] sm:$0xff]
      %s709 = scalar_lea.vmem %s293, 336
      %v710 = vld [vmem:[%s709] sm:$0xff]
      %v711 = vld [vmem:[%s709 + $0x8] sm:$0xff]
      %v712 = vld [vmem:[%s709 + $0x10] sm:$0xff]
      %v713 = vld [vmem:[%s709 + $0x18] sm:$0xff]
      %v714 = vld [vmem:[%s709 + $0x20] sm:$0xff]
      %v715 = vld [vmem:[%s709 + $0x28] sm:$0xff]
      %v716 = vld [vmem:[%s709 + $0x30] sm:$0xff]
      %v717 = vld [vmem:[%s709 + $0x38] sm:$0xff]
      %v718 = vld [vmem:[%s709 + $0x40] sm:$0xff]
      %v719 = vld [vmem:[%s709 + $0x48] sm:$0xff]
      %v720 = vld [vmem:[%s4] sm:$0xff]
      %v722 = vsel %vm497, %v710, 0
      %v725 = vsel %vm497, %v711, 0
      %v728 = vsel %vm497, %v712, 0
      %v731 = vsel %vm497, %v713, 0
      %v734 = vsel %vm497, %v714, 0
      %v737 = vsel %vm497, %v715, 0
      %v740 = vsel %vm497, %v716, 0
      %v743 = vsel %vm497, %v717, 0
      %v746 = vsel %vm497, %v718, 0
      %v749 = vsel %vm497, %v719, 0
      %751 = vmatprep.subr.mxu0 0.0
      %752 = vmatpush1.msra.mxu0 %v720
      %753 = vmatprep.subr.mxu0 0.0
      %754 = vmatpush1.msra.mxu0 0.0
      %755 = vmatprep.subr.mxu0 0.0
      %756 = vmatpush1.msra.mxu0 0.0
      %757 = vmatprep.subr.mxu0 0.0
      %758 = vmatpush1.msra.mxu0 0.0
      %759 = vmatprep.subr.mxu0 0.0
      %760 = vmatpush1.msra.mxu0 0.0
      %761 = vmatprep.subr.mxu0 0.0
      %762 = vmatpush1.msra.mxu0 0.0
      %763 = vmatprep.subr.mxu0 0.0
      %764 = vmatpush1.msra.mxu0 0.0
      %765 = vmatprep.subr.mxu0 0.0
      %766 = vmatpush1.msra.mxu0 0.0
      %767 = vmatprep.subr.mxu0 0.0
      %768 = vmatpush1.msra.mxu0 0.0
      %769 = vmatprep.subr.mxu0 0.0
      %770 = vmatpush1.msra.mxu0 0.0
      %771 = vmatprep.subr.mxu0 0.0
      %772 = vmatpush1.msra.mxu0 0.0
      %773 = vmatprep.subr.mxu0 0.0
      %774 = vmatpush1.msra.mxu0 0.0
      %775 = vmatprep.subr.mxu0 0.0
      %776 = vmatpush1.msra.mxu0 0.0
      %777 = vmatprep.subr.mxu0 0.0
      %778 = vmatpush1.msra.mxu0 0.0
      %779 = vmatprep.subr.mxu0 0.0
      %780 = vmatpush1.msra.mxu0 0.0
      %781 = vmatprep.subr.mxu0 0.0
      %782 = vmatpush1.msra.mxu0 0.0
      %783 = vmatprep.subr.mxu0 0.0
      %784 = vmatpush1.msra.mxu0 0.0
      %785 = vmatprep.subr.mxu0 0.0
      %786 = vmatpush1.msra.mxu0 0.0
      %787 = vmatprep.subr.mxu0 0.0
      %788 = vmatpush1.msra.mxu0 0.0
      %789 = vmatprep.subr.mxu0 0.0
      %790 = vmatpush1.msra.mxu0 0.0
      %791 = vmatprep.subr.mxu0 0.0
      %792 = vmatpush1.msra.mxu0 0.0
      %793 = vmatprep.subr.mxu0 0.0
      %794 = vmatpush1.msra.mxu0 0.0
      %795 = vmatprep.subr.mxu0 0.0
      %796 = vmatpush1.msra.mxu0 0.0
      %797 = vmatprep.subr.mxu0 0.0
      %798 = vmatpush1.msra.mxu0 0.0
      %799 = vmatprep.subr.mxu0 0.0
      %800 = vmatpush1.msra.mxu0 0.0
      %801 = vmatprep.subr.mxu0 0.0
      %802 = vmatpush1.msra.mxu0 0.0
      %803 = vmatprep.subr.mxu0 0.0
      %804 = vmatpush1.msra.mxu0 0.0
      %805 = vmatprep.subr.mxu0 0.0
      %806 = vmatpush1.msra.mxu0 0.0
      %807 = vmatprep.subr.mxu0 0.0
      %808 = vmatpush1.msra.mxu0 0.0
      %809 = vmatprep.subr.mxu0 0.0
      %810 = vmatpush1.msra.mxu0 0.0
      %811 = vmatprep.subr.mxu0 0.0
      %812 = vmatpush1.msra.mxu0 0.0
      %813 = vmatprep.subr.mxu0 0.0
      %814 = vmatpush1.msra.mxu0 0.0
      %815 = vmatprep.mubr.f32.mxu0 0.0
      %816 = vmatmul.mubr.f32.gmra.mrb[0].mxu0 %v722
      %v817 = vpop.f32.mrb[0].mxu0
      %v818 = vadd.f32 0.0, %v817
      %v819 = vpop.f32.mrb[0].mxu0
      %820 = vmatprep.mubr.f32.mxu0 0.0
      %821 = vmatmul.mubr.f32.gmra.mrb[0].mxu0 %v725
      %v822 = vpop.f32.mrb[0].mxu0
      %v823 = vadd.f32 0.0, %v822
      %v824 = vpop.f32.mrb[0].mxu0
      %825 = vmatprep.mubr.f32.mxu0 0.0
      %826 = vmatmul.mubr.f32.gmra.mrb[0].mxu0 %v728
      %v827 = vpop.f32.mrb[0].mxu0
      %v828 = vadd.f32 0.0, %v827
      %v829 = vpop.f32.mrb[0].mxu0
      %830 = vmatprep.mubr.f32.mxu0 0.0
      %831 = vmatmul.mubr.f32.gmra.mrb[0].mxu0 %v731
      %v832 = vpop.f32.mrb[0].mxu0
      %v833 = vadd.f32 0.0, %v832
      %v834 = vpop.f32.mrb[0].mxu0
      %835 = vmatprep.mubr.f32.mxu0 0.0
      %836 = vmatmul.mubr.f32.gmra.mrb[0].mxu0 %v734
      %v837 = vpop.f32.mrb[0].mxu0
      %v838 = vadd.f32 0.0, %v837
      %v839 = vpop.f32.mrb[0].mxu0
      %840 = vmatprep.mubr.f32.mxu0 0.0
      %841 = vmatmul.mubr.f32.gmra.mrb[0].mxu0 %v737
      %v842 = vpop.f32.mrb[0].mxu0
      %v843 = vadd.f32 0.0, %v842
      %v844 = vpop.f32.mrb[0].mxu0
      %845 = vmatprep.mubr.f32.mxu0 0.0
      %846 = vmatmul.mubr.f32.gmra.mrb[0].mxu0 %v740
      %v847 = vpop.f32.mrb[0].mxu0
      %v848 = vadd.f32 0.0, %v847
      %v849 = vpop.f32.mrb[0].mxu0
      %850 = vmatprep.mubr.f32.mxu0 0.0
      %851 = vmatmul.mubr.f32.gmra.mrb[0].mxu0 %v743
      %v852 = vpop.f32.mrb[0].mxu0
      %v853 = vadd.f32 0.0, %v852
      %v854 = vpop.f32.mrb[0].mxu0
      %855 = vmatprep.mubr.f32.mxu0 0.0
      %856 = vmatmul.mubr.f32.gmra.mrb[0].mxu0 %v746
      %v857 = vpop.f32.mrb[0].mxu0
      %v858 = vadd.f32 0.0, %v857
      %v859 = vpop.f32.mrb[0].mxu0
      %860 = vmatprep.mubr.f32.mxu0 0.0
      %861 = vmatmul.mubr.f32.gmra.mrb[0].mxu0 %v749
      %v862 = vpop.f32.mrb[0].mxu0
      %v863 = vadd.f32 0.0, %v862
      %v864 = vpop.f32.mrb[0].mxu0
      %865 = vdwg.mxu0
      %v867 = vsel %vm497, %v698, 0
      %v870 = vsel %vm497, %v699, 0
      %v873 = vsel %vm497, %v700, 0
      %v876 = vsel %vm497, %v701, 0
      %v879 = vsel %vm497, %v702, 0
      %v882 = vsel %vm497, %v703, 0
      %v885 = vsel %vm497, %v704, 0
      %v888 = vsel %vm497, %v705, 0
      %v891 = vsel %vm497, %v706, 0
      %v894 = vsel %vm497, %v707, 0
      %896 = vmatprep.subr.mxu0 0.0
      %897 = vmatpush1.msra.mxu0 %v708
      %898 = vmatprep.subr.mxu0 0.0
      %899 = vmatpush1.msra.mxu0 0.0
      %900 = vmatprep.subr.mxu0 0.0
      %901 = vmatpush1.msra.mxu0 0.0
      %902 = vmatprep.subr.mxu0 0.0
      %903 = vmatpush1.msra.mxu0 0.0
      %904 = vmatprep.subr.mxu0 0.0
      %905 = vmatpush1.msra.mxu0 0.0
      %906 = vmatprep.subr.mxu0 0.0
      %907 = vmatpush1.msra.mxu0 0.0
      %908 = vmatprep.subr.mxu0 0.0
      %909 = vmatpush1.msra.mxu0 0.0
      %910 = vmatprep.subr.mxu0 0.0
      %911 = vmatpush1.msra.mxu0 0.0
      %912 = vmatprep.subr.mxu0 0.0
      %913 = vmatpush1.msra.mxu0 0.0
      %914 = vmatprep.subr.mxu0 0.0
      %915 = vmatpush1.msra.mxu0 0.0
      %916 = vmatprep.subr.mxu0 0.0
      %917 = vmatpush1.msra.mxu0 0.0
      %918 = vmatprep.subr.mxu0 0.0
      %919 = vmatpush1.msra.mxu0 0.0
      %920 = vmatprep.subr.mxu0 0.0
      %921 = vmatpush1.msra.mxu0 0.0
      %922 = vmatprep.subr.mxu0 0.0
      %923 = vmatpush1.msra.mxu0 0.0
      %924 = vmatprep.subr.mxu0 0.0
      %925 = vmatpush1.msra.mxu0 0.0
      %926 = vmatprep.subr.mxu0 0.0
      %927 = vmatpush1.msra.mxu0 0.0
      %928 = vmatprep.subr.mxu0 0.0
      %929 = vmatpush1.msra.mxu0 0.0
      %930 = vmatprep.subr.mxu0 0.0
      %931 = vmatpush1.msra.mxu0 0.0
      %932 = vmatprep.subr.mxu0 0.0
      %933 = vmatpush1.msra.mxu0 0.0
      %934 = vmatprep.subr.mxu0 0.0
      %935 = vmatpush1.msra.mxu0 0.0
      %936 = vmatprep.subr.mxu0 0.0
      %937 = vmatpush1.msra.mxu0 0.0
      %938 = vmatprep.subr.mxu0 0.0
      %939 = vmatpush1.msra.mxu0 0.0
      %940 = vmatprep.subr.mxu0 0.0
      %941 = vmatpush1.msra.mxu0 0.0
      %942 = vmatprep.subr.mxu0 0.0
      %943 = vmatpush1.msra.mxu0 0.0
      %944 = vmatprep.subr.mxu0 0.0
      %945 = vmatpush1.msra.mxu0 0.0
      %946 = vmatprep.subr.mxu0 0.0
      %947 = vmatpush1.msra.mxu0 0.0
      %948 = vmatprep.subr.mxu0 0.0
      %949 = vmatpush1.msra.mxu0 0.0
      %950 = vmatprep.subr.mxu0 0.0
      %951 = vmatpush1.msra.mxu0 0.0
      %952 = vmatprep.subr.mxu0 0.0
      %953 = vmatpush1.msra.mxu0 0.0
      %954 = vmatprep.subr.mxu0 0.0
      %955 = vmatpush1.msra.mxu0 0.0
      %956 = vmatprep.subr.mxu0 0.0
      %957 = vmatpush1.msra.mxu0 0.0
      %958 = vmatprep.subr.mxu0 0.0
      %959 = vmatpush1.msra.mxu0 0.0
      %960 = vmatprep.mubr.f32.mxu0 0.0
      %961 = vmatmul.mubr.f32.gmra.mrb[0].mxu0 %v867
      %v962 = vpop.f32.mrb[0].mxu0
      %v963 = vadd.f32 %v818, %v962
      %v964 = vpop.f32.mrb[0].mxu0
      %965 = vmatprep.mubr.f32.mxu0 0.0
      %966 = vmatmul.mubr.f32.gmra.mrb[0].mxu0 %v870
      %v967 = vpop.f32.mrb[0].mxu0
      %v968 = vadd.f32 %v823, %v967
      %v969 = vpop.f32.mrb[0].mxu0
      %970 = vmatprep.mubr.f32.mxu0 0.0
      %971 = vmatmul.mubr.f32.gmra.mrb[0].mxu0 %v873
      %v972 = vpop.f32.mrb[0].mxu0
      %v973 = vadd.f32 %v828, %v972
      %v974 = vpop.f32.mrb[0].mxu0
      %975 = vmatprep.mubr.f32.mxu0 0.0
      %976 = vmatmul.mubr.f32.gmra.mrb[0].mxu0 %v876
      %v977 = vpop.f32.mrb[0].mxu0
      %v978 = vadd.f32 %v833, %v977
      %v979 = vpop.f32.mrb[0].mxu0
      %980 = vmatprep.mubr.f32.mxu0 0.0
      %981 = vmatmul.mubr.f32.gmra.mrb[0].mxu0 %v879
      %v982 = vpop.f32.mrb[0].mxu0
      %v983 = vadd.f32 %v838, %v982
      %v984 = vpop.f32.mrb[0].mxu0
      %985 = vmatprep.mubr.f32.mxu0 0.0
      %986 = vmatmul.mubr.f32.gmra.mrb[0].mxu0 %v882
      %v987 = vpop.f32.mrb[0].mxu0
      %v988 = vadd.f32 %v843, %v987
      %v989 = vpop.f32.mrb[0].mxu0
      %990 = vmatprep.mubr.f32.mxu0 0.0
      %991 = vmatmul.mubr.f32.gmra.mrb[0].mxu0 %v885
      %v992 = vpop.f32.mrb[0].mxu0
      %v993 = vadd.f32 %v848, %v992
      %v994 = vpop.f32.mrb[0].mxu0
      %995 = vmatprep.mubr.f32.mxu0 0.0
      %996 = vmatmul.mubr.f32.gmra.mrb[0].mxu0 %v888
      %v997 = vpop.f32.mrb[0].mxu0
      %v998 = vadd.f32 %v853, %v997
      %v999 = vpop.f32.mrb[0].mxu0
      %1000 = vmatprep.mubr.f32.mxu0 0.0
      %1001 = vmatmul.mubr.f32.gmra.mrb[0].mxu0 %v891
      %v1002 = vpop.f32.mrb[0].mxu0
      %v1003 = vadd.f32 %v858, %v1002
      %v1004 = vpop.f32.mrb[0].mxu0
      %1005 = vmatprep.mubr.f32.mxu0 0.0
      %1006 = vmatmul.mubr.f32.gmra.mrb[0].mxu0 %v894
      %v1007 = vpop.f32.mrb[0].mxu0
      %v1008 = vadd.f32 %v863, %v1007
      %v1009 = vpop.f32.mrb[0].mxu0
      %1010 = vdwg.mxu0
      %v1011 = vld [vmem:[%s626 + $0x1] sm:$0xff]
      %v1012 = vld [vmem:[%s626 + $0x9] sm:$0xff]
      %v1013 = vld [vmem:[%s626 + $0x11] sm:$0xff]
      %v1014 = vld [vmem:[%s626 + $0x19] sm:$0xff]
      %v1015 = vld [vmem:[%s626 + $0x21] sm:$0xff]
      %v1016 = vld [vmem:[%s626 + $0x29] sm:$0xff]
      %v1017 = vld [vmem:[%s626 + $0x31] sm:$0xff]
      %v1018 = vld [vmem:[%s626 + $0x39] sm:$0xff]
      %v1019 = vld [vmem:[%s626 + $0x41] sm:$0xff]
      %v1020 = vld [vmem:[%s626 + $0x49] sm:$0xff]
      %s1021 = scalar_lea.vmem %s3, 8
      %v1022 = vld [vmem:[%s1021] sm:$0xff]
      %v1024 = vsel %vm497, %v1011, 0
      %v1027 = vsel %vm497, %v1012, 0
      %v1030 = vsel %vm497, %v1013, 0
      %v1033 = vsel %vm497, %v1014, 0
      %v1036 = vsel %vm497, %v1015, 0
      %v1039 = vsel %vm497, %v1016, 0
      %v1042 = vsel %vm497, %v1017, 0
      %v1045 = vsel %vm497, %v1018, 0
      %v1048 = vsel %vm497, %v1019, 0
      %v1051 = vsel %vm497, %v1020, 0
      %1053 = vmatprep.subr.mxu0 0.0
      %1054 = vmatpush1.msra.mxu0 %v1022
      %1055 = vmatprep.subr.mxu0 0.0
      %1056 = vmatpush1.msra.mxu0 0.0
      %1057 = vmatprep.subr.mxu0 0.0
      %1058 = vmatpush1.msra.mxu0 0.0
      %1059 = vmatprep.subr.mxu0 0.0
      %1060 = vmatpush1.msra.mxu0 0.0
      %1061 = vmatprep.subr.mxu0 0.0
      %1062 = vmatpush1.msra.mxu0 0.0
      %1063 = vmatprep.subr.mxu0 0.0
      %1064 = vmatpush1.msra.mxu0 0.0
      %1065 = vmatprep.subr.mxu0 0.0
      %1066 = vmatpush1.msra.mxu0 0.0
      %1067 = vmatprep.subr.mxu0 0.0
      %1068 = vmatpush1.msra.mxu0 0.0
      %1069 = vmatprep.subr.mxu0 0.0
      %1070 = vmatpush1.msra.mxu0 0.0
      %1071 = vmatprep.subr.mxu0 0.0
      %1072 = vmatpush1.msra.mxu0 0.0
      %1073 = vmatprep.subr.mxu0 0.0
      %1074 = vmatpush1.msra.mxu0 0.0
      %1075 = vmatprep.subr.mxu0 0.0
      %1076 = vmatpush1.msra.mxu0 0.0
      %1077 = vmatprep.subr.mxu0 0.0
      %1078 = vmatpush1.msra.mxu0 0.0
      %1079 = vmatprep.subr.mxu0 0.0
      %1080 = vmatpush1.msra.mxu0 0.0
      %1081 = vmatprep.subr.mxu0 0.0
      %1082 = vmatpush1.msra.mxu0 0.0
      %1083 = vmatprep.subr.mxu0 0.0
      %1084 = vmatpush1.msra.mxu0 0.0
      %1085 = vmatprep.subr.mxu0 0.0
      %1086 = vmatpush1.msra.mxu0 0.0
      %1087 = vmatprep.subr.mxu0 0.0
      %1088 = vmatpush1.msra.mxu0 0.0
      %1089 = vmatprep.subr.mxu0 0.0
      %1090 = vmatpush1.msra.mxu0 0.0
      %1091 = vmatprep.subr.mxu0 0.0
      %1092 = vmatpush1.msra.mxu0 0.0
      %1093 = vmatprep.subr.mxu0 0.0
      %1094 = vmatpush1.msra.mxu0 0.0
      %1095 = vmatprep.subr.mxu0 0.0
      %1096 = vmatpush1.msra.mxu0 0.0
      %1097 = vmatprep.subr.mxu0 0.0
      %1098 = vmatpush1.msra.mxu0 0.0
      %1099 = vmatprep.subr.mxu0 0.0
      %1100 = vmatpush1.msra.mxu0 0.0
      %1101 = vmatprep.subr.mxu0 0.0
      %1102 = vmatpush1.msra.mxu0 0.0
      %1103 = vmatprep.subr.mxu0 0.0
      %1104 = vmatpush1.msra.mxu0 0.0
      %1105 = vmatprep.subr.mxu0 0.0
      %1106 = vmatpush1.msra.mxu0 0.0
      %1107 = vmatprep.subr.mxu0 0.0
      %1108 = vmatpush1.msra.mxu0 0.0
      %1109 = vmatprep.subr.mxu0 0.0
      %1110 = vmatpush1.msra.mxu0 0.0
      %1111 = vmatprep.subr.mxu0 0.0
      %1112 = vmatpush1.msra.mxu0 0.0
      %1113 = vmatprep.subr.mxu0 0.0
      %1114 = vmatpush1.msra.mxu0 0.0
      %1115 = vmatprep.subr.mxu0 0.0
      %1116 = vmatpush1.msra.mxu0 0.0
      %1117 = vmatprep.mubr.f32.mxu0 0.0
      %1118 = vmatmul.mubr.f32.gmra.mrb[0].mxu0 %v1024
      %v1119 = vpop.f32.mrb[0].mxu0
      %v1120 = vadd.f32 0.0, %v1119
      %v1121 = vpop.f32.mrb[0].mxu0
      %1122 = vmatprep.mubr.f32.mxu0 0.0
      %1123 = vmatmul.mubr.f32.gmra.mrb[0].mxu0 %v1027
      %v1124 = vpop.f32.mrb[0].mxu0
      %v1125 = vadd.f32 0.0, %v1124
      %v1126 = vpop.f32.mrb[0].mxu0
      %1127 = vmatprep.mubr.f32.mxu0 0.0
      %1128 = vmatmul.mubr.f32.gmra.mrb[0].mxu0 %v1030
      %v1129 = vpop.f32.mrb[0].mxu0
      %v1130 = vadd.f32 0.0, %v1129
      %v1131 = vpop.f32.mrb[0].mxu0
      %1132 = vmatprep.mubr.f32.mxu0 0.0
      %1133 = vmatmul.mubr.f32.gmra.mrb[0].mxu0 %v1033
      %v1134 = vpop.f32.mrb[0].mxu0
      %v1135 = vadd.f32 0.0, %v1134
      %v1136 = vpop.f32.mrb[0].mxu0
      %1137 = vmatprep.mubr.f32.mxu0 0.0
      %1138 = vmatmul.mubr.f32.gmra.mrb[0].mxu0 %v1036
      %v1139 = vpop.f32.mrb[0].mxu0
      %v1140 = vadd.f32 0.0, %v1139
      %v1141 = vpop.f32.mrb[0].mxu0
      %1142 = vmatprep.mubr.f32.mxu0 0.0
      %1143 = vmatmul.mubr.f32.gmra.mrb[0].mxu0 %v1039
      %v1144 = vpop.f32.mrb[0].mxu0
      %v1145 = vadd.f32 0.0, %v1144
      %v1146 = vpop.f32.mrb[0].mxu0
      %1147 = vmatprep.mubr.f32.mxu0 0.0
      %1148 = vmatmul.mubr.f32.gmra.mrb[0].mxu0 %v1042
      %v1149 = vpop.f32.mrb[0].mxu0
      %v1150 = vadd.f32 0.0, %v1149
      %v1151 = vpop.f32.mrb[0].mxu0
      %1152 = vmatprep.mubr.f32.mxu0 0.0
      %1153 = vmatmul.mubr.f32.gmra.mrb[0].mxu0 %v1045
      %v1154 = vpop.f32.mrb[0].mxu0
      %v1155 = vadd.f32 0.0, %v1154
      %v1156 = vpop.f32.mrb[0].mxu0
      %1157 = vmatprep.mubr.f32.mxu0 0.0
      %1158 = vmatmul.mubr.f32.gmra.mrb[0].mxu0 %v1048
      %v1159 = vpop.f32.mrb[0].mxu0
      %v1160 = vadd.f32 0.0, %v1159
      %v1161 = vpop.f32.mrb[0].mxu0
      %1162 = vmatprep.mubr.f32.mxu0 0.0
      %1163 = vmatmul.mubr.f32.gmra.mrb[0].mxu0 %v1051
      %v1164 = vpop.f32.mrb[0].mxu0
      %v1165 = vadd.f32 0.0, %v1164
      %v1166 = vpop.f32.mrb[0].mxu0
      %1167 = vdwg.mxu0
      %v1168 = vadd.f32 %v963, %v1120
      %v1169 = vadd.f32 %v968, %v1125
      %v1170 = vadd.f32 %v973, %v1130
      %v1171 = vadd.f32 %v978, %v1135
      %v1172 = vadd.f32 %v983, %v1140
      %v1173 = vadd.f32 %v988, %v1145
      %v1174 = vadd.f32 %v993, %v1150
      %v1175 = vadd.f32 %v998, %v1155
      %v1176 = vadd.f32 %v1003, %v1160
      %v1177 = vadd.f32 %v1008, %v1165
      %s1178 = scalar_lea.vmem %s293, 224
      %v1179 = vld [vmem:[%s1178 + $0x1] sm:$0xff]
      %v1180 = vld [vmem:[%s1178 + $0x9] sm:$0xff]
      %v1181 = vld [vmem:[%s1178 + $0x11] sm:$0xff]
      %v1182 = vld [vmem:[%s1178 + $0x19] sm:$0xff]
      %v1183 = vld [vmem:[%s1178 + $0x21] sm:$0xff]
      %v1184 = vld [vmem:[%s1178 + $0x29] sm:$0xff]
      %v1185 = vld [vmem:[%s1178 + $0x31] sm:$0xff]
      %v1186 = vld [vmem:[%s1178 + $0x39] sm:$0xff]
      %v1187 = vld [vmem:[%s1178 + $0x41] sm:$0xff]
      %v1188 = vld [vmem:[%s1178 + $0x49] sm:$0xff]
      %s1189 = scalar_lea.vmem %s4, 8
      %v1190 = vld [vmem:[%s1189] sm:$0xff]
      %v1192 = vsel %vm497, %v1179, 0
      %v1195 = vsel %vm497, %v1180, 0
      %v1198 = vsel %vm497, %v1181, 0
      %v1201 = vsel %vm497, %v1182, 0
      %v1204 = vsel %vm497, %v1183, 0
      %v1207 = vsel %vm497, %v1184, 0
      %v1210 = vsel %vm497, %v1185, 0
      %v1213 = vsel %vm497, %v1186, 0
      %v1216 = vsel %vm497, %v1187, 0
      %v1219 = vsel %vm497, %v1188, 0
      %1221 = vmatprep.subr.mxu0 0.0
      %1222 = vmatpush1.msra.mxu0 %v1190
      %1223 = vmatprep.subr.mxu0 0.0
      %1224 = vmatpush1.msra.mxu0 0.0
      %1225 = vmatprep.subr.mxu0 0.0
      %1226 = vmatpush1.msra.mxu0 0.0
      %1227 = vmatprep.subr.mxu0 0.0
      %1228 = vmatpush1.msra.mxu0 0.0
      %1229 = vmatprep.subr.mxu0 0.0
      %1230 = vmatpush1.msra.mxu0 0.0
      %1231 = vmatprep.subr.mxu0 0.0
      %1232 = vmatpush1.msra.mxu0 0.0
      %1233 = vmatprep.subr.mxu0 0.0
      %1234 = vmatpush1.msra.mxu0 0.0
      %1235 = vmatprep.subr.mxu0 0.0
      %1236 = vmatpush1.msra.mxu0 0.0
      %1237 = vmatprep.subr.mxu0 0.0
      %1238 = vmatpush1.msra.mxu0 0.0
      %1239 = vmatprep.subr.mxu0 0.0
      %1240 = vmatpush1.msra.mxu0 0.0
      %1241 = vmatprep.subr.mxu0 0.0
      %1242 = vmatpush1.msra.mxu0 0.0
      %1243 = vmatprep.subr.mxu0 0.0
      %1244 = vmatpush1.msra.mxu0 0.0
      %1245 = vmatprep.subr.mxu0 0.0
      %1246 = vmatpush1.msra.mxu0 0.0
      %1247 = vmatprep.subr.mxu0 0.0
      %1248 = vmatpush1.msra.mxu0 0.0
      %1249 = vmatprep.subr.mxu0 0.0
      %1250 = vmatpush1.msra.mxu0 0.0
      %1251 = vmatprep.subr.mxu0 0.0
      %1252 = vmatpush1.msra.mxu0 0.0
      %1253 = vmatprep.subr.mxu0 0.0
      %1254 = vmatpush1.msra.mxu0 0.0
      %1255 = vmatprep.subr.mxu0 0.0
      %1256 = vmatpush1.msra.mxu0 0.0
      %1257 = vmatprep.subr.mxu0 0.0
      %1258 = vmatpush1.msra.mxu0 0.0
      %1259 = vmatprep.subr.mxu0 0.0
      %1260 = vmatpush1.msra.mxu0 0.0
      %1261 = vmatprep.subr.mxu0 0.0
      %1262 = vmatpush1.msra.mxu0 0.0
      %1263 = vmatprep.subr.mxu0 0.0
      %1264 = vmatpush1.msra.mxu0 0.0
      %1265 = vmatprep.subr.mxu0 0.0
      %1266 = vmatpush1.msra.mxu0 0.0
      %1267 = vmatprep.subr.mxu0 0.0
      %1268 = vmatpush1.msra.mxu0 0.0
      %1269 = vmatprep.subr.mxu0 0.0
      %1270 = vmatpush1.msra.mxu0 0.0
      %1271 = vmatprep.subr.mxu0 0.0
      %1272 = vmatpush1.msra.mxu0 0.0
      %1273 = vmatprep.subr.mxu0 0.0
      %1274 = vmatpush1.msra.mxu0 0.0
      %1275 = vmatprep.subr.mxu0 0.0
      %1276 = vmatpush1.msra.mxu0 0.0
      %1277 = vmatprep.subr.mxu0 0.0
      %1278 = vmatpush1.msra.mxu0 0.0
      %1279 = vmatprep.subr.mxu0 0.0
      %1280 = vmatpush1.msra.mxu0 0.0
      %1281 = vmatprep.subr.mxu0 0.0
      %1282 = vmatpush1.msra.mxu0 0.0
      %1283 = vmatprep.subr.mxu0 0.0
      %1284 = vmatpush1.msra.mxu0 0.0
      %1285 = vmatprep.mubr.f32.mxu0 0.0
      %1286 = vmatmul.mubr.f32.gmra.mrb[0].mxu0 %v1192
      %v1287 = vpop.f32.mrb[0].mxu0
      %v1288 = vadd.f32 0.0, %v1287
      %v1289 = vpop.f32.mrb[0].mxu0
      %1290 = vmatprep.mubr.f32.mxu0 0.0
      %1291 = vmatmul.mubr.f32.gmra.mrb[0].mxu0 %v1195
      %v1292 = vpop.f32.mrb[0].mxu0
      %v1293 = vadd.f32 0.0, %v1292
      %v1294 = vpop.f32.mrb[0].mxu0
      %1295 = vmatprep.mubr.f32.mxu0 0.0
      %1296 = vmatmul.mubr.f32.gmra.mrb[0].mxu0 %v1198
      %v1297 = vpop.f32.mrb[0].mxu0
      %v1298 = vadd.f32 0.0, %v1297
      %v1299 = vpop.f32.mrb[0].mxu0
      %1300 = vmatprep.mubr.f32.mxu0 0.0
      %1301 = vmatmul.mubr.f32.gmra.mrb[0].mxu0 %v1201
      %v1302 = vpop.f32.mrb[0].mxu0
      %v1303 = vadd.f32 0.0, %v1302
      %v1304 = vpop.f32.mrb[0].mxu0
      %1305 = vmatprep.mubr.f32.mxu0 0.0
      %1306 = vmatmul.mubr.f32.gmra.mrb[0].mxu0 %v1204
      %v1307 = vpop.f32.mrb[0].mxu0
      %v1308 = vadd.f32 0.0, %v1307
      %v1309 = vpop.f32.mrb[0].mxu0
      %1310 = vmatprep.mubr.f32.mxu0 0.0
      %1311 = vmatmul.mubr.f32.gmra.mrb[0].mxu0 %v1207
      %v1312 = vpop.f32.mrb[0].mxu0
      %v1313 = vadd.f32 0.0, %v1312
      %v1314 = vpop.f32.mrb[0].mxu0
      %1315 = vmatprep.mubr.f32.mxu0 0.0
      %1316 = vmatmul.mubr.f32.gmra.mrb[0].mxu0 %v1210
      %v1317 = vpop.f32.mrb[0].mxu0
      %v1318 = vadd.f32 0.0, %v1317
      %v1319 = vpop.f32.mrb[0].mxu0
      %1320 = vmatprep.mubr.f32.mxu0 0.0
      %1321 = vmatmul.mubr.f32.gmra.mrb[0].mxu0 %v1213
      %v1322 = vpop.f32.mrb[0].mxu0
      %v1323 = vadd.f32 0.0, %v1322
      %v1324 = vpop.f32.mrb[0].mxu0
      %1325 = vmatprep.mubr.f32.mxu0 0.0
      %1326 = vmatmul.mubr.f32.gmra.mrb[0].mxu0 %v1216
      %v1327 = vpop.f32.mrb[0].mxu0
      %v1328 = vadd.f32 0.0, %v1327
      %v1329 = vpop.f32.mrb[0].mxu0
      %1330 = vmatprep.mubr.f32.mxu0 0.0
      %1331 = vmatmul.mubr.f32.gmra.mrb[0].mxu0 %v1219
      %v1332 = vpop.f32.mrb[0].mxu0
      %v1333 = vadd.f32 0.0, %v1332
      %v1334 = vpop.f32.mrb[0].mxu0
      %1335 = vdwg.mxu0
      %v1336 = vadd.f32 %v1168, %v1288
      %v1337 = vadd.f32 %v1169, %v1293
      %v1338 = vadd.f32 %v1170, %v1298
      %v1339 = vadd.f32 %v1171, %v1303
      %v1340 = vadd.f32 %v1172, %v1308
      %v1341 = vadd.f32 %v1173, %v1313
      %v1342 = vadd.f32 %v1174, %v1318
      %v1343 = vadd.f32 %v1175, %v1323
      %v1344 = vadd.f32 %v1176, %v1328
      %v1345 = vadd.f32 %v1177, %v1333
      %v1346 = vld [vmem:[%s683 + $0x1] sm:$0xff]
      %v1347 = vld [vmem:[%s683 + $0x9] sm:$0xff]
      %v1348 = vld [vmem:[%s683 + $0x11] sm:$0xff]
      %v1349 = vld [vmem:[%s683 + $0x19] sm:$0xff]
      %v1350 = vld [vmem:[%s683 + $0x21] sm:$0xff]
      %v1351 = vld [vmem:[%s683 + $0x29] sm:$0xff]
      %v1352 = vld [vmem:[%s683 + $0x31] sm:$0xff]
      %v1353 = vld [vmem:[%s683 + $0x39] sm:$0xff]
      %v1354 = vld [vmem:[%s683 + $0x41] sm:$0xff]
      %v1355 = vld [vmem:[%s683 + $0x49] sm:$0xff]
      %s1356 = scalar_lea.vmem %s3, 16
      %v1357 = vld [vmem:[%s1356] sm:$0xff]
      %v1359 = vsel %vm497, %v1346, 0
      %v1362 = vsel %vm497, %v1347, 0
      %v1365 = vsel %vm497, %v1348, 0
      %v1368 = vsel %vm497, %v1349, 0
      %v1371 = vsel %vm497, %v1350, 0
      %v1374 = vsel %vm497, %v1351, 0
      %v1377 = vsel %vm497, %v1352, 0
      %v1380 = vsel %vm497, %v1353, 0
      %v1383 = vsel %vm497, %v1354, 0
      %v1386 = vsel %vm497, %v1355, 0
      %1388 = vmatprep.subr.mxu0 0.0
      %1389 = vmatpush1.msra.mxu0 %v1357
      %1390 = vmatprep.subr.mxu0 0.0
      %1391 = vmatpush1.msra.mxu0 0.0
      %1392 = vmatprep.subr.mxu0 0.0
      %1393 = vmatpush1.msra.mxu0 0.0
      %1394 = vmatprep.subr.mxu0 0.0
      %1395 = vmatpush1.msra.mxu0 0.0
      %1396 = vmatprep.subr.mxu0 0.0
      %1397 = vmatpush1.msra.mxu0 0.0
      %1398 = vmatprep.subr.mxu0 0.0
      %1399 = vmatpush1.msra.mxu0 0.0
      %1400 = vmatprep.subr.mxu0 0.0
      %1401 = vmatpush1.msra.mxu0 0.0
      %1402 = vmatprep.subr.mxu0 0.0
      %1403 = vmatpush1.msra.mxu0 0.0
      %1404 = vmatprep.subr.mxu0 0.0
      %1405 = vmatpush1.msra.mxu0 0.0
      %1406 = vmatprep.subr.mxu0 0.0
      %1407 = vmatpush1.msra.mxu0 0.0
      %1408 = vmatprep.subr.mxu0 0.0
      %1409 = vmatpush1.msra.mxu0 0.0
      %1410 = vmatprep.subr.mxu0 0.0
      %1411 = vmatpush1.msra.mxu0 0.0
      %1412 = vmatprep.subr.mxu0 0.0
      %1413 = vmatpush1.msra.mxu0 0.0
      %1414 = vmatprep.subr.mxu0 0.0
      %1415 = vmatpush1.msra.mxu0 0.0
      %1416 = vmatprep.subr.mxu0 0.0
      %1417 = vmatpush1.msra.mxu0 0.0
      %1418 = vmatprep.subr.mxu0 0.0
      %1419 = vmatpush1.msra.mxu0 0.0
      %1420 = vmatprep.subr.mxu0 0.0
      %1421 = vmatpush1.msra.mxu0 0.0
      %1422 = vmatprep.subr.mxu0 0.0
      %1423 = vmatpush1.msra.mxu0 0.0
      %1424 = vmatprep.subr.mxu0 0.0
      %1425 = vmatpush1.msra.mxu0 0.0
      %1426 = vmatprep.subr.mxu0 0.0
      %1427 = vmatpush1.msra.mxu0 0.0
      %1428 = vmatprep.subr.mxu0 0.0
      %1429 = vmatpush1.msra.mxu0 0.0
      %1430 = vmatprep.subr.mxu0 0.0
      %1431 = vmatpush1.msra.mxu0 0.0
      %1432 = vmatprep.subr.mxu0 0.0
      %1433 = vmatpush1.msra.mxu0 0.0
      %1434 = vmatprep.subr.mxu0 0.0
      %1435 = vmatpush1.msra.mxu0 0.0
      %1436 = vmatprep.subr.mxu0 0.0
      %1437 = vmatpush1.msra.mxu0 0.0
      %1438 = vmatprep.subr.mxu0 0.0
      %1439 = vmatpush1.msra.mxu0 0.0
      %1440 = vmatprep.subr.mxu0 0.0
      %1441 = vmatpush1.msra.mxu0 0.0
      %1442 = vmatprep.subr.mxu0 0.0
      %1443 = vmatpush1.msra.mxu0 0.0
      %1444 = vmatprep.subr.mxu0 0.0
      %1445 = vmatpush1.msra.mxu0 0.0
      %1446 = vmatprep.subr.mxu0 0.0
      %1447 = vmatpush1.msra.mxu0 0.0
      %1448 = vmatprep.subr.mxu0 0.0
      %1449 = vmatpush1.msra.mxu0 0.0
      %1450 = vmatprep.subr.mxu0 0.0
      %1451 = vmatpush1.msra.mxu0 0.0
      %1452 = vmatprep.mubr.f32.mxu0 0.0
      %1453 = vmatmul.mubr.f32.gmra.mrb[0].mxu0 %v1359
      %v1454 = vpop.f32.mrb[0].mxu0
      %v1455 = vadd.f32 0.0, %v1454
      %v1456 = vpop.f32.mrb[0].mxu0
      %1457 = vmatprep.mubr.f32.mxu0 0.0
      %1458 = vmatmul.mubr.f32.gmra.mrb[0].mxu0 %v1362
      %v1459 = vpop.f32.mrb[0].mxu0
      %v1460 = vadd.f32 0.0, %v1459
      %v1461 = vpop.f32.mrb[0].mxu0
      %1462 = vmatprep.mubr.f32.mxu0 0.0
      %1463 = vmatmul.mubr.f32.gmra.mrb[0].mxu0 %v1365
      %v1464 = vpop.f32.mrb[0].mxu0
      %v1465 = vadd.f32 0.0, %v1464
      %v1466 = vpop.f32.mrb[0].mxu0
      %1467 = vmatprep.mubr.f32.mxu0 0.0
      %1468 = vmatmul.mubr.f32.gmra.mrb[0].mxu0 %v1368
      %v1469 = vpop.f32.mrb[0].mxu0
      %v1470 = vadd.f32 0.0, %v1469
      %v1471 = vpop.f32.mrb[0].mxu0
      %1472 = vmatprep.mubr.f32.mxu0 0.0
      %1473 = vmatmul.mubr.f32.gmra.mrb[0].mxu0 %v1371
      %v1474 = vpop.f32.mrb[0].mxu0
      %v1475 = vadd.f32 0.0, %v1474
      %v1476 = vpop.f32.mrb[0].mxu0
      %1477 = vmatprep.mubr.f32.mxu0 0.0
      %1478 = vmatmul.mubr.f32.gmra.mrb[0].mxu0 %v1374
      %v1479 = vpop.f32.mrb[0].mxu0
      %v1480 = vadd.f32 0.0, %v1479
      %v1481 = vpop.f32.mrb[0].mxu0
      %1482 = vmatprep.mubr.f32.mxu0 0.0
      %1483 = vmatmul.mubr.f32.gmra.mrb[0].mxu0 %v1377
      %v1484 = vpop.f32.mrb[0].mxu0
      %v1485 = vadd.f32 0.0, %v1484
      %v1486 = vpop.f32.mrb[0].mxu0
      %1487 = vmatprep.mubr.f32.mxu0 0.0
      %1488 = vmatmul.mubr.f32.gmra.mrb[0].mxu0 %v1380
      %v1489 = vpop.f32.mrb[0].mxu0
      %v1490 = vadd.f32 0.0, %v1489
      %v1491 = vpop.f32.mrb[0].mxu0
      %1492 = vmatprep.mubr.f32.mxu0 0.0
      %1493 = vmatmul.mubr.f32.gmra.mrb[0].mxu0 %v1383
      %v1494 = vpop.f32.mrb[0].mxu0
      %v1495 = vadd.f32 0.0, %v1494
      %v1496 = vpop.f32.mrb[0].mxu0
      %1497 = vmatprep.mubr.f32.mxu0 0.0
      %1498 = vmatmul.mubr.f32.gmra.mrb[0].mxu0 %v1386
      %v1499 = vpop.f32.mrb[0].mxu0
      %v1500 = vadd.f32 0.0, %v1499
      %v1501 = vpop.f32.mrb[0].mxu0
      %1502 = vdwg.mxu0
      %v1503 = vadd.f32 %v1336, %v1455
      %v1504 = vadd.f32 %v1337, %v1460
      %v1505 = vadd.f32 %v1338, %v1465
      %v1506 = vadd.f32 %v1339, %v1470
      %v1507 = vadd.f32 %v1340, %v1475
      %v1508 = vadd.f32 %v1341, %v1480
      %v1509 = vadd.f32 %v1342, %v1485
      %v1510 = vadd.f32 %v1343, %v1490
      %v1511 = vadd.f32 %v1344, %v1495
      %v1512 = vadd.f32 %v1345, %v1500
      %v1513 = vld [vmem:[%s709 + $0x1] sm:$0xff]
      %v1514 = vld [vmem:[%s709 + $0x9] sm:$0xff]
      %v1515 = vld [vmem:[%s709 + $0x11] sm:$0xff]
      %v1516 = vld [vmem:[%s709 + $0x19] sm:$0xff]
      %v1517 = vld [vmem:[%s709 + $0x21] sm:$0xff]
      %v1518 = vld [vmem:[%s709 + $0x29] sm:$0xff]
      %v1519 = vld [vmem:[%s709 + $0x31] sm:$0xff]
      %v1520 = vld [vmem:[%s709 + $0x39] sm:$0xff]
      %v1521 = vld [vmem:[%s709 + $0x41] sm:$0xff]
      %v1522 = vld [vmem:[%s709 + $0x49] sm:$0xff]
      %s1523 = scalar_lea.vmem %s4, 16
      %v1524 = vld [vmem:[%s1523] sm:$0xff]
      %v1526 = vsel %vm497, %v1513, 0
      %v1529 = vsel %vm497, %v1514, 0
      %v1532 = vsel %vm497, %v1515, 0
      %v1535 = vsel %vm497, %v1516, 0
      %v1538 = vsel %vm497, %v1517, 0
      %v1541 = vsel %vm497, %v1518, 0
      %v1544 = vsel %vm497, %v1519, 0
      %v1547 = vsel %vm497, %v1520, 0
      %v1550 = vsel %vm497, %v1521, 0
      %v1553 = vsel %vm497, %v1522, 0
      %1555 = vmatprep.subr.mxu0 0.0
      %1556 = vmatpush1.msra.mxu0 %v1524
      %1557 = vmatprep.subr.mxu0 0.0
      %1558 = vmatpush1.msra.mxu0 0.0
      %1559 = vmatprep.subr.mxu0 0.0
      %1560 = vmatpush1.msra.mxu0 0.0
      %1561 = vmatprep.subr.mxu0 0.0
      %1562 = vmatpush1.msra.mxu0 0.0
      %1563 = vmatprep.subr.mxu0 0.0
      %1564 = vmatpush1.msra.mxu0 0.0
      %1565 = vmatprep.subr.mxu0 0.0
      %1566 = vmatpush1.msra.mxu0 0.0
      %1567 = vmatprep.subr.mxu0 0.0
      %1568 = vmatpush1.msra.mxu0 0.0
      %1569 = vmatprep.subr.mxu0 0.0
      %1570 = vmatpush1.msra.mxu0 0.0
      %1571 = vmatprep.subr.mxu0 0.0
      %1572 = vmatpush1.msra.mxu0 0.0
      %1573 = vmatprep.subr.mxu0 0.0
      %1574 = vmatpush1.msra.mxu0 0.0
      %1575 = vmatprep.subr.mxu0 0.0
      %1576 = vmatpush1.msra.mxu0 0.0
      %1577 = vmatprep.subr.mxu0 0.0
      %1578 = vmatpush1.msra.mxu0 0.0
      %1579 = vmatprep.subr.mxu0 0.0
      %1580 = vmatpush1.msra.mxu0 0.0
      %1581 = vmatprep.subr.mxu0 0.0
      %1582 = vmatpush1.msra.mxu0 0.0
      %1583 = vmatprep.subr.mxu0 0.0
      %1584 = vmatpush1.msra.mxu0 0.0
      %1585 = vmatprep.subr.mxu0 0.0
      %1586 = vmatpush1.msra.mxu0 0.0
      %1587 = vmatprep.subr.mxu0 0.0
      %1588 = vmatpush1.msra.mxu0 0.0
      %1589 = vmatprep.subr.mxu0 0.0
      %1590 = vmatpush1.msra.mxu0 0.0
      %1591 = vmatprep.subr.mxu0 0.0
      %1592 = vmatpush1.msra.mxu0 0.0
      %1593 = vmatprep.subr.mxu0 0.0
      %1594 = vmatpush1.msra.mxu0 0.0
      %1595 = vmatprep.subr.mxu0 0.0
      %1596 = vmatpush1.msra.mxu0 0.0
      %1597 = vmatprep.subr.mxu0 0.0
      %1598 = vmatpush1.msra.mxu0 0.0
      %1599 = vmatprep.subr.mxu0 0.0
      %1600 = vmatpush1.msra.mxu0 0.0
      %1601 = vmatprep.subr.mxu0 0.0
      %1602 = vmatpush1.msra.mxu0 0.0
      %1603 = vmatprep.subr.mxu0 0.0
      %1604 = vmatpush1.msra.mxu0 0.0
      %1605 = vmatprep.subr.mxu0 0.0
      %1606 = vmatpush1.msra.mxu0 0.0
      %1607 = vmatprep.subr.mxu0 0.0
      %1608 = vmatpush1.msra.mxu0 0.0
      %1609 = vmatprep.subr.mxu0 0.0
      %1610 = vmatpush1.msra.mxu0 0.0
      %1611 = vmatprep.subr.mxu0 0.0
      %1612 = vmatpush1.msra.mxu0 0.0
      %1613 = vmatprep.subr.mxu0 0.0
      %1614 = vmatpush1.msra.mxu0 0.0
      %1615 = vmatprep.subr.mxu0 0.0
      %1616 = vmatpush1.msra.mxu0 0.0
      %1617 = vmatprep.subr.mxu0 0.0
      %1618 = vmatpush1.msra.mxu0 0.0
      %1619 = vmatprep.mubr.f32.mxu0 0.0
      %1620 = vmatmul.mubr.f32.gmra.mrb[0].mxu0 %v1526
      %v1621 = vpop.f32.mrb[0].mxu0
      %v1622 = vadd.f32 0.0, %v1621
      %v1623 = vpop.f32.mrb[0].mxu0
      %1624 = vmatprep.mubr.f32.mxu0 0.0
      %1625 = vmatmul.mubr.f32.gmra.mrb[0].mxu0 %v1529
      %v1626 = vpop.f32.mrb[0].mxu0
      %v1627 = vadd.f32 0.0, %v1626
      %v1628 = vpop.f32.mrb[0].mxu0
      %1629 = vmatprep.mubr.f32.mxu0 0.0
      %1630 = vmatmul.mubr.f32.gmra.mrb[0].mxu0 %v1532
      %v1631 = vpop.f32.mrb[0].mxu0
      %v1632 = vadd.f32 0.0, %v1631
      %v1633 = vpop.f32.mrb[0].mxu0
      %1634 = vmatprep.mubr.f32.mxu0 0.0
      %1635 = vmatmul.mubr.f32.gmra.mrb[0].mxu0 %v1535
      %v1636 = vpop.f32.mrb[0].mxu0
      %v1637 = vadd.f32 0.0, %v1636
      %v1638 = vpop.f32.mrb[0].mxu0
      %1639 = vmatprep.mubr.f32.mxu0 0.0
      %1640 = vmatmul.mubr.f32.gmra.mrb[0].mxu0 %v1538
      %v1641 = vpop.f32.mrb[0].mxu0
      %v1642 = vadd.f32 0.0, %v1641
      %v1643 = vpop.f32.mrb[0].mxu0
      %1644 = vmatprep.mubr.f32.mxu0 0.0
      %1645 = vmatmul.mubr.f32.gmra.mrb[0].mxu0 %v1541
      %v1646 = vpop.f32.mrb[0].mxu0
      %v1647 = vadd.f32 0.0, %v1646
      %v1648 = vpop.f32.mrb[0].mxu0
      %1649 = vmatprep.mubr.f32.mxu0 0.0
      %1650 = vmatmul.mubr.f32.gmra.mrb[0].mxu0 %v1544
      %v1651 = vpop.f32.mrb[0].mxu0
      %v1652 = vadd.f32 0.0, %v1651
      %v1653 = vpop.f32.mrb[0].mxu0
      %1654 = vmatprep.mubr.f32.mxu0 0.0
      %1655 = vmatmul.mubr.f32.gmra.mrb[0].mxu0 %v1547
      %v1656 = vpop.f32.mrb[0].mxu0
      %v1657 = vadd.f32 0.0, %v1656
      %v1658 = vpop.f32.mrb[0].mxu0
      %1659 = vmatprep.mubr.f32.mxu0 0.0
      %1660 = vmatmul.mubr.f32.gmra.mrb[0].mxu0 %v1550
      %v1661 = vpop.f32.mrb[0].mxu0
      %v1662 = vadd.f32 0.0, %v1661
      %v1663 = vpop.f32.mrb[0].mxu0
      %1664 = vmatprep.mubr.f32.mxu0 0.0
      %1665 = vmatmul.mubr.f32.gmra.mrb[0].mxu0 %v1553
      %v1666 = vpop.f32.mrb[0].mxu0
      %v1667 = vadd.f32 0.0, %v1666
      %v1668 = vpop.f32.mrb[0].mxu0
      %1669 = vdwg.mxu0
      %v1670 = vadd.f32 %v1503, %v1622
      %v1671 = vadd.f32 %v1504, %v1627
      %v1672 = vadd.f32 %v1505, %v1632
      %v1673 = vadd.f32 %v1506, %v1637
      %v1674 = vadd.f32 %v1507, %v1642
      %v1675 = vadd.f32 %v1508, %v1647
      %v1676 = vadd.f32 %v1509, %v1652
      %v1677 = vadd.f32 %v1510, %v1657
      %v1678 = vadd.f32 %v1511, %v1662
      %v1679 = vadd.f32 %v1512, %v1667
      %v1680 = vld [vmem:[%s626 + $0x2] sm:$0xff]
      %v1681 = vld [vmem:[%s626 + $0xa] sm:$0xff]
      %v1682 = vld [vmem:[%s626 + $0x12] sm:$0xff]
      %v1683 = vld [vmem:[%s626 + $0x1a] sm:$0xff]
      %v1684 = vld [vmem:[%s626 + $0x22] sm:$0xff]
      %v1685 = vld [vmem:[%s626 + $0x2a] sm:$0xff]
      %v1686 = vld [vmem:[%s626 + $0x32] sm:$0xff]
      %v1687 = vld [vmem:[%s626 + $0x3a] sm:$0xff]
      %v1688 = vld [vmem:[%s626 + $0x42] sm:$0xff]
      %v1689 = vld [vmem:[%s626 + $0x4a] sm:$0xff]
      %s1690 = scalar_lea.vmem %s3, 24
      %v1691 = vld [vmem:[%s1690] sm:$0xff]
      %v1693 = vsel %vm497, %v1680, 0
      %v1696 = vsel %vm497, %v1681, 0
      %v1699 = vsel %vm497, %v1682, 0
      %v1702 = vsel %vm497, %v1683, 0
      %v1705 = vsel %vm497, %v1684, 0
      %v1708 = vsel %vm497, %v1685, 0
      %v1711 = vsel %vm497, %v1686, 0
      %v1714 = vsel %vm497, %v1687, 0
      %v1717 = vsel %vm497, %v1688, 0
      %v1720 = vsel %vm497, %v1689, 0
      %1722 = vmatprep.subr.mxu0 0.0
      %1723 = vmatpush1.msra.mxu0 %v1691
      %1724 = vmatprep.subr.mxu0 0.0
      %1725 = vmatpush1.msra.mxu0 0.0
      %1726 = vmatprep.subr.mxu0 0.0
      %1727 = vmatpush1.msra.mxu0 0.0
      %1728 = vmatprep.subr.mxu0 0.0
      %1729 = vmatpush1.msra.mxu0 0.0
      %1730 = vmatprep.subr.mxu0 0.0
      %1731 = vmatpush1.msra.mxu0 0.0
      %1732 = vmatprep.subr.mxu0 0.0
      %1733 = vmatpush1.msra.mxu0 0.0
      %1734 = vmatprep.subr.mxu0 0.0
      %1735 = vmatpush1.msra.mxu0 0.0
      %1736 = vmatprep.subr.mxu0 0.0
      %1737 = vmatpush1.msra.mxu0 0.0
      %1738 = vmatprep.subr.mxu0 0.0
      %1739 = vmatpush1.msra.mxu0 0.0
      %1740 = vmatprep.subr.mxu0 0.0
      %1741 = vmatpush1.msra.mxu0 0.0
      %1742 = vmatprep.subr.mxu0 0.0
      %1743 = vmatpush1.msra.mxu0 0.0
      %1744 = vmatprep.subr.mxu0 0.0
      %1745 = vmatpush1.msra.mxu0 0.0
      %1746 = vmatprep.subr.mxu0 0.0
      %1747 = vmatpush1.msra.mxu0 0.0
      %1748 = vmatprep.subr.mxu0 0.0
      %1749 = vmatpush1.msra.mxu0 0.0
      %1750 = vmatprep.subr.mxu0 0.0
      %1751 = vmatpush1.msra.mxu0 0.0
      %1752 = vmatprep.subr.mxu0 0.0
      %1753 = vmatpush1.msra.mxu0 0.0
      %1754 = vmatprep.subr.mxu0 0.0
      %1755 = vmatpush1.msra.mxu0 0.0
      %1756 = vmatprep.subr.mxu0 0.0
      %1757 = vmatpush1.msra.mxu0 0.0
      %1758 = vmatprep.subr.mxu0 0.0
      %1759 = vmatpush1.msra.mxu0 0.0
      %1760 = vmatprep.subr.mxu0 0.0
      %1761 = vmatpush1.msra.mxu0 0.0
      %1762 = vmatprep.subr.mxu0 0.0
      %1763 = vmatpush1.msra.mxu0 0.0
      %1764 = vmatprep.subr.mxu0 0.0
      %1765 = vmatpush1.msra.mxu0 0.0
      %1766 = vmatprep.subr.mxu0 0.0
      %1767 = vmatpush1.msra.mxu0 0.0
      %1768 = vmatprep.subr.mxu0 0.0
      %1769 = vmatpush1.msra.mxu0 0.0
      %1770 = vmatprep.subr.mxu0 0.0
      %1771 = vmatpush1.msra.mxu0 0.0
      %1772 = vmatprep.subr.mxu0 0.0
      %1773 = vmatpush1.msra.mxu0 0.0
      %1774 = vmatprep.subr.mxu0 0.0
      %1775 = vmatpush1.msra.mxu0 0.0
      %1776 = vmatprep.subr.mxu0 0.0
      %1777 = vmatpush1.msra.mxu0 0.0
      %1778 = vmatprep.subr.mxu0 0.0
      %1779 = vmatpush1.msra.mxu0 0.0
      %1780 = vmatprep.subr.mxu0 0.0
      %1781 = vmatpush1.msra.mxu0 0.0
      %1782 = vmatprep.subr.mxu0 0.0
      %1783 = vmatpush1.msra.mxu0 0.0
      %1784 = vmatprep.subr.mxu0 0.0
      %1785 = vmatpush1.msra.mxu0 0.0
      %1786 = vmatprep.mubr.f32.mxu0 0.0
      %1787 = vmatmul.mubr.f32.gmra.mrb[0].mxu0 %v1693
      %v1788 = vpop.f32.mrb[0].mxu0
      %v1789 = vadd.f32 0.0, %v1788
      %v1790 = vpop.f32.mrb[0].mxu0
      %1791 = vmatprep.mubr.f32.mxu0 0.0
      %1792 = vmatmul.mubr.f32.gmra.mrb[0].mxu0 %v1696
      %v1793 = vpop.f32.mrb[0].mxu0
      %v1794 = vadd.f32 0.0, %v1793
      %v1795 = vpop.f32.mrb[0].mxu0
      %1796 = vmatprep.mubr.f32.mxu0 0.0
      %1797 = vmatmul.mubr.f32.gmra.mrb[0].mxu0 %v1699
      %v1798 = vpop.f32.mrb[0].mxu0
      %v1799 = vadd.f32 0.0, %v1798
      %v1800 = vpop.f32.mrb[0].mxu0
      %1801 = vmatprep.mubr.f32.mxu0 0.0
      %1802 = vmatmul.mubr.f32.gmra.mrb[0].mxu0 %v1702
      %v1803 = vpop.f32.mrb[0].mxu0
      %v1804 = vadd.f32 0.0, %v1803
      %v1805 = vpop.f32.mrb[0].mxu0
      %1806 = vmatprep.mubr.f32.mxu0 0.0
      %1807 = vmatmul.mubr.f32.gmra.mrb[0].mxu0 %v1705
      %v1808 = vpop.f32.mrb[0].mxu0
      %v1809 = vadd.f32 0.0, %v1808
      %v1810 = vpop.f32.mrb[0].mxu0
      %1811 = vmatprep.mubr.f32.mxu0 0.0
      %1812 = vmatmul.mubr.f32.gmra.mrb[0].mxu0 %v1708
      %v1813 = vpop.f32.mrb[0].mxu0
      %v1814 = vadd.f32 0.0, %v1813
      %v1815 = vpop.f32.mrb[0].mxu0
      %1816 = vmatprep.mubr.f32.mxu0 0.0
      %1817 = vmatmul.mubr.f32.gmra.mrb[0].mxu0 %v1711
      %v1818 = vpop.f32.mrb[0].mxu0
      %v1819 = vadd.f32 0.0, %v1818
      %v1820 = vpop.f32.mrb[0].mxu0
      %1821 = vmatprep.mubr.f32.mxu0 0.0
      %1822 = vmatmul.mubr.f32.gmra.mrb[0].mxu0 %v1714
      %v1823 = vpop.f32.mrb[0].mxu0
      %v1824 = vadd.f32 0.0, %v1823
      %v1825 = vpop.f32.mrb[0].mxu0
      %1826 = vmatprep.mubr.f32.mxu0 0.0
      %1827 = vmatmul.mubr.f32.gmra.mrb[0].mxu0 %v1717
      %v1828 = vpop.f32.mrb[0].mxu0
      %v1829 = vadd.f32 0.0, %v1828
      %v1830 = vpop.f32.mrb[0].mxu0
      %1831 = vmatprep.mubr.f32.mxu0 0.0
      %1832 = vmatmul.mubr.f32.gmra.mrb[0].mxu0 %v1720
      %v1833 = vpop.f32.mrb[0].mxu0
      %v1834 = vadd.f32 0.0, %v1833
      %v1835 = vpop.f32.mrb[0].mxu0
      %1836 = vdwg.mxu0
      %v1837 = vadd.f32 %v1670, %v1789
      %v1838 = vadd.f32 %v1671, %v1794
      %v1839 = vadd.f32 %v1672, %v1799
      %v1840 = vadd.f32 %v1673, %v1804
      %v1841 = vadd.f32 %v1674, %v1809
      %v1842 = vadd.f32 %v1675, %v1814
      %v1843 = vadd.f32 %v1676, %v1819
      %v1844 = vadd.f32 %v1677, %v1824
      %v1845 = vadd.f32 %v1678, %v1829
      %v1846 = vadd.f32 %v1679, %v1834
      %v1847 = vld [vmem:[%s1178 + $0x2] sm:$0xff]
      %v1848 = vld [vmem:[%s1178 + $0xa] sm:$0xff]
      %v1849 = vld [vmem:[%s1178 + $0x12] sm:$0xff]
      %v1850 = vld [vmem:[%s1178 + $0x1a] sm:$0xff]
      %v1851 = vld [vmem:[%s1178 + $0x22] sm:$0xff]
      %v1852 = vld [vmem:[%s1178 + $0x2a] sm:$0xff]
      %v1853 = vld [vmem:[%s1178 + $0x32] sm:$0xff]
      %v1854 = vld [vmem:[%s1178 + $0x3a] sm:$0xff]
      %v1855 = vld [vmem:[%s1178 + $0x42] sm:$0xff]
      %v1856 = vld [vmem:[%s1178 + $0x4a] sm:$0xff]
      %s1857 = scalar_lea.vmem %s4, 24
      %v1858 = vld [vmem:[%s1857] sm:$0xff]
      %v1860 = vsel %vm497, %v1847, 0
      %v1863 = vsel %vm497, %v1848, 0
      %v1866 = vsel %vm497, %v1849, 0
      %v1869 = vsel %vm497, %v1850, 0
      %v1872 = vsel %vm497, %v1851, 0
      %v1875 = vsel %vm497, %v1852, 0
      %v1878 = vsel %vm497, %v1853, 0
      %v1881 = vsel %vm497, %v1854, 0
      %v1884 = vsel %vm497, %v1855, 0
      %v1887 = vsel %vm497, %v1856, 0
      %1889 = vmatprep.subr.mxu0 0.0
      %1890 = vmatpush1.msra.mxu0 %v1858
      %1891 = vmatprep.subr.mxu0 0.0
      %1892 = vmatpush1.msra.mxu0 0.0
      %1893 = vmatprep.subr.mxu0 0.0
      %1894 = vmatpush1.msra.mxu0 0.0
      %1895 = vmatprep.subr.mxu0 0.0
      %1896 = vmatpush1.msra.mxu0 0.0
      %1897 = vmatprep.subr.mxu0 0.0
      %1898 = vmatpush1.msra.mxu0 0.0
      %1899 = vmatprep.subr.mxu0 0.0
      %1900 = vmatpush1.msra.mxu0 0.0
      %1901 = vmatprep.subr.mxu0 0.0
      %1902 = vmatpush1.msra.mxu0 0.0
      %1903 = vmatprep.subr.mxu0 0.0
      %1904 = vmatpush1.msra.mxu0 0.0
      %1905 = vmatprep.subr.mxu0 0.0
      %1906 = vmatpush1.msra.mxu0 0.0
      %1907 = vmatprep.subr.mxu0 0.0
      %1908 = vmatpush1.msra.mxu0 0.0
      %1909 = vmatprep.subr.mxu0 0.0
      %1910 = vmatpush1.msra.mxu0 0.0
      %1911 = vmatprep.subr.mxu0 0.0
      %1912 = vmatpush1.msra.mxu0 0.0
      %1913 = vmatprep.subr.mxu0 0.0
      %1914 = vmatpush1.msra.mxu0 0.0
      %1915 = vmatprep.subr.mxu0 0.0
      %1916 = vmatpush1.msra.mxu0 0.0
      %1917 = vmatprep.subr.mxu0 0.0
      %1918 = vmatpush1.msra.mxu0 0.0
      %1919 = vmatprep.subr.mxu0 0.0
      %1920 = vmatpush1.msra.mxu0 0.0
      %1921 = vmatprep.subr.mxu0 0.0
      %1922 = vmatpush1.msra.mxu0 0.0
      %1923 = vmatprep.subr.mxu0 0.0
      %1924 = vmatpush1.msra.mxu0 0.0
      %1925 = vmatprep.subr.mxu0 0.0
      %1926 = vmatpush1.msra.mxu0 0.0
      %1927 = vmatprep.subr.mxu0 0.0
      %1928 = vmatpush1.msra.mxu0 0.0
      %1929 = vmatprep.subr.mxu0 0.0
      %1930 = vmatpush1.msra.mxu0 0.0
      %1931 = vmatprep.subr.mxu0 0.0
      %1932 = vmatpush1.msra.mxu0 0.0
      %1933 = vmatprep.subr.mxu0 0.0
      %1934 = vmatpush1.msra.mxu0 0.0
      %1935 = vmatprep.subr.mxu0 0.0
      %1936 = vmatpush1.msra.mxu0 0.0
      %1937 = vmatprep.subr.mxu0 0.0
      %1938 = vmatpush1.msra.mxu0 0.0
      %1939 = vmatprep.subr.mxu0 0.0
      %1940 = vmatpush1.msra.mxu0 0.0
      %1941 = vmatprep.subr.mxu0 0.0
      %1942 = vmatpush1.msra.mxu0 0.0
      %1943 = vmatprep.subr.mxu0 0.0
      %1944 = vmatpush1.msra.mxu0 0.0
      %1945 = vmatprep.subr.mxu0 0.0
      %1946 = vmatpush1.msra.mxu0 0.0
      %1947 = vmatprep.subr.mxu0 0.0
      %1948 = vmatpush1.msra.mxu0 0.0
      %1949 = vmatprep.subr.mxu0 0.0
      %1950 = vmatpush1.msra.mxu0 0.0
      %1951 = vmatprep.subr.mxu0 0.0
      %1952 = vmatpush1.msra.mxu0 0.0
      %1953 = vmatprep.mubr.f32.mxu0 0.0
      %1954 = vmatmul.mubr.f32.gmra.mrb[0].mxu0 %v1860
      %v1955 = vpop.f32.mrb[0].mxu0
      %v1956 = vadd.f32 0.0, %v1955
      %v1957 = vpop.f32.mrb[0].mxu0
      %1958 = vmatprep.mubr.f32.mxu0 0.0
      %1959 = vmatmul.mubr.f32.gmra.mrb[0].mxu0 %v1863
      %v1960 = vpop.f32.mrb[0].mxu0
      %v1961 = vadd.f32 0.0, %v1960
      %v1962 = vpop.f32.mrb[0].mxu0
      %1963 = vmatprep.mubr.f32.mxu0 0.0
      %1964 = vmatmul.mubr.f32.gmra.mrb[0].mxu0 %v1866
      %v1965 = vpop.f32.mrb[0].mxu0
      %v1966 = vadd.f32 0.0, %v1965
      %v1967 = vpop.f32.mrb[0].mxu0
      %1968 = vmatprep.mubr.f32.mxu0 0.0
      %1969 = vmatmul.mubr.f32.gmra.mrb[0].mxu0 %v1869
      %v1970 = vpop.f32.mrb[0].mxu0
      %v1971 = vadd.f32 0.0, %v1970
      %v1972 = vpop.f32.mrb[0].mxu0
      %1973 = vmatprep.mubr.f32.mxu0 0.0
      %1974 = vmatmul.mubr.f32.gmra.mrb[0].mxu0 %v1872
      %v1975 = vpop.f32.mrb[0].mxu0
      %v1976 = vadd.f32 0.0, %v1975
      %v1977 = vpop.f32.mrb[0].mxu0
      %1978 = vmatprep.mubr.f32.mxu0 0.0
      %1979 = vmatmul.mubr.f32.gmra.mrb[0].mxu0 %v1875
      %v1980 = vpop.f32.mrb[0].mxu0
      %v1981 = vadd.f32 0.0, %v1980
      %v1982 = vpop.f32.mrb[0].mxu0
      %1983 = vmatprep.mubr.f32.mxu0 0.0
      %1984 = vmatmul.mubr.f32.gmra.mrb[0].mxu0 %v1878
      %v1985 = vpop.f32.mrb[0].mxu0
      %v1986 = vadd.f32 0.0, %v1985
      %v1987 = vpop.f32.mrb[0].mxu0
      %1988 = vmatprep.mubr.f32.mxu0 0.0
      %1989 = vmatmul.mubr.f32.gmra.mrb[0].mxu0 %v1881
      %v1990 = vpop.f32.mrb[0].mxu0
      %v1991 = vadd.f32 0.0, %v1990
      %v1992 = vpop.f32.mrb[0].mxu0
      %1993 = vmatprep.mubr.f32.mxu0 0.0
      %1994 = vmatmul.mubr.f32.gmra.mrb[0].mxu0 %v1884
      %v1995 = vpop.f32.mrb[0].mxu0
      %v1996 = vadd.f32 0.0, %v1995
      %v1997 = vpop.f32.mrb[0].mxu0
      %1998 = vmatprep.mubr.f32.mxu0 0.0
      %1999 = vmatmul.mubr.f32.gmra.mrb[0].mxu0 %v1887
      %v2000 = vpop.f32.mrb[0].mxu0
      %v2001 = vadd.f32 0.0, %v2000
      %v2002 = vpop.f32.mrb[0].mxu0
      %2003 = vdwg.mxu0
      %v2004 = vadd.f32 %v1837, %v1956
      %v2005 = vadd.f32 %v1838, %v1961
      %v2006 = vadd.f32 %v1839, %v1966
      %v2007 = vadd.f32 %v1840, %v1971
      %v2008 = vadd.f32 %v1841, %v1976
      %v2009 = vadd.f32 %v1842, %v1981
      %v2010 = vadd.f32 %v1843, %v1986
      %v2011 = vadd.f32 %v1844, %v1991
      %v2012 = vadd.f32 %v1845, %v1996
      %v2013 = vadd.f32 %v1846, %v2001
      %v2014 = vld [vmem:[%s569 + $0xa] sm:$0xff]
      %v2015 = vld [vmem:[%s569 + $0x12] sm:$0xff]
      %v2016 = vld [vmem:[%s569 + $0x1a] sm:$0xff]
      %v2017 = vld [vmem:[%s569 + $0x22] sm:$0xff]
      %v2018 = vld [vmem:[%s569 + $0x2a] sm:$0xff]
      %v2019 = vld [vmem:[%s569 + $0x32] sm:$0xff]
      %v2020 = vld [vmem:[%s569 + $0x3a] sm:$0xff]
      %v2021 = vld [vmem:[%s569 + $0x42] sm:$0xff]
      %v2022 = vld [vmem:[%s569 + $0x4a] sm:$0xff]
      %v2023 = vld [vmem:[%s569 + $0x52] sm:$0xff]
      %s2024 = scalar_lea.vmem %s3, 32
      %v2025 = vld [vmem:[%s2024] sm:$0xff]
      %v2027 = vsel %vm497, %v2014, 0
      %v2030 = vsel %vm497, %v2015, 0
      %v2033 = vsel %vm497, %v2016, 0
      %v2036 = vsel %vm497, %v2017, 0
      %v2039 = vsel %vm497, %v2018, 0
      %v2042 = vsel %vm497, %v2019, 0
      %v2045 = vsel %vm497, %v2020, 0
      %v2048 = vsel %vm497, %v2021, 0
      %v2051 = vsel %vm497, %v2022, 0
      %v2054 = vsel %vm497, %v2023, 0
      %2056 = vmatprep.subr.mxu0 0.0
      %2057 = vmatpush1.msra.mxu0 %v2025
      %2058 = vmatprep.subr.mxu0 0.0
      %2059 = vmatpush1.msra.mxu0 0.0
      %2060 = vmatprep.subr.mxu0 0.0
      %2061 = vmatpush1.msra.mxu0 0.0
      %2062 = vmatprep.subr.mxu0 0.0
      %2063 = vmatpush1.msra.mxu0 0.0
      %2064 = vmatprep.subr.mxu0 0.0
      %2065 = vmatpush1.msra.mxu0 0.0
      %2066 = vmatprep.subr.mxu0 0.0
      %2067 = vmatpush1.msra.mxu0 0.0
      %2068 = vmatprep.subr.mxu0 0.0
      %2069 = vmatpush1.msra.mxu0 0.0
      %2070 = vmatprep.subr.mxu0 0.0
      %2071 = vmatpush1.msra.mxu0 0.0
      %2072 = vmatprep.subr.mxu0 0.0
      %2073 = vmatpush1.msra.mxu0 0.0
      %2074 = vmatprep.subr.mxu0 0.0
      %2075 = vmatpush1.msra.mxu0 0.0
      %2076 = vmatprep.subr.mxu0 0.0
      %2077 = vmatpush1.msra.mxu0 0.0
      %2078 = vmatprep.subr.mxu0 0.0
      %2079 = vmatpush1.msra.mxu0 0.0
      %2080 = vmatprep.subr.mxu0 0.0
      %2081 = vmatpush1.msra.mxu0 0.0
      %2082 = vmatprep.subr.mxu0 0.0
      %2083 = vmatpush1.msra.mxu0 0.0
      %2084 = vmatprep.subr.mxu0 0.0
      %2085 = vmatpush1.msra.mxu0 0.0
      %2086 = vmatprep.subr.mxu0 0.0
      %2087 = vmatpush1.msra.mxu0 0.0
      %2088 = vmatprep.subr.mxu0 0.0
      %2089 = vmatpush1.msra.mxu0 0.0
      %2090 = vmatprep.subr.mxu0 0.0
      %2091 = vmatpush1.msra.mxu0 0.0
      %2092 = vmatprep.subr.mxu0 0.0
      %2093 = vmatpush1.msra.mxu0 0.0
      %2094 = vmatprep.subr.mxu0 0.0
      %2095 = vmatpush1.msra.mxu0 0.0
      %2096 = vmatprep.subr.mxu0 0.0
      %2097 = vmatpush1.msra.mxu0 0.0
      %2098 = vmatprep.subr.mxu0 0.0
      %2099 = vmatpush1.msra.mxu0 0.0
      %2100 = vmatprep.subr.mxu0 0.0
      %2101 = vmatpush1.msra.mxu0 0.0
      %2102 = vmatprep.subr.mxu0 0.0
      %2103 = vmatpush1.msra.mxu0 0.0
      %2104 = vmatprep.subr.mxu0 0.0
      %2105 = vmatpush1.msra.mxu0 0.0
      %2106 = vmatprep.subr.mxu0 0.0
      %2107 = vmatpush1.msra.mxu0 0.0
      %2108 = vmatprep.subr.mxu0 0.0
      %2109 = vmatpush1.msra.mxu0 0.0
      %2110 = vmatprep.subr.mxu0 0.0
      %2111 = vmatpush1.msra.mxu0 0.0
      %2112 = vmatprep.subr.mxu0 0.0
      %2113 = vmatpush1.msra.mxu0 0.0
      %2114 = vmatprep.subr.mxu0 0.0
      %2115 = vmatpush1.msra.mxu0 0.0
      %2116 = vmatprep.subr.mxu0 0.0
      %2117 = vmatpush1.msra.mxu0 0.0
      %2118 = vmatprep.subr.mxu0 0.0
      %2119 = vmatpush1.msra.mxu0 0.0
      %2120 = vmatprep.mubr.f32.mxu0 0.0
      %2121 = vmatmul.mubr.f32.gmra.mrb[0].mxu0 %v2027
      %v2122 = vpop.f32.mrb[0].mxu0
      %v2123 = vadd.f32 0.0, %v2122
      %v2124 = vpop.f32.mrb[0].mxu0
      %2125 = vmatprep.mubr.f32.mxu0 0.0
      %2126 = vmatmul.mubr.f32.gmra.mrb[0].mxu0 %v2030
      %v2127 = vpop.f32.mrb[0].mxu0
      %v2128 = vadd.f32 0.0, %v2127
      %v2129 = vpop.f32.mrb[0].mxu0
      %2130 = vmatprep.mubr.f32.mxu0 0.0
      %2131 = vmatmul.mubr.f32.gmra.mrb[0].mxu0 %v2033
      %v2132 = vpop.f32.mrb[0].mxu0
      %v2133 = vadd.f32 0.0, %v2132
      %v2134 = vpop.f32.mrb[0].mxu0
      %2135 = vmatprep.mubr.f32.mxu0 0.0
      %2136 = vmatmul.mubr.f32.gmra.mrb[0].mxu0 %v2036
      %v2137 = vpop.f32.mrb[0].mxu0
      %v2138 = vadd.f32 0.0, %v2137
      %v2139 = vpop.f32.mrb[0].mxu0
      %2140 = vmatprep.mubr.f32.mxu0 0.0
      %2141 = vmatmul.mubr.f32.gmra.mrb[0].mxu0 %v2039
      %v2142 = vpop.f32.mrb[0].mxu0
      %v2143 = vadd.f32 0.0, %v2142
      %v2144 = vpop.f32.mrb[0].mxu0
      %2145 = vmatprep.mubr.f32.mxu0 0.0
      %2146 = vmatmul.mubr.f32.gmra.mrb[0].mxu0 %v2042
      %v2147 = vpop.f32.mrb[0].mxu0
      %v2148 = vadd.f32 0.0, %v2147
      %v2149 = vpop.f32.mrb[0].mxu0
      %2150 = vmatprep.mubr.f32.mxu0 0.0
      %2151 = vmatmul.mubr.f32.gmra.mrb[0].mxu0 %v2045
      %v2152 = vpop.f32.mrb[0].mxu0
      %v2153 = vadd.f32 0.0, %v2152
      %v2154 = vpop.f32.mrb[0].mxu0
      %2155 = vmatprep.mubr.f32.mxu0 0.0
      %2156 = vmatmul.mubr.f32.gmra.mrb[0].mxu0 %v2048
      %v2157 = vpop.f32.mrb[0].mxu0
      %v2158 = vadd.f32 0.0, %v2157
      %v2159 = vpop.f32.mrb[0].mxu0
      %2160 = vmatprep.mubr.f32.mxu0 0.0
      %2161 = vmatmul.mubr.f32.gmra.mrb[0].mxu0 %v2051
      %v2162 = vpop.f32.mrb[0].mxu0
      %v2163 = vadd.f32 0.0, %v2162
      %v2164 = vpop.f32.mrb[0].mxu0
      %2165 = vmatprep.mubr.f32.mxu0 0.0
      %2166 = vmatmul.mubr.f32.gmra.mrb[0].mxu0 %v2054
      %v2167 = vpop.f32.mrb[0].mxu0
      %v2168 = vadd.f32 0.0, %v2167
      %v2169 = vpop.f32.mrb[0].mxu0
      %2170 = vdwg.mxu0
      %v2171 = vadd.f32 %v2004, %v2123
      %v2172 = vadd.f32 %v2005, %v2128
      %v2173 = vadd.f32 %v2006, %v2133
      %v2174 = vadd.f32 %v2007, %v2138
      %v2175 = vadd.f32 %v2008, %v2143
      %v2176 = vadd.f32 %v2009, %v2148
      %v2177 = vadd.f32 %v2010, %v2153
      %v2178 = vadd.f32 %v2011, %v2158
      %v2179 = vadd.f32 %v2012, %v2163
      %v2180 = vadd.f32 %v2013, %v2168
      %s2181 = scalar_lea.vmem %s293, 112
      %v2182 = vld [vmem:[%s2181 + $0xa] sm:$0xff]
      %v2183 = vld [vmem:[%s2181 + $0x12] sm:$0xff]
      %v2184 = vld [vmem:[%s2181 + $0x1a] sm:$0xff]
      %v2185 = vld [vmem:[%s2181 + $0x22] sm:$0xff]
      %v2186 = vld [vmem:[%s2181 + $0x2a] sm:$0xff]
      %v2187 = vld [vmem:[%s2181 + $0x32] sm:$0xff]
      %v2188 = vld [vmem:[%s2181 + $0x3a] sm:$0xff]
      %v2189 = vld [vmem:[%s2181 + $0x42] sm:$0xff]
      %v2190 = vld [vmem:[%s2181 + $0x4a] sm:$0xff]
      %v2191 = vld [vmem:[%s2181 + $0x52] sm:$0xff]
      %s2192 = scalar_lea.vmem %s4, 32
      %v2193 = vld [vmem:[%s2192] sm:$0xff]
      %v2195 = vsel %vm497, %v2182, 0
      %v2198 = vsel %vm497, %v2183, 0
      %v2201 = vsel %vm497, %v2184, 0
      %v2204 = vsel %vm497, %v2185, 0
      %v2207 = vsel %vm497, %v2186, 0
      %v2210 = vsel %vm497, %v2187, 0
      %v2213 = vsel %vm497, %v2188, 0
      %v2216 = vsel %vm497, %v2189, 0
      %v2219 = vsel %vm497, %v2190, 0
      %v2222 = vsel %vm497, %v2191, 0
      %2224 = vmatprep.subr.mxu0 0.0
      %2225 = vmatpush1.msra.mxu0 %v2193
      %2226 = vmatprep.subr.mxu0 0.0
      %2227 = vmatpush1.msra.mxu0 0.0
      %2228 = vmatprep.subr.mxu0 0.0
      %2229 = vmatpush1.msra.mxu0 0.0
      %2230 = vmatprep.subr.mxu0 0.0
      %2231 = vmatpush1.msra.mxu0 0.0
      %2232 = vmatprep.subr.mxu0 0.0
      %2233 = vmatpush1.msra.mxu0 0.0
      %2234 = vmatprep.subr.mxu0 0.0
      %2235 = vmatpush1.msra.mxu0 0.0
      %2236 = vmatprep.subr.mxu0 0.0
      %2237 = vmatpush1.msra.mxu0 0.0
      %2238 = vmatprep.subr.mxu0 0.0
      %2239 = vmatpush1.msra.mxu0 0.0
      %2240 = vmatprep.subr.mxu0 0.0
      %2241 = vmatpush1.msra.mxu0 0.0
      %2242 = vmatprep.subr.mxu0 0.0
      %2243 = vmatpush1.msra.mxu0 0.0
      %2244 = vmatprep.subr.mxu0 0.0
      %2245 = vmatpush1.msra.mxu0 0.0
      %2246 = vmatprep.subr.mxu0 0.0
      %2247 = vmatpush1.msra.mxu0 0.0
      %2248 = vmatprep.subr.mxu0 0.0
      %2249 = vmatpush1.msra.mxu0 0.0
      %2250 = vmatprep.subr.mxu0 0.0
      %2251 = vmatpush1.msra.mxu0 0.0
      %2252 = vmatprep.subr.mxu0 0.0
      %2253 = vmatpush1.msra.mxu0 0.0
      %2254 = vmatprep.subr.mxu0 0.0
      %2255 = vmatpush1.msra.mxu0 0.0
      %2256 = vmatprep.subr.mxu0 0.0
      %2257 = vmatpush1.msra.mxu0 0.0
      %2258 = vmatprep.subr.mxu0 0.0
      %2259 = vmatpush1.msra.mxu0 0.0
      %2260 = vmatprep.subr.mxu0 0.0
      %2261 = vmatpush1.msra.mxu0 0.0
      %2262 = vmatprep.subr.mxu0 0.0
      %2263 = vmatpush1.msra.mxu0 0.0
      %2264 = vmatprep.subr.mxu0 0.0
      %2265 = vmatpush1.msra.mxu0 0.0
      %2266 = vmatprep.subr.mxu0 0.0
      %2267 = vmatpush1.msra.mxu0 0.0
      %2268 = vmatprep.subr.mxu0 0.0
      %2269 = vmatpush1.msra.mxu0 0.0
      %2270 = vmatprep.subr.mxu0 0.0
      %2271 = vmatpush1.msra.mxu0 0.0
      %2272 = vmatprep.subr.mxu0 0.0
      %2273 = vmatpush1.msra.mxu0 0.0
      %2274 = vmatprep.subr.mxu0 0.0
      %2275 = vmatpush1.msra.mxu0 0.0
      %2276 = vmatprep.subr.mxu0 0.0
      %2277 = vmatpush1.msra.mxu0 0.0
      %2278 = vmatprep.subr.mxu0 0.0
      %2279 = vmatpush1.msra.mxu0 0.0
      %2280 = vmatprep.subr.mxu0 0.0
      %2281 = vmatpush1.msra.mxu0 0.0
      %2282 = vmatprep.subr.mxu0 0.0
      %2283 = vmatpush1.msra.mxu0 0.0
      %2284 = vmatprep.subr.mxu0 0.0
      %2285 = vmatpush1.msra.mxu0 0.0
      %2286 = vmatprep.subr.mxu0 0.0
      %2287 = vmatpush1.msra.mxu0 0.0
      %2288 = vmatprep.mubr.f32.mxu0 0.0
      %2289 = vmatmul.mubr.f32.gmra.mrb[0].mxu0 %v2195
      %v2290 = vpop.f32.mrb[0].mxu0
      %v2291 = vadd.f32 0.0, %v2290
      %v2292 = vpop.f32.mrb[0].mxu0
      %2293 = vmatprep.mubr.f32.mxu0 0.0
      %2294 = vmatmul.mubr.f32.gmra.mrb[0].mxu0 %v2198
      %v2295 = vpop.f32.mrb[0].mxu0
      %v2296 = vadd.f32 0.0, %v2295
      %v2297 = vpop.f32.mrb[0].mxu0
      %2298 = vmatprep.mubr.f32.mxu0 0.0
      %2299 = vmatmul.mubr.f32.gmra.mrb[0].mxu0 %v2201
      %v2300 = vpop.f32.mrb[0].mxu0
      %v2301 = vadd.f32 0.0, %v2300
      %v2302 = vpop.f32.mrb[0].mxu0
      %2303 = vmatprep.mubr.f32.mxu0 0.0
      %2304 = vmatmul.mubr.f32.gmra.mrb[0].mxu0 %v2204
      %v2305 = vpop.f32.mrb[0].mxu0
      %v2306 = vadd.f32 0.0, %v2305
      %v2307 = vpop.f32.mrb[0].mxu0
      %2308 = vmatprep.mubr.f32.mxu0 0.0
      %2309 = vmatmul.mubr.f32.gmra.mrb[0].mxu0 %v2207
      %v2310 = vpop.f32.mrb[0].mxu0
      %v2311 = vadd.f32 0.0, %v2310
      %v2312 = vpop.f32.mrb[0].mxu0
      %2313 = vmatprep.mubr.f32.mxu0 0.0
      %2314 = vmatmul.mubr.f32.gmra.mrb[0].mxu0 %v2210
      %v2315 = vpop.f32.mrb[0].mxu0
      %v2316 = vadd.f32 0.0, %v2315
      %v2317 = vpop.f32.mrb[0].mxu0
      %2318 = vmatprep.mubr.f32.mxu0 0.0
      %2319 = vmatmul.mubr.f32.gmra.mrb[0].mxu0 %v2213
      %v2320 = vpop.f32.mrb[0].mxu0
      %v2321 = vadd.f32 0.0, %v2320
      %v2322 = vpop.f32.mrb[0].mxu0
      %2323 = vmatprep.mubr.f32.mxu0 0.0
      %2324 = vmatmul.mubr.f32.gmra.mrb[0].mxu0 %v2216
      %v2325 = vpop.f32.mrb[0].mxu0
      %v2326 = vadd.f32 0.0, %v2325
      %v2327 = vpop.f32.mrb[0].mxu0
      %2328 = vmatprep.mubr.f32.mxu0 0.0
      %2329 = vmatmul.mubr.f32.gmra.mrb[0].mxu0 %v2219
      %v2330 = vpop.f32.mrb[0].mxu0
      %v2331 = vadd.f32 0.0, %v2330
      %v2332 = vpop.f32.mrb[0].mxu0
      %2333 = vmatprep.mubr.f32.mxu0 0.0
      %2334 = vmatmul.mubr.f32.gmra.mrb[0].mxu0 %v2222
      %v2335 = vpop.f32.mrb[0].mxu0
      %v2336 = vadd.f32 0.0, %v2335
      %v2337 = vpop.f32.mrb[0].mxu0
      %2338 = vdwg.mxu0
      %v2339 = vadd.f32 %v2171, %v2291
      %v2340 = vadd.f32 %v2172, %v2296
      %v2341 = vadd.f32 %v2173, %v2301
      %v2342 = vadd.f32 %v2174, %v2306
      %v2343 = vadd.f32 %v2175, %v2311
      %v2344 = vadd.f32 %v2176, %v2316
      %v2345 = vadd.f32 %v2177, %v2321
      %v2346 = vadd.f32 %v2178, %v2326
      %v2347 = vadd.f32 %v2179, %v2331
      %v2348 = vadd.f32 %v2180, %v2336
      %v2349 = vld [vmem:[#allocation2 + $0xb] sm:$0xff]
      %v2350 = vld [vmem:[#allocation2 + $0x13] sm:$0xff]
      %v2351 = vld [vmem:[#allocation2 + $0x1b] sm:$0xff]
      %v2352 = vld [vmem:[#allocation2 + $0x23] sm:$0xff]
      %v2353 = vld [vmem:[#allocation2 + $0x2b] sm:$0xff]
      %v2354 = vld [vmem:[#allocation2 + $0x33] sm:$0xff]
      %v2355 = vld [vmem:[#allocation2 + $0x3b] sm:$0xff]
      %v2356 = vld [vmem:[#allocation2 + $0x43] sm:$0xff]
      %v2357 = vld [vmem:[#allocation2 + $0x4b] sm:$0xff]
      %v2358 = vld [vmem:[#allocation2 + $0x53] sm:$0xff]
      %s2359 = scalar_lea.vmem %s3, 40
      %v2360 = vld [vmem:[%s2359] sm:$0xff]
      %v2362 = vsel %vm497, %v2349, 0
      %v2365 = vsel %vm497, %v2350, 0
      %v2368 = vsel %vm497, %v2351, 0
      %v2371 = vsel %vm497, %v2352, 0
      %v2374 = vsel %vm497, %v2353, 0
      %v2377 = vsel %vm497, %v2354, 0
      %v2380 = vsel %vm497, %v2355, 0
      %v2383 = vsel %vm497, %v2356, 0
      %v2386 = vsel %vm497, %v2357, 0
      %v2389 = vsel %vm497, %v2358, 0
      %2391 = vmatprep.subr.mxu0 0.0
      %2392 = vmatpush1.msra.mxu0 %v2360
      %2393 = vmatprep.subr.mxu0 0.0
      %2394 = vmatpush1.msra.mxu0 0.0
      %2395 = vmatprep.subr.mxu0 0.0
      %2396 = vmatpush1.msra.mxu0 0.0
      %2397 = vmatprep.subr.mxu0 0.0
      %2398 = vmatpush1.msra.mxu0 0.0
      %2399 = vmatprep.subr.mxu0 0.0
      %2400 = vmatpush1.msra.mxu0 0.0
      %2401 = vmatprep.subr.mxu0 0.0
      %2402 = vmatpush1.msra.mxu0 0.0
      %2403 = vmatprep.subr.mxu0 0.0
      %2404 = vmatpush1.msra.mxu0 0.0
      %2405 = vmatprep.subr.mxu0 0.0
      %2406 = vmatpush1.msra.mxu0 0.0
      %2407 = vmatprep.subr.mxu0 0.0
      %2408 = vmatpush1.msra.mxu0 0.0
      %2409 = vmatprep.subr.mxu0 0.0
      %2410 = vmatpush1.msra.mxu0 0.0
      %2411 = vmatprep.subr.mxu0 0.0
      %2412 = vmatpush1.msra.mxu0 0.0
      %2413 = vmatprep.subr.mxu0 0.0
      %2414 = vmatpush1.msra.mxu0 0.0
      %2415 = vmatprep.subr.mxu0 0.0
      %2416 = vmatpush1.msra.mxu0 0.0
      %2417 = vmatprep.subr.mxu0 0.0
      %2418 = vmatpush1.msra.mxu0 0.0
      %2419 = vmatprep.subr.mxu0 0.0
      %2420 = vmatpush1.msra.mxu0 0.0
      %2421 = vmatprep.subr.mxu0 0.0
      %2422 = vmatpush1.msra.mxu0 0.0
      %2423 = vmatprep.subr.mxu0 0.0
      %2424 = vmatpush1.msra.mxu0 0.0
      %2425 = vmatprep.subr.mxu0 0.0
      %2426 = vmatpush1.msra.mxu0 0.0
      %2427 = vmatprep.subr.mxu0 0.0
      %2428 = vmatpush1.msra.mxu0 0.0
      %2429 = vmatprep.subr.mxu0 0.0
      %2430 = vmatpush1.msra.mxu0 0.0
      %2431 = vmatprep.subr.mxu0 0.0
      %2432 = vmatpush1.msra.mxu0 0.0
      %2433 = vmatprep.subr.mxu0 0.0
      %2434 = vmatpush1.msra.mxu0 0.0
      %2435 = vmatprep.subr.mxu0 0.0
      %2436 = vmatpush1.msra.mxu0 0.0
      %2437 = vmatprep.subr.mxu0 0.0
      %2438 = vmatpush1.msra.mxu0 0.0
      %2439 = vmatprep.subr.mxu0 0.0
      %2440 = vmatpush1.msra.mxu0 0.0
      %2441 = vmatprep.subr.mxu0 0.0
      %2442 = vmatpush1.msra.mxu0 0.0
      %2443 = vmatprep.subr.mxu0 0.0
      %2444 = vmatpush1.msra.mxu0 0.0
      %2445 = vmatprep.subr.mxu0 0.0
      %2446 = vmatpush1.msra.mxu0 0.0
      %2447 = vmatprep.subr.mxu0 0.0
      %2448 = vmatpush1.msra.mxu0 0.0
      %2449 = vmatprep.subr.mxu0 0.0
      %2450 = vmatpush1.msra.mxu0 0.0
      %2451 = vmatprep.subr.mxu0 0.0
      %2452 = vmatpush1.msra.mxu0 0.0
      %2453 = vmatprep.subr.mxu0 0.0
      %2454 = vmatpush1.msra.mxu0 0.0
      %2455 = vmatprep.mubr.f32.mxu0 0.0
      %2456 = vmatmul.mubr.f32.gmra.mrb[0].mxu0 %v2362
      %v2457 = vpop.f32.mrb[0].mxu0
      %v2458 = vadd.f32 0.0, %v2457
      %v2459 = vpop.f32.mrb[0].mxu0
      %2460 = vmatprep.mubr.f32.mxu0 0.0
      %2461 = vmatmul.mubr.f32.gmra.mrb[0].mxu0 %v2365
      %v2462 = vpop.f32.mrb[0].mxu0
      %v2463 = vadd.f32 0.0, %v2462
      %v2464 = vpop.f32.mrb[0].mxu0
      %2465 = vmatprep.mubr.f32.mxu0 0.0
      %2466 = vmatmul.mubr.f32.gmra.mrb[0].mxu0 %v2368
      %v2467 = vpop.f32.mrb[0].mxu0
      %v2468 = vadd.f32 0.0, %v2467
      %v2469 = vpop.f32.mrb[0].mxu0
      %2470 = vmatprep.mubr.f32.mxu0 0.0
      %2471 = vmatmul.mubr.f32.gmra.mrb[0].mxu0 %v2371
      %v2472 = vpop.f32.mrb[0].mxu0
      %v2473 = vadd.f32 0.0, %v2472
      %v2474 = vpop.f32.mrb[0].mxu0
      %2475 = vmatprep.mubr.f32.mxu0 0.0
      %2476 = vmatmul.mubr.f32.gmra.mrb[0].mxu0 %v2374
      %v2477 = vpop.f32.mrb[0].mxu0
      %v2478 = vadd.f32 0.0, %v2477
      %v2479 = vpop.f32.mrb[0].mxu0
      %2480 = vmatprep.mubr.f32.mxu0 0.0
      %2481 = vmatmul.mubr.f32.gmra.mrb[0].mxu0 %v2377
      %v2482 = vpop.f32.mrb[0].mxu0
      %v2483 = vadd.f32 0.0, %v2482
      %v2484 = vpop.f32.mrb[0].mxu0
      %2485 = vmatprep.mubr.f32.mxu0 0.0
      %2486 = vmatmul.mubr.f32.gmra.mrb[0].mxu0 %v2380
      %v2487 = vpop.f32.mrb[0].mxu0
      %v2488 = vadd.f32 0.0, %v2487
      %v2489 = vpop.f32.mrb[0].mxu0
      %2490 = vmatprep.mubr.f32.mxu0 0.0
      %2491 = vmatmul.mubr.f32.gmra.mrb[0].mxu0 %v2383
      %v2492 = vpop.f32.mrb[0].mxu0
      %v2493 = vadd.f32 0.0, %v2492
      %v2494 = vpop.f32.mrb[0].mxu0
      %2495 = vmatprep.mubr.f32.mxu0 0.0
      %2496 = vmatmul.mubr.f32.gmra.mrb[0].mxu0 %v2386
      %v2497 = vpop.f32.mrb[0].mxu0
      %v2498 = vadd.f32 0.0, %v2497
      %v2499 = vpop.f32.mrb[0].mxu0
      %2500 = vmatprep.mubr.f32.mxu0 0.0
      %2501 = vmatmul.mubr.f32.gmra.mrb[0].mxu0 %v2389
      %v2502 = vpop.f32.mrb[0].mxu0
      %v2503 = vadd.f32 0.0, %v2502
      %v2504 = vpop.f32.mrb[0].mxu0
      %2505 = vdwg.mxu0
      %v2506 = vadd.f32 %v2339, %v2458
      %v2507 = vadd.f32 %v2340, %v2463
      %v2508 = vadd.f32 %v2341, %v2468
      %v2509 = vadd.f32 %v2342, %v2473
      %v2510 = vadd.f32 %v2343, %v2478
      %v2511 = vadd.f32 %v2344, %v2483
      %v2512 = vadd.f32 %v2345, %v2488
      %v2513 = vadd.f32 %v2346, %v2493
      %v2514 = vadd.f32 %v2347, %v2498
      %v2515 = vadd.f32 %v2348, %v2503
      %v2516 = vld [vmem:[%s293 + $0xb] sm:$0xff]
      %v2517 = vld [vmem:[%s293 + $0x13] sm:$0xff]
      %v2518 = vld [vmem:[%s293 + $0x1b] sm:$0xff]
      %v2519 = vld [vmem:[%s293 + $0x23] sm:$0xff]
      %v2520 = vld [vmem:[%s293 + $0x2b] sm:$0xff]
      %v2521 = vld [vmem:[%s293 + $0x33] sm:$0xff]
      %v2522 = vld [vmem:[%s293 + $0x3b] sm:$0xff]
      %v2523 = vld [vmem:[%s293 + $0x43] sm:$0xff]
      %v2524 = vld [vmem:[%s293 + $0x4b] sm:$0xff]
      %v2525 = vld [vmem:[%s293 + $0x53] sm:$0xff]
      %s2526 = scalar_lea.vmem %s4, 40
      %v2527 = vld [vmem:[%s2526] sm:$0xff]
      %v2529 = vsel %vm497, %v2516, 0
      %v2532 = vsel %vm497, %v2517, 0
      %v2535 = vsel %vm497, %v2518, 0
      %v2538 = vsel %vm497, %v2519, 0
      %v2541 = vsel %vm497, %v2520, 0
      %v2544 = vsel %vm497, %v2521, 0
      %v2547 = vsel %vm497, %v2522, 0
      %v2550 = vsel %vm497, %v2523, 0
      %v2553 = vsel %vm497, %v2524, 0
      %v2556 = vsel %vm497, %v2525, 0
      %2558 = vmatprep.subr.mxu0 0.0
      %2559 = vmatpush1.msra.mxu0 %v2527
      %2560 = vmatprep.subr.mxu0 0.0
      %2561 = vmatpush1.msra.mxu0 0.0
      %2562 = vmatprep.subr.mxu0 0.0
      %2563 = vmatpush1.msra.mxu0 0.0
      %2564 = vmatprep.subr.mxu0 0.0
      %2565 = vmatpush1.msra.mxu0 0.0
      %2566 = vmatprep.subr.mxu0 0.0
      %2567 = vmatpush1.msra.mxu0 0.0
      %2568 = vmatprep.subr.mxu0 0.0
      %2569 = vmatpush1.msra.mxu0 0.0
      %2570 = vmatprep.subr.mxu0 0.0
      %2571 = vmatpush1.msra.mxu0 0.0
      %2572 = vmatprep.subr.mxu0 0.0
      %2573 = vmatpush1.msra.mxu0 0.0
      %2574 = vmatprep.subr.mxu0 0.0
      %2575 = vmatpush1.msra.mxu0 0.0
      %2576 = vmatprep.subr.mxu0 0.0
      %2577 = vmatpush1.msra.mxu0 0.0
      %2578 = vmatprep.subr.mxu0 0.0
      %2579 = vmatpush1.msra.mxu0 0.0
      %2580 = vmatprep.subr.mxu0 0.0
      %2581 = vmatpush1.msra.mxu0 0.0
      %2582 = vmatprep.subr.mxu0 0.0
      %2583 = vmatpush1.msra.mxu0 0.0
      %2584 = vmatprep.subr.mxu0 0.0
      %2585 = vmatpush1.msra.mxu0 0.0
      %2586 = vmatprep.subr.mxu0 0.0
      %2587 = vmatpush1.msra.mxu0 0.0
      %2588 = vmatprep.subr.mxu0 0.0
      %2589 = vmatpush1.msra.mxu0 0.0
      %2590 = vmatprep.subr.mxu0 0.0
      %2591 = vmatpush1.msra.mxu0 0.0
      %2592 = vmatprep.subr.mxu0 0.0
      %2593 = vmatpush1.msra.mxu0 0.0
      %2594 = vmatprep.subr.mxu0 0.0
      %2595 = vmatpush1.msra.mxu0 0.0
      %2596 = vmatprep.subr.mxu0 0.0
      %2597 = vmatpush1.msra.mxu0 0.0
      %2598 = vmatprep.subr.mxu0 0.0
      %2599 = vmatpush1.msra.mxu0 0.0
      %2600 = vmatprep.subr.mxu0 0.0
      %2601 = vmatpush1.msra.mxu0 0.0
      %2602 = vmatprep.subr.mxu0 0.0
      %2603 = vmatpush1.msra.mxu0 0.0
      %2604 = vmatprep.subr.mxu0 0.0
      %2605 = vmatpush1.msra.mxu0 0.0
      %2606 = vmatprep.subr.mxu0 0.0
      %2607 = vmatpush1.msra.mxu0 0.0
      %2608 = vmatprep.subr.mxu0 0.0
      %2609 = vmatpush1.msra.mxu0 0.0
      %2610 = vmatprep.subr.mxu0 0.0
      %2611 = vmatpush1.msra.mxu0 0.0
      %2612 = vmatprep.subr.mxu0 0.0
      %2613 = vmatpush1.msra.mxu0 0.0
      %2614 = vmatprep.subr.mxu0 0.0
      %2615 = vmatpush1.msra.mxu0 0.0
      %2616 = vmatprep.subr.mxu0 0.0
      %2617 = vmatpush1.msra.mxu0 0.0
      %2618 = vmatprep.subr.mxu0 0.0
      %2619 = vmatpush1.msra.mxu0 0.0
      %2620 = vmatprep.subr.mxu0 0.0
      %2621 = vmatpush1.msra.mxu0 0.0
      %2622 = vmatprep.mubr.f32.mxu0 0.0
      %2623 = vmatmul.mubr.f32.gmra.mrb[0].mxu0 %v2529
      %v2624 = vpop.f32.mrb[0].mxu0
      %v2625 = vadd.f32 0.0, %v2624
      %v2626 = vpop.f32.mrb[0].mxu0
      %2627 = vmatprep.mubr.f32.mxu0 0.0
      %2628 = vmatmul.mubr.f32.gmra.mrb[0].mxu0 %v2532
      %v2629 = vpop.f32.mrb[0].mxu0
      %v2630 = vadd.f32 0.0, %v2629
      %v2631 = vpop.f32.mrb[0].mxu0
      %2632 = vmatprep.mubr.f32.mxu0 0.0
      %2633 = vmatmul.mubr.f32.gmra.mrb[0].mxu0 %v2535
      %v2634 = vpop.f32.mrb[0].mxu0
      %v2635 = vadd.f32 0.0, %v2634
      %v2636 = vpop.f32.mrb[0].mxu0
      %2637 = vmatprep.mubr.f32.mxu0 0.0
      %2638 = vmatmul.mubr.f32.gmra.mrb[0].mxu0 %v2538
      %v2639 = vpop.f32.mrb[0].mxu0
      %v2640 = vadd.f32 0.0, %v2639
      %v2641 = vpop.f32.mrb[0].mxu0
      %2642 = vmatprep.mubr.f32.mxu0 0.0
      %2643 = vmatmul.mubr.f32.gmra.mrb[0].mxu0 %v2541
      %v2644 = vpop.f32.mrb[0].mxu0
      %v2645 = vadd.f32 0.0, %v2644
      %v2646 = vpop.f32.mrb[0].mxu0
      %2647 = vmatprep.mubr.f32.mxu0 0.0
      %2648 = vmatmul.mubr.f32.gmra.mrb[0].mxu0 %v2544
      %v2649 = vpop.f32.mrb[0].mxu0
      %v2650 = vadd.f32 0.0, %v2649
      %v2651 = vpop.f32.mrb[0].mxu0
      %2652 = vmatprep.mubr.f32.mxu0 0.0
      %2653 = vmatmul.mubr.f32.gmra.mrb[0].mxu0 %v2547
      %v2654 = vpop.f32.mrb[0].mxu0
      %v2655 = vadd.f32 0.0, %v2654
      %v2656 = vpop.f32.mrb[0].mxu0
      %2657 = vmatprep.mubr.f32.mxu0 0.0
      %2658 = vmatmul.mubr.f32.gmra.mrb[0].mxu0 %v2550
      %v2659 = vpop.f32.mrb[0].mxu0
      %v2660 = vadd.f32 0.0, %v2659
      %v2661 = vpop.f32.mrb[0].mxu0
      %2662 = vmatprep.mubr.f32.mxu0 0.0
      %2663 = vmatmul.mubr.f32.gmra.mrb[0].mxu0 %v2553
      %v2664 = vpop.f32.mrb[0].mxu0
      %v2665 = vadd.f32 0.0, %v2664
      %v2666 = vpop.f32.mrb[0].mxu0
      %2667 = vmatprep.mubr.f32.mxu0 0.0
      %2668 = vmatmul.mubr.f32.gmra.mrb[0].mxu0 %v2556
      %v2669 = vpop.f32.mrb[0].mxu0
      %v2670 = vadd.f32 0.0, %v2669
      %v2671 = vpop.f32.mrb[0].mxu0
      %2672 = vdwg.mxu0
      %v2673 = vadd.f32 %v2506, %v2625
      %v2674 = vadd.f32 %v2507, %v2630
      %v2675 = vadd.f32 %v2508, %v2635
      %v2676 = vadd.f32 %v2509, %v2640
      %v2677 = vadd.f32 %v2510, %v2645
      %v2678 = vadd.f32 %v2511, %v2650
      %v2679 = vadd.f32 %v2512, %v2655
      %v2680 = vadd.f32 %v2513, %v2660
      %v2681 = vadd.f32 %v2514, %v2665
      %v2682 = vadd.f32 %v2515, %v2670
      %v2683 = vld [vmem:[%s569 + $0xb] sm:$0xff]
      %v2684 = vld [vmem:[%s569 + $0x13] sm:$0xff]
      %v2685 = vld [vmem:[%s569 + $0x1b] sm:$0xff]
      %v2686 = vld [vmem:[%s569 + $0x23] sm:$0xff]
      %v2687 = vld [vmem:[%s569 + $0x2b] sm:$0xff]
      %v2688 = vld [vmem:[%s569 + $0x33] sm:$0xff]
      %v2689 = vld [vmem:[%s569 + $0x3b] sm:$0xff]
      %v2690 = vld [vmem:[%s569 + $0x43] sm:$0xff]
      %v2691 = vld [vmem:[%s569 + $0x4b] sm:$0xff]
      %v2692 = vld [vmem:[%s569 + $0x53] sm:$0xff]
      %s2693 = scalar_lea.vmem %s3, 48
      %v2694 = vld [vmem:[%s2693] sm:$0xff]
      %v2696 = vsel %vm497, %v2683, 0
      %v2699 = vsel %vm497, %v2684, 0
      %v2702 = vsel %vm497, %v2685, 0
      %v2705 = vsel %vm497, %v2686, 0
      %v2708 = vsel %vm497, %v2687, 0
      %v2711 = vsel %vm497, %v2688, 0
      %v2714 = vsel %vm497, %v2689, 0
      %v2717 = vsel %vm497, %v2690, 0
      %v2720 = vsel %vm497, %v2691, 0
      %v2723 = vsel %vm497, %v2692, 0
      %2725 = vmatprep.subr.mxu0 0.0
      %2726 = vmatpush1.msra.mxu0 %v2694
      %2727 = vmatprep.subr.mxu0 0.0
      %2728 = vmatpush1.msra.mxu0 0.0
      %2729 = vmatprep.subr.mxu0 0.0
      %2730 = vmatpush1.msra.mxu0 0.0
      %2731 = vmatprep.subr.mxu0 0.0
      %2732 = vmatpush1.msra.mxu0 0.0
      %2733 = vmatprep.subr.mxu0 0.0
      %2734 = vmatpush1.msra.mxu0 0.0
      %2735 = vmatprep.subr.mxu0 0.0
      %2736 = vmatpush1.msra.mxu0 0.0
      %2737 = vmatprep.subr.mxu0 0.0
      %2738 = vmatpush1.msra.mxu0 0.0
      %2739 = vmatprep.subr.mxu0 0.0
      %2740 = vmatpush1.msra.mxu0 0.0
      %2741 = vmatprep.subr.mxu0 0.0
      %2742 = vmatpush1.msra.mxu0 0.0
      %2743 = vmatprep.subr.mxu0 0.0
      %2744 = vmatpush1.msra.mxu0 0.0
      %2745 = vmatprep.subr.mxu0 0.0
      %2746 = vmatpush1.msra.mxu0 0.0
      %2747 = vmatprep.subr.mxu0 0.0
      %2748 = vmatpush1.msra.mxu0 0.0
      %2749 = vmatprep.subr.mxu0 0.0
      %2750 = vmatpush1.msra.mxu0 0.0
      %2751 = vmatprep.subr.mxu0 0.0
      %2752 = vmatpush1.msra.mxu0 0.0
      %2753 = vmatprep.subr.mxu0 0.0
      %2754 = vmatpush1.msra.mxu0 0.0
      %2755 = vmatprep.subr.mxu0 0.0
      %2756 = vmatpush1.msra.mxu0 0.0
      %2757 = vmatprep.subr.mxu0 0.0
      %2758 = vmatpush1.msra.mxu0 0.0
      %2759 = vmatprep.subr.mxu0 0.0
      %2760 = vmatpush1.msra.mxu0 0.0
      %2761 = vmatprep.subr.mxu0 0.0
      %2762 = vmatpush1.msra.mxu0 0.0
      %2763 = vmatprep.subr.mxu0 0.0
      %2764 = vmatpush1.msra.mxu0 0.0
      %2765 = vmatprep.subr.mxu0 0.0
      %2766 = vmatpush1.msra.mxu0 0.0
      %2767 = vmatprep.subr.mxu0 0.0
      %2768 = vmatpush1.msra.mxu0 0.0
      %2769 = vmatprep.subr.mxu0 0.0
      %2770 = vmatpush1.msra.mxu0 0.0
      %2771 = vmatprep.subr.mxu0 0.0
      %2772 = vmatpush1.msra.mxu0 0.0
      %2773 = vmatprep.subr.mxu0 0.0
      %2774 = vmatpush1.msra.mxu0 0.0
      %2775 = vmatprep.subr.mxu0 0.0
      %2776 = vmatpush1.msra.mxu0 0.0
      %2777 = vmatprep.subr.mxu0 0.0
      %2778 = vmatpush1.msra.mxu0 0.0
      %2779 = vmatprep.subr.mxu0 0.0
      %2780 = vmatpush1.msra.mxu0 0.0
      %2781 = vmatprep.subr.mxu0 0.0
      %2782 = vmatpush1.msra.mxu0 0.0
      %2783 = vmatprep.subr.mxu0 0.0
      %2784 = vmatpush1.msra.mxu0 0.0
      %2785 = vmatprep.subr.mxu0 0.0
      %2786 = vmatpush1.msra.mxu0 0.0
      %2787 = vmatprep.subr.mxu0 0.0
      %2788 = vmatpush1.msra.mxu0 0.0
      %2789 = vmatprep.mubr.f32.mxu0 0.0
      %2790 = vmatmul.mubr.f32.gmra.mrb[0].mxu0 %v2696
      %v2791 = vpop.f32.mrb[0].mxu0
      %v2792 = vadd.f32 0.0, %v2791
      %v2793 = vpop.f32.mrb[0].mxu0
      %2794 = vmatprep.mubr.f32.mxu0 0.0
      %2795 = vmatmul.mubr.f32.gmra.mrb[0].mxu0 %v2699
      %v2796 = vpop.f32.mrb[0].mxu0
      %v2797 = vadd.f32 0.0, %v2796
      %v2798 = vpop.f32.mrb[0].mxu0
      %2799 = vmatprep.mubr.f32.mxu0 0.0
      %2800 = vmatmul.mubr.f32.gmra.mrb[0].mxu0 %v2702
      %v2801 = vpop.f32.mrb[0].mxu0
      %v2802 = vadd.f32 0.0, %v2801
      %v2803 = vpop.f32.mrb[0].mxu0
      %2804 = vmatprep.mubr.f32.mxu0 0.0
      %2805 = vmatmul.mubr.f32.gmra.mrb[0].mxu0 %v2705
      %v2806 = vpop.f32.mrb[0].mxu0
      %v2807 = vadd.f32 0.0, %v2806
      %v2808 = vpop.f32.mrb[0].mxu0
      %2809 = vmatprep.mubr.f32.mxu0 0.0
      %2810 = vmatmul.mubr.f32.gmra.mrb[0].mxu0 %v2708
      %v2811 = vpop.f32.mrb[0].mxu0
      %v2812 = vadd.f32 0.0, %v2811
      %v2813 = vpop.f32.mrb[0].mxu0
      %2814 = vmatprep.mubr.f32.mxu0 0.0
      %2815 = vmatmul.mubr.f32.gmra.mrb[0].mxu0 %v2711
      %v2816 = vpop.f32.mrb[0].mxu0
      %v2817 = vadd.f32 0.0, %v2816
      %v2818 = vpop.f32.mrb[0].mxu0
      %2819 = vmatprep.mubr.f32.mxu0 0.0
      %2820 = vmatmul.mubr.f32.gmra.mrb[0].mxu0 %v2714
      %v2821 = vpop.f32.mrb[0].mxu0
      %v2822 = vadd.f32 0.0, %v2821
      %v2823 = vpop.f32.mrb[0].mxu0
      %2824 = vmatprep.mubr.f32.mxu0 0.0
      %2825 = vmatmul.mubr.f32.gmra.mrb[0].mxu0 %v2717
      %v2826 = vpop.f32.mrb[0].mxu0
      %v2827 = vadd.f32 0.0, %v2826
      %v2828 = vpop.f32.mrb[0].mxu0
      %2829 = vmatprep.mubr.f32.mxu0 0.0
      %2830 = vmatmul.mubr.f32.gmra.mrb[0].mxu0 %v2720
      %v2831 = vpop.f32.mrb[0].mxu0
      %v2832 = vadd.f32 0.0, %v2831
      %v2833 = vpop.f32.mrb[0].mxu0
      %2834 = vmatprep.mubr.f32.mxu0 0.0
      %2835 = vmatmul.mubr.f32.gmra.mrb[0].mxu0 %v2723
      %v2836 = vpop.f32.mrb[0].mxu0
      %v2837 = vadd.f32 0.0, %v2836
      %v2838 = vpop.f32.mrb[0].mxu0
      %2839 = vdwg.mxu0
      %v2840 = vadd.f32 %v2673, %v2792
      %v2841 = vadd.f32 %v2674, %v2797
      %v2842 = vadd.f32 %v2675, %v2802
      %v2843 = vadd.f32 %v2676, %v2807
      %v2844 = vadd.f32 %v2677, %v2812
      %v2845 = vadd.f32 %v2678, %v2817
      %v2846 = vadd.f32 %v2679, %v2822
      %v2847 = vadd.f32 %v2680, %v2827
      %v2848 = vadd.f32 %v2681, %v2832
      %v2849 = vadd.f32 %v2682, %v2837
      %v2850 = vld [vmem:[%s2181 + $0xb] sm:$0xff]
      %v2851 = vld [vmem:[%s2181 + $0x13] sm:$0xff]
      %v2852 = vld [vmem:[%s2181 + $0x1b] sm:$0xff]
      %v2853 = vld [vmem:[%s2181 + $0x23] sm:$0xff]
      %v2854 = vld [vmem:[%s2181 + $0x2b] sm:$0xff]
      %v2855 = vld [vmem:[%s2181 + $0x33] sm:$0xff]
      %v2856 = vld [vmem:[%s2181 + $0x3b] sm:$0xff]
      %v2857 = vld [vmem:[%s2181 + $0x43] sm:$0xff]
      %v2858 = vld [vmem:[%s2181 + $0x4b] sm:$0xff]
      %v2859 = vld [vmem:[%s2181 + $0x53] sm:$0xff]
      %s2860 = scalar_lea.vmem %s4, 48
      %v2861 = vld [vmem:[%s2860] sm:$0xff]
      %v2863 = vsel %vm497, %v2850, 0
      %v2866 = vsel %vm497, %v2851, 0
      %v2869 = vsel %vm497, %v2852, 0
      %v2872 = vsel %vm497, %v2853, 0
      %v2875 = vsel %vm497, %v2854, 0
      %v2878 = vsel %vm497, %v2855, 0
      %v2881 = vsel %vm497, %v2856, 0
      %v2884 = vsel %vm497, %v2857, 0
      %v2887 = vsel %vm497, %v2858, 0
      %v2890 = vsel %vm497, %v2859, 0
      %2892 = vmatprep.subr.mxu0 0.0
      %2893 = vmatpush1.msra.mxu0 %v2861
      %2894 = vmatprep.subr.mxu0 0.0
      %2895 = vmatpush1.msra.mxu0 0.0
      %2896 = vmatprep.subr.mxu0 0.0
      %2897 = vmatpush1.msra.mxu0 0.0
      %2898 = vmatprep.subr.mxu0 0.0
      %2899 = vmatpush1.msra.mxu0 0.0
      %2900 = vmatprep.subr.mxu0 0.0
      %2901 = vmatpush1.msra.mxu0 0.0
      %2902 = vmatprep.subr.mxu0 0.0
      %2903 = vmatpush1.msra.mxu0 0.0
      %2904 = vmatprep.subr.mxu0 0.0
      %2905 = vmatpush1.msra.mxu0 0.0
      %2906 = vmatprep.subr.mxu0 0.0
      %2907 = vmatpush1.msra.mxu0 0.0
      %2908 = vmatprep.subr.mxu0 0.0
      %2909 = vmatpush1.msra.mxu0 0.0
      %2910 = vmatprep.subr.mxu0 0.0
      %2911 = vmatpush1.msra.mxu0 0.0
      %2912 = vmatprep.subr.mxu0 0.0
      %2913 = vmatpush1.msra.mxu0 0.0
      %2914 = vmatprep.subr.mxu0 0.0
      %2915 = vmatpush1.msra.mxu0 0.0
      %2916 = vmatprep.subr.mxu0 0.0
      %2917 = vmatpush1.msra.mxu0 0.0
      %2918 = vmatprep.subr.mxu0 0.0
      %2919 = vmatpush1.msra.mxu0 0.0
      %2920 = vmatprep.subr.mxu0 0.0
      %2921 = vmatpush1.msra.mxu0 0.0
      %2922 = vmatprep.subr.mxu0 0.0
      %2923 = vmatpush1.msra.mxu0 0.0
      %2924 = vmatprep.subr.mxu0 0.0
      %2925 = vmatpush1.msra.mxu0 0.0
      %2926 = vmatprep.subr.mxu0 0.0
      %2927 = vmatpush1.msra.mxu0 0.0
      %2928 = vmatprep.subr.mxu0 0.0
      %2929 = vmatpush1.msra.mxu0 0.0
      %2930 = vmatprep.subr.mxu0 0.0
      %2931 = vmatpush1.msra.mxu0 0.0
      %2932 = vmatprep.subr.mxu0 0.0
      %2933 = vmatpush1.msra.mxu0 0.0
      %2934 = vmatprep.subr.mxu0 0.0
      %2935 = vmatpush1.msra.mxu0 0.0
      %2936 = vmatprep.subr.mxu0 0.0
      %2937 = vmatpush1.msra.mxu0 0.0
      %2938 = vmatprep.subr.mxu0 0.0
      %2939 = vmatpush1.msra.mxu0 0.0
      %2940 = vmatprep.subr.mxu0 0.0
      %2941 = vmatpush1.msra.mxu0 0.0
      %2942 = vmatprep.subr.mxu0 0.0
      %2943 = vmatpush1.msra.mxu0 0.0
      %2944 = vmatprep.subr.mxu0 0.0
      %2945 = vmatpush1.msra.mxu0 0.0
      %2946 = vmatprep.subr.mxu0 0.0
      %2947 = vmatpush1.msra.mxu0 0.0
      %2948 = vmatprep.subr.mxu0 0.0
      %2949 = vmatpush1.msra.mxu0 0.0
      %2950 = vmatprep.subr.mxu0 0.0
      %2951 = vmatpush1.msra.mxu0 0.0
      %2952 = vmatprep.subr.mxu0 0.0
      %2953 = vmatpush1.msra.mxu0 0.0
      %2954 = vmatprep.subr.mxu0 0.0
      %2955 = vmatpush1.msra.mxu0 0.0
      %2956 = vmatprep.mubr.f32.mxu0 0.0
      %2957 = vmatmul.mubr.f32.gmra.mrb[0].mxu0 %v2863
      %v2958 = vpop.f32.mrb[0].mxu0
      %v2959 = vadd.f32 0.0, %v2958
      %v2960 = vpop.f32.mrb[0].mxu0
      %2961 = vmatprep.mubr.f32.mxu0 0.0
      %2962 = vmatmul.mubr.f32.gmra.mrb[0].mxu0 %v2866
      %v2963 = vpop.f32.mrb[0].mxu0
      %v2964 = vadd.f32 0.0, %v2963
      %v2965 = vpop.f32.mrb[0].mxu0
      %2966 = vmatprep.mubr.f32.mxu0 0.0
      %2967 = vmatmul.mubr.f32.gmra.mrb[0].mxu0 %v2869
      %v2968 = vpop.f32.mrb[0].mxu0
      %v2969 = vadd.f32 0.0, %v2968
      %v2970 = vpop.f32.mrb[0].mxu0
      %2971 = vmatprep.mubr.f32.mxu0 0.0
      %2972 = vmatmul.mubr.f32.gmra.mrb[0].mxu0 %v2872
      %v2973 = vpop.f32.mrb[0].mxu0
      %v2974 = vadd.f32 0.0, %v2973
      %v2975 = vpop.f32.mrb[0].mxu0
      %2976 = vmatprep.mubr.f32.mxu0 0.0
      %2977 = vmatmul.mubr.f32.gmra.mrb[0].mxu0 %v2875
      %v2978 = vpop.f32.mrb[0].mxu0
      %v2979 = vadd.f32 0.0, %v2978
      %v2980 = vpop.f32.mrb[0].mxu0
      %2981 = vmatprep.mubr.f32.mxu0 0.0
      %2982 = vmatmul.mubr.f32.gmra.mrb[0].mxu0 %v2878
      %v2983 = vpop.f32.mrb[0].mxu0
      %v2984 = vadd.f32 0.0, %v2983
      %v2985 = vpop.f32.mrb[0].mxu0
      %2986 = vmatprep.mubr.f32.mxu0 0.0
      %2987 = vmatmul.mubr.f32.gmra.mrb[0].mxu0 %v2881
      %v2988 = vpop.f32.mrb[0].mxu0
      %v2989 = vadd.f32 0.0, %v2988
      %v2990 = vpop.f32.mrb[0].mxu0
      %2991 = vmatprep.mubr.f32.mxu0 0.0
      %2992 = vmatmul.mubr.f32.gmra.mrb[0].mxu0 %v2884
      %v2993 = vpop.f32.mrb[0].mxu0
      %v2994 = vadd.f32 0.0, %v2993
      %v2995 = vpop.f32.mrb[0].mxu0
      %2996 = vmatprep.mubr.f32.mxu0 0.0
      %2997 = vmatmul.mubr.f32.gmra.mrb[0].mxu0 %v2887
      %v2998 = vpop.f32.mrb[0].mxu0
      %v2999 = vadd.f32 0.0, %v2998
      %v3000 = vpop.f32.mrb[0].mxu0
      %3001 = vmatprep.mubr.f32.mxu0 0.0
      %3002 = vmatmul.mubr.f32.gmra.mrb[0].mxu0 %v2890
      %v3003 = vpop.f32.mrb[0].mxu0
      %v3004 = vadd.f32 0.0, %v3003
      %v3005 = vpop.f32.mrb[0].mxu0
      %3006 = vdwg.mxu0
      %v3007 = vadd.f32 %v2840, %v2959
      %v3008 = vadd.f32 %v2841, %v2964
      %v3009 = vadd.f32 %v2842, %v2969
      %v3010 = vadd.f32 %v2843, %v2974
      %v3011 = vadd.f32 %v2844, %v2979
      %v3012 = vadd.f32 %v2845, %v2984
      %v3013 = vadd.f32 %v2846, %v2989
      %v3014 = vadd.f32 %v2847, %v2994
      %v3015 = vadd.f32 %v2848, %v2999
      %v3016 = vadd.f32 %v2849, %v3004
      %v3017 = vld [vmem:[#allocation2 + $0xc] sm:$0xff]
      %v3018 = vld [vmem:[#allocation2 + $0x14] sm:$0xff]
      %v3019 = vld [vmem:[#allocation2 + $0x1c] sm:$0xff]
      %v3020 = vld [vmem:[#allocation2 + $0x24] sm:$0xff]
      %v3021 = vld [vmem:[#allocation2 + $0x2c] sm:$0xff]
      %v3022 = vld [vmem:[#allocation2 + $0x34] sm:$0xff]
      %v3023 = vld [vmem:[#allocation2 + $0x3c] sm:$0xff]
      %v3024 = vld [vmem:[#allocation2 + $0x44] sm:$0xff]
      %v3025 = vld [vmem:[#allocation2 + $0x4c] sm:$0xff]
      %v3026 = vld [vmem:[#allocation2 + $0x54] sm:$0xff]
      %s3027 = scalar_lea.vmem %s3, 56
      %v3028 = vld [vmem:[%s3027] sm:$0xff]
      %v3030 = vsel %vm497, %v3017, 0
      %v3033 = vsel %vm497, %v3018, 0
      %v3036 = vsel %vm497, %v3019, 0
      %v3039 = vsel %vm497, %v3020, 0
      %v3042 = vsel %vm497, %v3021, 0
      %v3045 = vsel %vm497, %v3022, 0
      %v3048 = vsel %vm497, %v3023, 0
      %v3051 = vsel %vm497, %v3024, 0
      %v3054 = vsel %vm497, %v3025, 0
      %v3057 = vsel %vm497, %v3026, 0
      %3059 = vmatprep.subr.mxu0 0.0
      %3060 = vmatpush1.msra.mxu0 %v3028
      %3061 = vmatprep.subr.mxu0 0.0
      %3062 = vmatpush1.msra.mxu0 0.0
      %3063 = vmatprep.subr.mxu0 0.0
      %3064 = vmatpush1.msra.mxu0 0.0
      %3065 = vmatprep.subr.mxu0 0.0
      %3066 = vmatpush1.msra.mxu0 0.0
      %3067 = vmatprep.subr.mxu0 0.0
      %3068 = vmatpush1.msra.mxu0 0.0
      %3069 = vmatprep.subr.mxu0 0.0
      %3070 = vmatpush1.msra.mxu0 0.0
      %3071 = vmatprep.subr.mxu0 0.0
      %3072 = vmatpush1.msra.mxu0 0.0
      %3073 = vmatprep.subr.mxu0 0.0
      %3074 = vmatpush1.msra.mxu0 0.0
      %3075 = vmatprep.subr.mxu0 0.0
      %3076 = vmatpush1.msra.mxu0 0.0
      %3077 = vmatprep.subr.mxu0 0.0
      %3078 = vmatpush1.msra.mxu0 0.0
      %3079 = vmatprep.subr.mxu0 0.0
      %3080 = vmatpush1.msra.mxu0 0.0
      %3081 = vmatprep.subr.mxu0 0.0
      %3082 = vmatpush1.msra.mxu0 0.0
      %3083 = vmatprep.subr.mxu0 0.0
      %3084 = vmatpush1.msra.mxu0 0.0
      %3085 = vmatprep.subr.mxu0 0.0
      %3086 = vmatpush1.msra.mxu0 0.0
      %3087 = vmatprep.subr.mxu0 0.0
      %3088 = vmatpush1.msra.mxu0 0.0
      %3089 = vmatprep.subr.mxu0 0.0
      %3090 = vmatpush1.msra.mxu0 0.0
      %3091 = vmatprep.subr.mxu0 0.0
      %3092 = vmatpush1.msra.mxu0 0.0
      %3093 = vmatprep.subr.mxu0 0.0
      %3094 = vmatpush1.msra.mxu0 0.0
      %3095 = vmatprep.subr.mxu0 0.0
      %3096 = vmatpush1.msra.mxu0 0.0
      %3097 = vmatprep.subr.mxu0 0.0
      %3098 = vmatpush1.msra.mxu0 0.0
      %3099 = vmatprep.subr.mxu0 0.0
      %3100 = vmatpush1.msra.mxu0 0.0
      %3101 = vmatprep.subr.mxu0 0.0
      %3102 = vmatpush1.msra.mxu0 0.0
      %3103 = vmatprep.subr.mxu0 0.0
      %3104 = vmatpush1.msra.mxu0 0.0
      %3105 = vmatprep.subr.mxu0 0.0
      %3106 = vmatpush1.msra.mxu0 0.0
      %3107 = vmatprep.subr.mxu0 0.0
      %3108 = vmatpush1.msra.mxu0 0.0
      %3109 = vmatprep.subr.mxu0 0.0
      %3110 = vmatpush1.msra.mxu0 0.0
      %3111 = vmatprep.subr.mxu0 0.0
      %3112 = vmatpush1.msra.mxu0 0.0
      %3113 = vmatprep.subr.mxu0 0.0
      %3114 = vmatpush1.msra.mxu0 0.0
      %3115 = vmatprep.subr.mxu0 0.0
      %3116 = vmatpush1.msra.mxu0 0.0
      %3117 = vmatprep.subr.mxu0 0.0
      %3118 = vmatpush1.msra.mxu0 0.0
      %3119 = vmatprep.subr.mxu0 0.0
      %3120 = vmatpush1.msra.mxu0 0.0
      %3121 = vmatprep.subr.mxu0 0.0
      %3122 = vmatpush1.msra.mxu0 0.0
      %3123 = vmatprep.mubr.f32.mxu0 0.0
      %3124 = vmatmul.mubr.f32.gmra.mrb[0].mxu0 %v3030
      %v3125 = vpop.f32.mrb[0].mxu0
      %v3126 = vadd.f32 0.0, %v3125
      %v3127 = vpop.f32.mrb[0].mxu0
      %3128 = vmatprep.mubr.f32.mxu0 0.0
      %3129 = vmatmul.mubr.f32.gmra.mrb[0].mxu0 %v3033
      %v3130 = vpop.f32.mrb[0].mxu0
      %v3131 = vadd.f32 0.0, %v3130
      %v3132 = vpop.f32.mrb[0].mxu0
      %3133 = vmatprep.mubr.f32.mxu0 0.0
      %3134 = vmatmul.mubr.f32.gmra.mrb[0].mxu0 %v3036
      %v3135 = vpop.f32.mrb[0].mxu0
      %v3136 = vadd.f32 0.0, %v3135
      %v3137 = vpop.f32.mrb[0].mxu0
      %3138 = vmatprep.mubr.f32.mxu0 0.0
      %3139 = vmatmul.mubr.f32.gmra.mrb[0].mxu0 %v3039
      %v3140 = vpop.f32.mrb[0].mxu0
      %v3141 = vadd.f32 0.0, %v3140
      %v3142 = vpop.f32.mrb[0].mxu0
      %3143 = vmatprep.mubr.f32.mxu0 0.0
      %3144 = vmatmul.mubr.f32.gmra.mrb[0].mxu0 %v3042
      %v3145 = vpop.f32.mrb[0].mxu0
      %v3146 = vadd.f32 0.0, %v3145
      %v3147 = vpop.f32.mrb[0].mxu0
      %3148 = vmatprep.mubr.f32.mxu0 0.0
      %3149 = vmatmul.mubr.f32.gmra.mrb[0].mxu0 %v3045
      %v3150 = vpop.f32.mrb[0].mxu0
      %v3151 = vadd.f32 0.0, %v3150
      %v3152 = vpop.f32.mrb[0].mxu0
      %3153 = vmatprep.mubr.f32.mxu0 0.0
      %3154 = vmatmul.mubr.f32.gmra.mrb[0].mxu0 %v3048
      %v3155 = vpop.f32.mrb[0].mxu0
      %v3156 = vadd.f32 0.0, %v3155
      %v3157 = vpop.f32.mrb[0].mxu0
      %3158 = vmatprep.mubr.f32.mxu0 0.0
      %3159 = vmatmul.mubr.f32.gmra.mrb[0].mxu0 %v3051
      %v3160 = vpop.f32.mrb[0].mxu0
      %v3161 = vadd.f32 0.0, %v3160
      %v3162 = vpop.f32.mrb[0].mxu0
      %3163 = vmatprep.mubr.f32.mxu0 0.0
      %3164 = vmatmul.mubr.f32.gmra.mrb[0].mxu0 %v3054
      %v3165 = vpop.f32.mrb[0].mxu0
      %v3166 = vadd.f32 0.0, %v3165
      %v3167 = vpop.f32.mrb[0].mxu0
      %3168 = vmatprep.mubr.f32.mxu0 0.0
      %3169 = vmatmul.mubr.f32.gmra.mrb[0].mxu0 %v3057
      %v3170 = vpop.f32.mrb[0].mxu0
      %v3171 = vadd.f32 0.0, %v3170
      %v3172 = vpop.f32.mrb[0].mxu0
      %3173 = vdwg.mxu0
      %v3174 = vadd.f32 %v3007, %v3126
      %v3175 = vadd.f32 %v3008, %v3131
      %v3176 = vadd.f32 %v3009, %v3136
      %v3177 = vadd.f32 %v3010, %v3141
      %v3178 = vadd.f32 %v3011, %v3146
      %v3179 = vadd.f32 %v3012, %v3151
      %v3180 = vadd.f32 %v3013, %v3156
      %v3181 = vadd.f32 %v3014, %v3161
      %v3182 = vadd.f32 %v3015, %v3166
      %v3183 = vadd.f32 %v3016, %v3171
      %v3184 = vld [vmem:[%s293 + $0xc] sm:$0xff]
      %v3185 = vld [vmem:[%s293 + $0x14] sm:$0xff]
      %v3186 = vld [vmem:[%s293 + $0x1c] sm:$0xff]
      %v3187 = vld [vmem:[%s293 + $0x24] sm:$0xff]
      %v3188 = vld [vmem:[%s293 + $0x2c] sm:$0xff]
      %v3189 = vld [vmem:[%s293 + $0x34] sm:$0xff]
      %v3190 = vld [vmem:[%s293 + $0x3c] sm:$0xff]
      %v3191 = vld [vmem:[%s293 + $0x44] sm:$0xff]
      %v3192 = vld [vmem:[%s293 + $0x4c] sm:$0xff]
      %v3193 = vld [vmem:[%s293 + $0x54] sm:$0xff]
      %s3194 = scalar_lea.vmem %s4, 56
      %v3195 = vld [vmem:[%s3194] sm:$0xff]
      %v3197 = vsel %vm497, %v3184, 0
      %v3200 = vsel %vm497, %v3185, 0
      %v3203 = vsel %vm497, %v3186, 0
      %v3206 = vsel %vm497, %v3187, 0
      %v3209 = vsel %vm497, %v3188, 0
      %v3212 = vsel %vm497, %v3189, 0
      %v3215 = vsel %vm497, %v3190, 0
      %v3218 = vsel %vm497, %v3191, 0
      %v3221 = vsel %vm497, %v3192, 0
      %v3224 = vsel %vm497, %v3193, 0
      %3226 = vmatprep.subr.mxu0 0.0
      %3227 = vmatpush1.msra.mxu0 %v3195
      %3228 = vmatprep.subr.mxu0 0.0
      %3229 = vmatpush1.msra.mxu0 0.0
      %3230 = vmatprep.subr.mxu0 0.0
      %3231 = vmatpush1.msra.mxu0 0.0
      %3232 = vmatprep.subr.mxu0 0.0
      %3233 = vmatpush1.msra.mxu0 0.0
      %3234 = vmatprep.subr.mxu0 0.0
      %3235 = vmatpush1.msra.mxu0 0.0
      %3236 = vmatprep.subr.mxu0 0.0
      %3237 = vmatpush1.msra.mxu0 0.0
      %3238 = vmatprep.subr.mxu0 0.0
      %3239 = vmatpush1.msra.mxu0 0.0
      %3240 = vmatprep.subr.mxu0 0.0
      %3241 = vmatpush1.msra.mxu0 0.0
      %3242 = vmatprep.subr.mxu0 0.0
      %3243 = vmatpush1.msra.mxu0 0.0
      %3244 = vmatprep.subr.mxu0 0.0
      %3245 = vmatpush1.msra.mxu0 0.0
      %3246 = vmatprep.subr.mxu0 0.0
      %3247 = vmatpush1.msra.mxu0 0.0
      %3248 = vmatprep.subr.mxu0 0.0
      %3249 = vmatpush1.msra.mxu0 0.0
      %3250 = vmatprep.subr.mxu0 0.0
      %3251 = vmatpush1.msra.mxu0 0.0
      %3252 = vmatprep.subr.mxu0 0.0
      %3253 = vmatpush1.msra.mxu0 0.0
      %3254 = vmatprep.subr.mxu0 0.0
      %3255 = vmatpush1.msra.mxu0 0.0
      %3256 = vmatprep.subr.mxu0 0.0
      %3257 = vmatpush1.msra.mxu0 0.0
      %3258 = vmatprep.subr.mxu0 0.0
      %3259 = vmatpush1.msra.mxu0 0.0
      %3260 = vmatprep.subr.mxu0 0.0
      %3261 = vmatpush1.msra.mxu0 0.0
      %3262 = vmatprep.subr.mxu0 0.0
      %3263 = vmatpush1.msra.mxu0 0.0
      %3264 = vmatprep.subr.mxu0 0.0
      %3265 = vmatpush1.msra.mxu0 0.0
      %3266 = vmatprep.subr.mxu0 0.0
      %3267 = vmatpush1.msra.mxu0 0.0
      %3268 = vmatprep.subr.mxu0 0.0
      %3269 = vmatpush1.msra.mxu0 0.0
      %3270 = vmatprep.subr.mxu0 0.0
      %3271 = vmatpush1.msra.mxu0 0.0
      %3272 = vmatprep.subr.mxu0 0.0
      %3273 = vmatpush1.msra.mxu0 0.0
      %3274 = vmatprep.subr.mxu0 0.0
      %3275 = vmatpush1.msra.mxu0 0.0
      %3276 = vmatprep.subr.mxu0 0.0
      %3277 = vmatpush1.msra.mxu0 0.0
      %3278 = vmatprep.subr.mxu0 0.0
      %3279 = vmatpush1.msra.mxu0 0.0
      %3280 = vmatprep.subr.mxu0 0.0
      %3281 = vmatpush1.msra.mxu0 0.0
      %3282 = vmatprep.subr.mxu0 0.0
      %3283 = vmatpush1.msra.mxu0 0.0
      %3284 = vmatprep.subr.mxu0 0.0
      %3285 = vmatpush1.msra.mxu0 0.0
      %3286 = vmatprep.subr.mxu0 0.0
      %3287 = vmatpush1.msra.mxu0 0.0
      %3288 = vmatprep.subr.mxu0 0.0
      %3289 = vmatpush1.msra.mxu0 0.0
      %3290 = vmatprep.mubr.f32.mxu0 0.0
      %3291 = vmatmul.mubr.f32.gmra.mrb[0].mxu0 %v3197
      %v3292 = vpop.f32.mrb[0].mxu0
      %v3293 = vadd.f32 0.0, %v3292
      %v3294 = vpop.f32.mrb[0].mxu0
      %3295 = vmatprep.mubr.f32.mxu0 0.0
      %3296 = vmatmul.mubr.f32.gmra.mrb[0].mxu0 %v3200
      %v3297 = vpop.f32.mrb[0].mxu0
      %v3298 = vadd.f32 0.0, %v3297
      %v3299 = vpop.f32.mrb[0].mxu0
      %3300 = vmatprep.mubr.f32.mxu0 0.0
      %3301 = vmatmul.mubr.f32.gmra.mrb[0].mxu0 %v3203
      %v3302 = vpop.f32.mrb[0].mxu0
      %v3303 = vadd.f32 0.0, %v3302
      %v3304 = vpop.f32.mrb[0].mxu0
      %3305 = vmatprep.mubr.f32.mxu0 0.0
      %3306 = vmatmul.mubr.f32.gmra.mrb[0].mxu0 %v3206
      %v3307 = vpop.f32.mrb[0].mxu0
      %v3308 = vadd.f32 0.0, %v3307
      %v3309 = vpop.f32.mrb[0].mxu0
      %3310 = vmatprep.mubr.f32.mxu0 0.0
      %3311 = vmatmul.mubr.f32.gmra.mrb[0].mxu0 %v3209
      %v3312 = vpop.f32.mrb[0].mxu0
      %v3313 = vadd.f32 0.0, %v3312
      %v3314 = vpop.f32.mrb[0].mxu0
      %3315 = vmatprep.mubr.f32.mxu0 0.0
      %3316 = vmatmul.mubr.f32.gmra.mrb[0].mxu0 %v3212
      %v3317 = vpop.f32.mrb[0].mxu0
      %v3318 = vadd.f32 0.0, %v3317
      %v3319 = vpop.f32.mrb[0].mxu0
      %3320 = vmatprep.mubr.f32.mxu0 0.0
      %3321 = vmatmul.mubr.f32.gmra.mrb[0].mxu0 %v3215
      %v3322 = vpop.f32.mrb[0].mxu0
      %v3323 = vadd.f32 0.0, %v3322
      %v3324 = vpop.f32.mrb[0].mxu0
      %3325 = vmatprep.mubr.f32.mxu0 0.0
      %3326 = vmatmul.mubr.f32.gmra.mrb[0].mxu0 %v3218
      %v3327 = vpop.f32.mrb[0].mxu0
      %v3328 = vadd.f32 0.0, %v3327
      %v3329 = vpop.f32.mrb[0].mxu0
      %3330 = vmatprep.mubr.f32.mxu0 0.0
      %3331 = vmatmul.mubr.f32.gmra.mrb[0].mxu0 %v3221
      %v3332 = vpop.f32.mrb[0].mxu0
      %v3333 = vadd.f32 0.0, %v3332
      %v3334 = vpop.f32.mrb[0].mxu0
      %3335 = vmatprep.mubr.f32.mxu0 0.0
      %3336 = vmatmul.mubr.f32.gmra.mrb[0].mxu0 %v3224
      %v3337 = vpop.f32.mrb[0].mxu0
      %v3338 = vadd.f32 0.0, %v3337
      %v3339 = vpop.f32.mrb[0].mxu0
      %3340 = vdwg.mxu0
      %v3341 = vadd.f32 %v3174, %v3293
      %v3342 = vadd.f32 %v3175, %v3298
      %v3343 = vadd.f32 %v3176, %v3303
      %v3344 = vadd.f32 %v3177, %v3308
      %v3345 = vadd.f32 %v3178, %v3313
      %v3346 = vadd.f32 %v3179, %v3318
      %v3347 = vadd.f32 %v3180, %v3323
      %v3348 = vadd.f32 %v3181, %v3328
      %v3349 = vadd.f32 %v3182, %v3333
      %v3350 = vadd.f32 %v3183, %v3338
      %v3351 = vld [vmem:[%s683 + $0xa] sm:$0xff]
      %v3352 = vld [vmem:[%s683 + $0x12] sm:$0xff]
      %v3353 = vld [vmem:[%s683 + $0x1a] sm:$0xff]
      %v3354 = vld [vmem:[%s683 + $0x22] sm:$0xff]
      %v3355 = vld [vmem:[%s683 + $0x2a] sm:$0xff]
      %v3356 = vld [vmem:[%s683 + $0x32] sm:$0xff]
      %v3357 = vld [vmem:[%s683 + $0x3a] sm:$0xff]
      %v3358 = vld [vmem:[%s683 + $0x42] sm:$0xff]
      %v3359 = vld [vmem:[%s683 + $0x4a] sm:$0xff]
      %v3360 = vld [vmem:[%s683 + $0x52] sm:$0xff]
      %s3361 = scalar_lea.vmem %s3, 64
      %v3362 = vld [vmem:[%s3361] sm:$0xff]
      %v3364 = vsel %vm497, %v3351, 0
      %v3367 = vsel %vm497, %v3352, 0
      %v3370 = vsel %vm497, %v3353, 0
      %v3373 = vsel %vm497, %v3354, 0
      %v3376 = vsel %vm497, %v3355, 0
      %v3379 = vsel %vm497, %v3356, 0
      %v3382 = vsel %vm497, %v3357, 0
      %v3385 = vsel %vm497, %v3358, 0
      %v3388 = vsel %vm497, %v3359, 0
      %v3391 = vsel %vm497, %v3360, 0
      %3393 = vmatprep.subr.mxu0 0.0
      %3394 = vmatpush1.msra.mxu0 %v3362
      %3395 = vmatprep.subr.mxu0 0.0
      %3396 = vmatpush1.msra.mxu0 0.0
      %3397 = vmatprep.subr.mxu0 0.0
      %3398 = vmatpush1.msra.mxu0 0.0
      %3399 = vmatprep.subr.mxu0 0.0
      %3400 = vmatpush1.msra.mxu0 0.0
      %3401 = vmatprep.subr.mxu0 0.0
      %3402 = vmatpush1.msra.mxu0 0.0
      %3403 = vmatprep.subr.mxu0 0.0
      %3404 = vmatpush1.msra.mxu0 0.0
      %3405 = vmatprep.subr.mxu0 0.0
      %3406 = vmatpush1.msra.mxu0 0.0
      %3407 = vmatprep.subr.mxu0 0.0
      %3408 = vmatpush1.msra.mxu0 0.0
      %3409 = vmatprep.subr.mxu0 0.0
      %3410 = vmatpush1.msra.mxu0 0.0
      %3411 = vmatprep.subr.mxu0 0.0
      %3412 = vmatpush1.msra.mxu0 0.0
      %3413 = vmatprep.subr.mxu0 0.0
      %3414 = vmatpush1.msra.mxu0 0.0
      %3415 = vmatprep.subr.mxu0 0.0
      %3416 = vmatpush1.msra.mxu0 0.0
      %3417 = vmatprep.subr.mxu0 0.0
      %3418 = vmatpush1.msra.mxu0 0.0
      %3419 = vmatprep.subr.mxu0 0.0
      %3420 = vmatpush1.msra.mxu0 0.0
      %3421 = vmatprep.subr.mxu0 0.0
      %3422 = vmatpush1.msra.mxu0 0.0
      %3423 = vmatprep.subr.mxu0 0.0
      %3424 = vmatpush1.msra.mxu0 0.0
      %3425 = vmatprep.subr.mxu0 0.0
      %3426 = vmatpush1.msra.mxu0 0.0
      %3427 = vmatprep.subr.mxu0 0.0
      %3428 = vmatpush1.msra.mxu0 0.0
      %3429 = vmatprep.subr.mxu0 0.0
      %3430 = vmatpush1.msra.mxu0 0.0
      %3431 = vmatprep.subr.mxu0 0.0
      %3432 = vmatpush1.msra.mxu0 0.0
      %3433 = vmatprep.subr.mxu0 0.0
      %3434 = vmatpush1.msra.mxu0 0.0
      %3435 = vmatprep.subr.mxu0 0.0
      %3436 = vmatpush1.msra.mxu0 0.0
      %3437 = vmatprep.subr.mxu0 0.0
      %3438 = vmatpush1.msra.mxu0 0.0
      %3439 = vmatprep.subr.mxu0 0.0
      %3440 = vmatpush1.msra.mxu0 0.0
      %3441 = vmatprep.subr.mxu0 0.0
      %3442 = vmatpush1.msra.mxu0 0.0
      %3443 = vmatprep.subr.mxu0 0.0
      %3444 = vmatpush1.msra.mxu0 0.0
      %3445 = vmatprep.subr.mxu0 0.0
      %3446 = vmatpush1.msra.mxu0 0.0
      %3447 = vmatprep.subr.mxu0 0.0
      %3448 = vmatpush1.msra.mxu0 0.0
      %3449 = vmatprep.subr.mxu0 0.0
      %3450 = vmatpush1.msra.mxu0 0.0
      %3451 = vmatprep.subr.mxu0 0.0
      %3452 = vmatpush1.msra.mxu0 0.0
      %3453 = vmatprep.subr.mxu0 0.0
      %3454 = vmatpush1.msra.mxu0 0.0
      %3455 = vmatprep.subr.mxu0 0.0
      %3456 = vmatpush1.msra.mxu0 0.0
      %3457 = vmatprep.mubr.f32.mxu0 0.0
      %3458 = vmatmul.mubr.f32.gmra.mrb[0].mxu0 %v3364
      %v3459 = vpop.f32.mrb[0].mxu0
      %v3460 = vadd.f32 0.0, %v3459
      %v3461 = vpop.f32.mrb[0].mxu0
      %3462 = vmatprep.mubr.f32.mxu0 0.0
      %3463 = vmatmul.mubr.f32.gmra.mrb[0].mxu0 %v3367
      %v3464 = vpop.f32.mrb[0].mxu0
      %v3465 = vadd.f32 0.0, %v3464
      %v3466 = vpop.f32.mrb[0].mxu0
      %3467 = vmatprep.mubr.f32.mxu0 0.0
      %3468 = vmatmul.mubr.f32.gmra.mrb[0].mxu0 %v3370
      %v3469 = vpop.f32.mrb[0].mxu0
      %v3470 = vadd.f32 0.0, %v3469
      %v3471 = vpop.f32.mrb[0].mxu0
      %3472 = vmatprep.mubr.f32.mxu0 0.0
      %3473 = vmatmul.mubr.f32.gmra.mrb[0].mxu0 %v3373
      %v3474 = vpop.f32.mrb[0].mxu0
      %v3475 = vadd.f32 0.0, %v3474
      %v3476 = vpop.f32.mrb[0].mxu0
      %3477 = vmatprep.mubr.f32.mxu0 0.0
      %3478 = vmatmul.mubr.f32.gmra.mrb[0].mxu0 %v3376
      %v3479 = vpop.f32.mrb[0].mxu0
      %v3480 = vadd.f32 0.0, %v3479
      %v3481 = vpop.f32.mrb[0].mxu0
      %3482 = vmatprep.mubr.f32.mxu0 0.0
      %3483 = vmatmul.mubr.f32.gmra.mrb[0].mxu0 %v3379
      %v3484 = vpop.f32.mrb[0].mxu0
      %v3485 = vadd.f32 0.0, %v3484
      %v3486 = vpop.f32.mrb[0].mxu0
      %3487 = vmatprep.mubr.f32.mxu0 0.0
      %3488 = vmatmul.mubr.f32.gmra.mrb[0].mxu0 %v3382
      %v3489 = vpop.f32.mrb[0].mxu0
      %v3490 = vadd.f32 0.0, %v3489
      %v3491 = vpop.f32.mrb[0].mxu0
      %3492 = vmatprep.mubr.f32.mxu0 0.0
      %3493 = vmatmul.mubr.f32.gmra.mrb[0].mxu0 %v3385
      %v3494 = vpop.f32.mrb[0].mxu0
      %v3495 = vadd.f32 0.0, %v3494
      %v3496 = vpop.f32.mrb[0].mxu0
      %3497 = vmatprep.mubr.f32.mxu0 0.0
      %3498 = vmatmul.mubr.f32.gmra.mrb[0].mxu0 %v3388
      %v3499 = vpop.f32.mrb[0].mxu0
      %v3500 = vadd.f32 0.0, %v3499
      %v3501 = vpop.f32.mrb[0].mxu0
      %3502 = vmatprep.mubr.f32.mxu0 0.0
      %3503 = vmatmul.mubr.f32.gmra.mrb[0].mxu0 %v3391
      %v3504 = vpop.f32.mrb[0].mxu0
      %v3505 = vadd.f32 0.0, %v3504
      %v3506 = vpop.f32.mrb[0].mxu0
      %3507 = vdwg.mxu0
      %v3508 = vadd.f32 %v3341, %v3460
      %v3509 = vadd.f32 %v3342, %v3465
      %v3510 = vadd.f32 %v3343, %v3470
      %v3511 = vadd.f32 %v3344, %v3475
      %v3512 = vadd.f32 %v3345, %v3480
      %v3513 = vadd.f32 %v3346, %v3485
      %v3514 = vadd.f32 %v3347, %v3490
      %v3515 = vadd.f32 %v3348, %v3495
      %v3516 = vadd.f32 %v3349, %v3500
      %v3517 = vadd.f32 %v3350, %v3505
      %v3518 = vld [vmem:[%s709 + $0xa] sm:$0xff]
      %v3519 = vld [vmem:[%s709 + $0x12] sm:$0xff]
      %v3520 = vld [vmem:[%s709 + $0x1a] sm:$0xff]
      %v3521 = vld [vmem:[%s709 + $0x22] sm:$0xff]
      %v3522 = vld [vmem:[%s709 + $0x2a] sm:$0xff]
      %v3523 = vld [vmem:[%s709 + $0x32] sm:$0xff]
      %v3524 = vld [vmem:[%s709 + $0x3a] sm:$0xff]
      %v3525 = vld [vmem:[%s709 + $0x42] sm:$0xff]
      %v3526 = vld [vmem:[%s709 + $0x4a] sm:$0xff]
      %v3527 = vld [vmem:[%s709 + $0x52] sm:$0xff]
      %s3528 = scalar_lea.vmem %s4, 64
      %v3529 = vld [vmem:[%s3528] sm:$0xff]
      %v3531 = vsel %vm497, %v3518, 0
      %v3534 = vsel %vm497, %v3519, 0
      %v3537 = vsel %vm497, %v3520, 0
      %v3540 = vsel %vm497, %v3521, 0
      %v3543 = vsel %vm497, %v3522, 0
      %v3546 = vsel %vm497, %v3523, 0
      %v3549 = vsel %vm497, %v3524, 0
      %v3552 = vsel %vm497, %v3525, 0
      %v3555 = vsel %vm497, %v3526, 0
      %v3558 = vsel %vm497, %v3527, 0
      %3560 = vmatprep.subr.mxu0 0.0
      %3561 = vmatpush1.msra.mxu0 %v3529
      %3562 = vmatprep.subr.mxu0 0.0
      %3563 = vmatpush1.msra.mxu0 0.0
      %3564 = vmatprep.subr.mxu0 0.0
      %3565 = vmatpush1.msra.mxu0 0.0
      %3566 = vmatprep.subr.mxu0 0.0
      %3567 = vmatpush1.msra.mxu0 0.0
      %3568 = vmatprep.subr.mxu0 0.0
      %3569 = vmatpush1.msra.mxu0 0.0
      %3570 = vmatprep.subr.mxu0 0.0
      %3571 = vmatpush1.msra.mxu0 0.0
      %3572 = vmatprep.subr.mxu0 0.0
      %3573 = vmatpush1.msra.mxu0 0.0
      %3574 = vmatprep.subr.mxu0 0.0
      %3575 = vmatpush1.msra.mxu0 0.0
      %3576 = vmatprep.subr.mxu0 0.0
      %3577 = vmatpush1.msra.mxu0 0.0
      %3578 = vmatprep.subr.mxu0 0.0
      %3579 = vmatpush1.msra.mxu0 0.0
      %3580 = vmatprep.subr.mxu0 0.0
      %3581 = vmatpush1.msra.mxu0 0.0
      %3582 = vmatprep.subr.mxu0 0.0
      %3583 = vmatpush1.msra.mxu0 0.0
      %3584 = vmatprep.subr.mxu0 0.0
      %3585 = vmatpush1.msra.mxu0 0.0
      %3586 = vmatprep.subr.mxu0 0.0
      %3587 = vmatpush1.msra.mxu0 0.0
      %3588 = vmatprep.subr.mxu0 0.0
      %3589 = vmatpush1.msra.mxu0 0.0
      %3590 = vmatprep.subr.mxu0 0.0
      %3591 = vmatpush1.msra.mxu0 0.0
      %3592 = vmatprep.subr.mxu0 0.0
      %3593 = vmatpush1.msra.mxu0 0.0
      %3594 = vmatprep.subr.mxu0 0.0
      %3595 = vmatpush1.msra.mxu0 0.0
      %3596 = vmatprep.subr.mxu0 0.0
      %3597 = vmatpush1.msra.mxu0 0.0
      %3598 = vmatprep.subr.mxu0 0.0
      %3599 = vmatpush1.msra.mxu0 0.0
      %3600 = vmatprep.subr.mxu0 0.0
      %3601 = vmatpush1.msra.mxu0 0.0
      %3602 = vmatprep.subr.mxu0 0.0
      %3603 = vmatpush1.msra.mxu0 0.0
      %3604 = vmatprep.subr.mxu0 0.0
      %3605 = vmatpush1.msra.mxu0 0.0
      %3606 = vmatprep.subr.mxu0 0.0
      %3607 = vmatpush1.msra.mxu0 0.0
      %3608 = vmatprep.subr.mxu0 0.0
      %3609 = vmatpush1.msra.mxu0 0.0
      %3610 = vmatprep.subr.mxu0 0.0
      %3611 = vmatpush1.msra.mxu0 0.0
      %3612 = vmatprep.subr.mxu0 0.0
      %3613 = vmatpush1.msra.mxu0 0.0
      %3614 = vmatprep.subr.mxu0 0.0
      %3615 = vmatpush1.msra.mxu0 0.0
      %3616 = vmatprep.subr.mxu0 0.0
      %3617 = vmatpush1.msra.mxu0 0.0
      %3618 = vmatprep.subr.mxu0 0.0
      %3619 = vmatpush1.msra.mxu0 0.0
      %3620 = vmatprep.subr.mxu0 0.0
      %3621 = vmatpush1.msra.mxu0 0.0
      %3622 = vmatprep.subr.mxu0 0.0
      %3623 = vmatpush1.msra.mxu0 0.0
      %3624 = vmatprep.mubr.f32.mxu0 0.0
      %3625 = vmatmul.mubr.f32.gmra.mrb[0].mxu0 %v3531
      %v3626 = vpop.f32.mrb[0].mxu0
      %v3627 = vadd.f32 0.0, %v3626
      %v3628 = vpop.f32.mrb[0].mxu0
      %3629 = vmatprep.mubr.f32.mxu0 0.0
      %3630 = vmatmul.mubr.f32.gmra.mrb[0].mxu0 %v3534
      %v3631 = vpop.f32.mrb[0].mxu0
      %v3632 = vadd.f32 0.0, %v3631
      %v3633 = vpop.f32.mrb[0].mxu0
      %3634 = vmatprep.mubr.f32.mxu0 0.0
      %3635 = vmatmul.mubr.f32.gmra.mrb[0].mxu0 %v3537
      %v3636 = vpop.f32.mrb[0].mxu0
      %v3637 = vadd.f32 0.0, %v3636
      %v3638 = vpop.f32.mrb[0].mxu0
      %3639 = vmatprep.mubr.f32.mxu0 0.0
      %3640 = vmatmul.mubr.f32.gmra.mrb[0].mxu0 %v3540
      %v3641 = vpop.f32.mrb[0].mxu0
      %v3642 = vadd.f32 0.0, %v3641
      %v3643 = vpop.f32.mrb[0].mxu0
      %3644 = vmatprep.mubr.f32.mxu0 0.0
      %3645 = vmatmul.mubr.f32.gmra.mrb[0].mxu0 %v3543
      %v3646 = vpop.f32.mrb[0].mxu0
      %v3647 = vadd.f32 0.0, %v3646
      %v3648 = vpop.f32.mrb[0].mxu0
      %3649 = vmatprep.mubr.f32.mxu0 0.0
      %3650 = vmatmul.mubr.f32.gmra.mrb[0].mxu0 %v3546
      %v3651 = vpop.f32.mrb[0].mxu0
      %v3652 = vadd.f32 0.0, %v3651
      %v3653 = vpop.f32.mrb[0].mxu0
      %3654 = vmatprep.mubr.f32.mxu0 0.0
      %3655 = vmatmul.mubr.f32.gmra.mrb[0].mxu0 %v3549
      %v3656 = vpop.f32.mrb[0].mxu0
      %v3657 = vadd.f32 0.0, %v3656
      %v3658 = vpop.f32.mrb[0].mxu0
      %3659 = vmatprep.mubr.f32.mxu0 0.0
      %3660 = vmatmul.mubr.f32.gmra.mrb[0].mxu0 %v3552
      %v3661 = vpop.f32.mrb[0].mxu0
      %v3662 = vadd.f32 0.0, %v3661
      %v3663 = vpop.f32.mrb[0].mxu0
      %3664 = vmatprep.mubr.f32.mxu0 0.0
      %3665 = vmatmul.mubr.f32.gmra.mrb[0].mxu0 %v3555
      %v3666 = vpop.f32.mrb[0].mxu0
      %v3667 = vadd.f32 0.0, %v3666
      %v3668 = vpop.f32.mrb[0].mxu0
      %3669 = vmatprep.mubr.f32.mxu0 0.0
      %3670 = vmatmul.mubr.f32.gmra.mrb[0].mxu0 %v3558
      %v3671 = vpop.f32.mrb[0].mxu0
      %v3672 = vadd.f32 0.0, %v3671
      %v3673 = vpop.f32.mrb[0].mxu0
      %3674 = vdwg.mxu0
      %v3675 = vadd.f32 %v3508, %v3627
      %v3676 = vadd.f32 %v3509, %v3632
      %v3677 = vadd.f32 %v3510, %v3637
      %v3678 = vadd.f32 %v3511, %v3642
      %v3679 = vadd.f32 %v3512, %v3647
      %v3680 = vadd.f32 %v3513, %v3652
      %v3681 = vadd.f32 %v3514, %v3657
      %v3682 = vadd.f32 %v3515, %v3662
      %v3683 = vadd.f32 %v3516, %v3667
      %v3684 = vadd.f32 %v3517, %v3672
      %v3685 = vld [vmem:[%s626 + $0xb] sm:$0xff]
      %v3686 = vld [vmem:[%s626 + $0x13] sm:$0xff]
      %v3687 = vld [vmem:[%s626 + $0x1b] sm:$0xff]
      %v3688 = vld [vmem:[%s626 + $0x23] sm:$0xff]
      %v3689 = vld [vmem:[%s626 + $0x2b] sm:$0xff]
      %v3690 = vld [vmem:[%s626 + $0x33] sm:$0xff]
      %v3691 = vld [vmem:[%s626 + $0x3b] sm:$0xff]
      %v3692 = vld [vmem:[%s626 + $0x43] sm:$0xff]
      %v3693 = vld [vmem:[%s626 + $0x4b] sm:$0xff]
      %v3694 = vld [vmem:[%s626 + $0x53] sm:$0xff]
      %s3695 = scalar_lea.vmem %s3, 72
      %v3696 = vld [vmem:[%s3695] sm:$0xff]
      %v3698 = vsel %vm497, %v3685, 0
      %v3701 = vsel %vm497, %v3686, 0
      %v3704 = vsel %vm497, %v3687, 0
      %v3707 = vsel %vm497, %v3688, 0
      %v3710 = vsel %vm497, %v3689, 0
      %v3713 = vsel %vm497, %v3690, 0
      %v3716 = vsel %vm497, %v3691, 0
      %v3719 = vsel %vm497, %v3692, 0
      %v3722 = vsel %vm497, %v3693, 0
      %v3725 = vsel %vm497, %v3694, 0
      %3727 = vmatprep.subr.mxu0 0.0
      %3728 = vmatpush1.msra.mxu0 %v3696
      %3729 = vmatprep.subr.mxu0 0.0
      %3730 = vmatpush1.msra.mxu0 0.0
      %3731 = vmatprep.subr.mxu0 0.0
      %3732 = vmatpush1.msra.mxu0 0.0
      %3733 = vmatprep.subr.mxu0 0.0
      %3734 = vmatpush1.msra.mxu0 0.0
      %3735 = vmatprep.subr.mxu0 0.0
      %3736 = vmatpush1.msra.mxu0 0.0
      %3737 = vmatprep.subr.mxu0 0.0
      %3738 = vmatpush1.msra.mxu0 0.0
      %3739 = vmatprep.subr.mxu0 0.0
      %3740 = vmatpush1.msra.mxu0 0.0
      %3741 = vmatprep.subr.mxu0 0.0
      %3742 = vmatpush1.msra.mxu0 0.0
      %3743 = vmatprep.subr.mxu0 0.0
      %3744 = vmatpush1.msra.mxu0 0.0
      %3745 = vmatprep.subr.mxu0 0.0
      %3746 = vmatpush1.msra.mxu0 0.0
      %3747 = vmatprep.subr.mxu0 0.0
      %3748 = vmatpush1.msra.mxu0 0.0
      %3749 = vmatprep.subr.mxu0 0.0
      %3750 = vmatpush1.msra.mxu0 0.0
      %3751 = vmatprep.subr.mxu0 0.0
      %3752 = vmatpush1.msra.mxu0 0.0
      %3753 = vmatprep.subr.mxu0 0.0
      %3754 = vmatpush1.msra.mxu0 0.0
      %3755 = vmatprep.subr.mxu0 0.0
      %3756 = vmatpush1.msra.mxu0 0.0
      %3757 = vmatprep.subr.mxu0 0.0
      %3758 = vmatpush1.msra.mxu0 0.0
      %3759 = vmatprep.subr.mxu0 0.0
      %3760 = vmatpush1.msra.mxu0 0.0
      %3761 = vmatprep.subr.mxu0 0.0
      %3762 = vmatpush1.msra.mxu0 0.0
      %3763 = vmatprep.subr.mxu0 0.0
      %3764 = vmatpush1.msra.mxu0 0.0
      %3765 = vmatprep.subr.mxu0 0.0
      %3766 = vmatpush1.msra.mxu0 0.0
      %3767 = vmatprep.subr.mxu0 0.0
      %3768 = vmatpush1.msra.mxu0 0.0
      %3769 = vmatprep.subr.mxu0 0.0
      %3770 = vmatpush1.msra.mxu0 0.0
      %3771 = vmatprep.subr.mxu0 0.0
      %3772 = vmatpush1.msra.mxu0 0.0
      %3773 = vmatprep.subr.mxu0 0.0
      %3774 = vmatpush1.msra.mxu0 0.0
      %3775 = vmatprep.subr.mxu0 0.0
      %3776 = vmatpush1.msra.mxu0 0.0
      %3777 = vmatprep.subr.mxu0 0.0
      %3778 = vmatpush1.msra.mxu0 0.0
      %3779 = vmatprep.subr.mxu0 0.0
      %3780 = vmatpush1.msra.mxu0 0.0
      %3781 = vmatprep.subr.mxu0 0.0
      %3782 = vmatpush1.msra.mxu0 0.0
      %3783 = vmatprep.subr.mxu0 0.0
      %3784 = vmatpush1.msra.mxu0 0.0
      %3785 = vmatprep.subr.mxu0 0.0
      %3786 = vmatpush1.msra.mxu0 0.0
      %3787 = vmatprep.subr.mxu0 0.0
      %3788 = vmatpush1.msra.mxu0 0.0
      %3789 = vmatprep.subr.mxu0 0.0
      %3790 = vmatpush1.msra.mxu0 0.0
      %3791 = vmatprep.mubr.f32.mxu0 0.0
      %3792 = vmatmul.mubr.f32.gmra.mrb[0].mxu0 %v3698
      %v3793 = vpop.f32.mrb[0].mxu0
      %v3794 = vadd.f32 0.0, %v3793
      %v3795 = vpop.f32.mrb[0].mxu0
      %3796 = vmatprep.mubr.f32.mxu0 0.0
      %3797 = vmatmul.mubr.f32.gmra.mrb[0].mxu0 %v3701
      %v3798 = vpop.f32.mrb[0].mxu0
      %v3799 = vadd.f32 0.0, %v3798
      %v3800 = vpop.f32.mrb[0].mxu0
      %3801 = vmatprep.mubr.f32.mxu0 0.0
      %3802 = vmatmul.mubr.f32.gmra.mrb[0].mxu0 %v3704
      %v3803 = vpop.f32.mrb[0].mxu0
      %v3804 = vadd.f32 0.0, %v3803
      %v3805 = vpop.f32.mrb[0].mxu0
      %3806 = vmatprep.mubr.f32.mxu0 0.0
      %3807 = vmatmul.mubr.f32.gmra.mrb[0].mxu0 %v3707
      %v3808 = vpop.f32.mrb[0].mxu0
      %v3809 = vadd.f32 0.0, %v3808
      %v3810 = vpop.f32.mrb[0].mxu0
      %3811 = vmatprep.mubr.f32.mxu0 0.0
      %3812 = vmatmul.mubr.f32.gmra.mrb[0].mxu0 %v3710
      %v3813 = vpop.f32.mrb[0].mxu0
      %v3814 = vadd.f32 0.0, %v3813
      %v3815 = vpop.f32.mrb[0].mxu0
      %3816 = vmatprep.mubr.f32.mxu0 0.0
      %3817 = vmatmul.mubr.f32.gmra.mrb[0].mxu0 %v3713
      %v3818 = vpop.f32.mrb[0].mxu0
      %v3819 = vadd.f32 0.0, %v3818
      %v3820 = vpop.f32.mrb[0].mxu0
      %3821 = vmatprep.mubr.f32.mxu0 0.0
      %3822 = vmatmul.mubr.f32.gmra.mrb[0].mxu0 %v3716
      %v3823 = vpop.f32.mrb[0].mxu0
      %v3824 = vadd.f32 0.0, %v3823
      %v3825 = vpop.f32.mrb[0].mxu0
      %3826 = vmatprep.mubr.f32.mxu0 0.0
      %3827 = vmatmul.mubr.f32.gmra.mrb[0].mxu0 %v3719
      %v3828 = vpop.f32.mrb[0].mxu0
      %v3829 = vadd.f32 0.0, %v3828
      %v3830 = vpop.f32.mrb[0].mxu0
      %3831 = vmatprep.mubr.f32.mxu0 0.0
      %3832 = vmatmul.mubr.f32.gmra.mrb[0].mxu0 %v3722
      %v3833 = vpop.f32.mrb[0].mxu0
      %v3834 = vadd.f32 0.0, %v3833
      %v3835 = vpop.f32.mrb[0].mxu0
      %3836 = vmatprep.mubr.f32.mxu0 0.0
      %3837 = vmatmul.mubr.f32.gmra.mrb[0].mxu0 %v3725
      %v3838 = vpop.f32.mrb[0].mxu0
      %v3839 = vadd.f32 0.0, %v3838
      %v3840 = vpop.f32.mrb[0].mxu0
      %3841 = vdwg.mxu0
      %v3842 = vadd.f32 %v3675, %v3794
      %v3843 = vadd.f32 %v3676, %v3799
      %v3844 = vadd.f32 %v3677, %v3804
      %v3845 = vadd.f32 %v3678, %v3809
      %v3846 = vadd.f32 %v3679, %v3814
      %v3847 = vadd.f32 %v3680, %v3819
      %v3848 = vadd.f32 %v3681, %v3824
      %v3849 = vadd.f32 %v3682, %v3829
      %v3850 = vadd.f32 %v3683, %v3834
      %v3851 = vadd.f32 %v3684, %v3839
      %v3852 = vld [vmem:[%s1178 + $0xb] sm:$0xff]
      %v3853 = vld [vmem:[%s1178 + $0x13] sm:$0xff]
      %v3854 = vld [vmem:[%s1178 + $0x1b] sm:$0xff]
      %v3855 = vld [vmem:[%s1178 + $0x23] sm:$0xff]
      %v3856 = vld [vmem:[%s1178 + $0x2b] sm:$0xff]
      %v3857 = vld [vmem:[%s1178 + $0x33] sm:$0xff]
      %v3858 = vld [vmem:[%s1178 + $0x3b] sm:$0xff]
      %v3859 = vld [vmem:[%s1178 + $0x43] sm:$0xff]
      %v3860 = vld [vmem:[%s1178 + $0x4b] sm:$0xff]
      %v3861 = vld [vmem:[%s1178 + $0x53] sm:$0xff]
      %s3862 = scalar_lea.vmem %s4, 72
      %v3863 = vld [vmem:[%s3862] sm:$0xff]
      %v3865 = vsel %vm497, %v3852, 0
      %v3868 = vsel %vm497, %v3853, 0
      %v3871 = vsel %vm497, %v3854, 0
      %v3874 = vsel %vm497, %v3855, 0
      %v3877 = vsel %vm497, %v3856, 0
      %v3880 = vsel %vm497, %v3857, 0
      %v3883 = vsel %vm497, %v3858, 0
      %v3886 = vsel %vm497, %v3859, 0
      %v3889 = vsel %vm497, %v3860, 0
      %v3892 = vsel %vm497, %v3861, 0
      %3894 = vmatprep.subr.mxu0 0.0
      %3895 = vmatpush1.msra.mxu0 %v3863
      %3896 = vmatprep.subr.mxu0 0.0
      %3897 = vmatpush1.msra.mxu0 0.0
      %3898 = vmatprep.subr.mxu0 0.0
      %3899 = vmatpush1.msra.mxu0 0.0
      %3900 = vmatprep.subr.mxu0 0.0
      %3901 = vmatpush1.msra.mxu0 0.0
      %3902 = vmatprep.subr.mxu0 0.0
      %3903 = vmatpush1.msra.mxu0 0.0
      %3904 = vmatprep.subr.mxu0 0.0
      %3905 = vmatpush1.msra.mxu0 0.0
      %3906 = vmatprep.subr.mxu0 0.0
      %3907 = vmatpush1.msra.mxu0 0.0
      %3908 = vmatprep.subr.mxu0 0.0
      %3909 = vmatpush1.msra.mxu0 0.0
      %3910 = vmatprep.subr.mxu0 0.0
      %3911 = vmatpush1.msra.mxu0 0.0
      %3912 = vmatprep.subr.mxu0 0.0
      %3913 = vmatpush1.msra.mxu0 0.0
      %3914 = vmatprep.subr.mxu0 0.0
      %3915 = vmatpush1.msra.mxu0 0.0
      %3916 = vmatprep.subr.mxu0 0.0
      %3917 = vmatpush1.msra.mxu0 0.0
      %3918 = vmatprep.subr.mxu0 0.0
      %3919 = vmatpush1.msra.mxu0 0.0
      %3920 = vmatprep.subr.mxu0 0.0
      %3921 = vmatpush1.msra.mxu0 0.0
      %3922 = vmatprep.subr.mxu0 0.0
      %3923 = vmatpush1.msra.mxu0 0.0
      %3924 = vmatprep.subr.mxu0 0.0
      %3925 = vmatpush1.msra.mxu0 0.0
      %3926 = vmatprep.subr.mxu0 0.0
      %3927 = vmatpush1.msra.mxu0 0.0
      %3928 = vmatprep.subr.mxu0 0.0
      %3929 = vmatpush1.msra.mxu0 0.0
      %3930 = vmatprep.subr.mxu0 0.0
      %3931 = vmatpush1.msra.mxu0 0.0
      %3932 = vmatprep.subr.mxu0 0.0
      %3933 = vmatpush1.msra.mxu0 0.0
      %3934 = vmatprep.subr.mxu0 0.0
      %3935 = vmatpush1.msra.mxu0 0.0
      %3936 = vmatprep.subr.mxu0 0.0
      %3937 = vmatpush1.msra.mxu0 0.0
      %3938 = vmatprep.subr.mxu0 0.0
      %3939 = vmatpush1.msra.mxu0 0.0
      %3940 = vmatprep.subr.mxu0 0.0
      %3941 = vmatpush1.msra.mxu0 0.0
      %3942 = vmatprep.subr.mxu0 0.0
      %3943 = vmatpush1.msra.mxu0 0.0
      %3944 = vmatprep.subr.mxu0 0.0
      %3945 = vmatpush1.msra.mxu0 0.0
      %3946 = vmatprep.subr.mxu0 0.0
      %3947 = vmatpush1.msra.mxu0 0.0
      %3948 = vmatprep.subr.mxu0 0.0
      %3949 = vmatpush1.msra.mxu0 0.0
      %3950 = vmatprep.subr.mxu0 0.0
      %3951 = vmatpush1.msra.mxu0 0.0
      %3952 = vmatprep.subr.mxu0 0.0
      %3953 = vmatpush1.msra.mxu0 0.0
      %3954 = vmatprep.subr.mxu0 0.0
      %3955 = vmatpush1.msra.mxu0 0.0
      %3956 = vmatprep.subr.mxu0 0.0
      %3957 = vmatpush1.msra.mxu0 0.0
      %3958 = vmatprep.mubr.f32.mxu0 0.0
      %3959 = vmatmul.mubr.f32.gmra.mrb[0].mxu0 %v3865
      %v3960 = vpop.f32.mrb[0].mxu0
      %v3961 = vadd.f32 0.0, %v3960
      %v3962 = vpop.f32.mrb[0].mxu0
      %3963 = vmatprep.mubr.f32.mxu0 0.0
      %3964 = vmatmul.mubr.f32.gmra.mrb[0].mxu0 %v3868
      %v3965 = vpop.f32.mrb[0].mxu0
      %v3966 = vadd.f32 0.0, %v3965
      %v3967 = vpop.f32.mrb[0].mxu0
      %3968 = vmatprep.mubr.f32.mxu0 0.0
      %3969 = vmatmul.mubr.f32.gmra.mrb[0].mxu0 %v3871
      %v3970 = vpop.f32.mrb[0].mxu0
      %v3971 = vadd.f32 0.0, %v3970
      %v3972 = vpop.f32.mrb[0].mxu0
      %3973 = vmatprep.mubr.f32.mxu0 0.0
      %3974 = vmatmul.mubr.f32.gmra.mrb[0].mxu0 %v3874
      %v3975 = vpop.f32.mrb[0].mxu0
      %v3976 = vadd.f32 0.0, %v3975
      %v3977 = vpop.f32.mrb[0].mxu0
      %3978 = vmatprep.mubr.f32.mxu0 0.0
      %3979 = vmatmul.mubr.f32.gmra.mrb[0].mxu0 %v3877
      %v3980 = vpop.f32.mrb[0].mxu0
      %v3981 = vadd.f32 0.0, %v3980
      %v3982 = vpop.f32.mrb[0].mxu0
      %3983 = vmatprep.mubr.f32.mxu0 0.0
      %3984 = vmatmul.mubr.f32.gmra.mrb[0].mxu0 %v3880
      %v3985 = vpop.f32.mrb[0].mxu0
      %v3986 = vadd.f32 0.0, %v3985
      %v3987 = vpop.f32.mrb[0].mxu0
      %3988 = vmatprep.mubr.f32.mxu0 0.0
      %3989 = vmatmul.mubr.f32.gmra.mrb[0].mxu0 %v3883
      %v3990 = vpop.f32.mrb[0].mxu0
      %v3991 = vadd.f32 0.0, %v3990
      %v3992 = vpop.f32.mrb[0].mxu0
      %3993 = vmatprep.mubr.f32.mxu0 0.0
      %3994 = vmatmul.mubr.f32.gmra.mrb[0].mxu0 %v3886
      %v3995 = vpop.f32.mrb[0].mxu0
      %v3996 = vadd.f32 0.0, %v3995
      %v3997 = vpop.f32.mrb[0].mxu0
      %3998 = vmatprep.mubr.f32.mxu0 0.0
      %3999 = vmatmul.mubr.f32.gmra.mrb[0].mxu0 %v3889
      %v4000 = vpop.f32.mrb[0].mxu0
      %v4001 = vadd.f32 0.0, %v4000
      %v4002 = vpop.f32.mrb[0].mxu0
      %4003 = vmatprep.mubr.f32.mxu0 0.0
      %4004 = vmatmul.mubr.f32.gmra.mrb[0].mxu0 %v3892
      %v4005 = vpop.f32.mrb[0].mxu0
      %v4006 = vadd.f32 0.0, %v4005
      %v4007 = vpop.f32.mrb[0].mxu0
      %4008 = vdwg.mxu0
      %v4009 = vadd.f32 %v3842, %v3961
      %v4010 = vadd.f32 %v3843, %v3966
      %v4011 = vadd.f32 %v3844, %v3971
      %v4012 = vadd.f32 %v3845, %v3976
      %v4013 = vadd.f32 %v3846, %v3981
      %v4014 = vadd.f32 %v3847, %v3986
      %v4015 = vadd.f32 %v3848, %v3991
      %v4016 = vadd.f32 %v3849, %v3996
      %v4017 = vadd.f32 %v3850, %v4001
      %v4018 = vadd.f32 %v3851, %v4006
      %v4019 = vld [vmem:[%s683 + $0xb] sm:$0xff]
      %v4020 = vld [vmem:[%s683 + $0x13] sm:$0xff]
      %v4021 = vld [vmem:[%s683 + $0x1b] sm:$0xff]
      %v4022 = vld [vmem:[%s683 + $0x23] sm:$0xff]
      %v4023 = vld [vmem:[%s683 + $0x2b] sm:$0xff]
      %v4024 = vld [vmem:[%s683 + $0x33] sm:$0xff]
      %v4025 = vld [vmem:[%s683 + $0x3b] sm:$0xff]
      %v4026 = vld [vmem:[%s683 + $0x43] sm:$0xff]
      %v4027 = vld [vmem:[%s683 + $0x4b] sm:$0xff]
      %v4028 = vld [vmem:[%s683 + $0x53] sm:$0xff]
      %s4029 = scalar_lea.vmem %s3, 80
      %v4030 = vld [vmem:[%s4029] sm:$0xff]
      %v4032 = vsel %vm497, %v4019, 0
      %v4035 = vsel %vm497, %v4020, 0
      %v4038 = vsel %vm497, %v4021, 0
      %v4041 = vsel %vm497, %v4022, 0
      %v4044 = vsel %vm497, %v4023, 0
      %v4047 = vsel %vm497, %v4024, 0
      %v4050 = vsel %vm497, %v4025, 0
      %v4053 = vsel %vm497, %v4026, 0
      %v4056 = vsel %vm497, %v4027, 0
      %v4059 = vsel %vm497, %v4028, 0
      %4061 = vmatprep.subr.mxu0 0.0
      %4062 = vmatpush1.msra.mxu0 %v4030
      %4063 = vmatprep.subr.mxu0 0.0
      %4064 = vmatpush1.msra.mxu0 0.0
      %4065 = vmatprep.subr.mxu0 0.0
      %4066 = vmatpush1.msra.mxu0 0.0
      %4067 = vmatprep.subr.mxu0 0.0
      %4068 = vmatpush1.msra.mxu0 0.0
      %4069 = vmatprep.subr.mxu0 0.0
      %4070 = vmatpush1.msra.mxu0 0.0
      %4071 = vmatprep.subr.mxu0 0.0
      %4072 = vmatpush1.msra.mxu0 0.0
      %4073 = vmatprep.subr.mxu0 0.0
      %4074 = vmatpush1.msra.mxu0 0.0
      %4075 = vmatprep.subr.mxu0 0.0
      %4076 = vmatpush1.msra.mxu0 0.0
      %4077 = vmatprep.subr.mxu0 0.0
      %4078 = vmatpush1.msra.mxu0 0.0
      %4079 = vmatprep.subr.mxu0 0.0
      %4080 = vmatpush1.msra.mxu0 0.0
      %4081 = vmatprep.subr.mxu0 0.0
      %4082 = vmatpush1.msra.mxu0 0.0
      %4083 = vmatprep.subr.mxu0 0.0
      %4084 = vmatpush1.msra.mxu0 0.0
      %4085 = vmatprep.subr.mxu0 0.0
      %4086 = vmatpush1.msra.mxu0 0.0
      %4087 = vmatprep.subr.mxu0 0.0
      %4088 = vmatpush1.msra.mxu0 0.0
      %4089 = vmatprep.subr.mxu0 0.0
      %4090 = vmatpush1.msra.mxu0 0.0
      %4091 = vmatprep.subr.mxu0 0.0
      %4092 = vmatpush1.msra.mxu0 0.0
      %4093 = vmatprep.subr.mxu0 0.0
      %4094 = vmatpush1.msra.mxu0 0.0
      %4095 = vmatprep.subr.mxu0 0.0
      %4096 = vmatpush1.msra.mxu0 0.0
      %4097 = vmatprep.subr.mxu0 0.0
      %4098 = vmatpush1.msra.mxu0 0.0
      %4099 = vmatprep.subr.mxu0 0.0
      %4100 = vmatpush1.msra.mxu0 0.0
      %4101 = vmatprep.subr.mxu0 0.0
      %4102 = vmatpush1.msra.mxu0 0.0
      %4103 = vmatprep.subr.mxu0 0.0
      %4104 = vmatpush1.msra.mxu0 0.0
      %4105 = vmatprep.subr.mxu0 0.0
      %4106 = vmatpush1.msra.mxu0 0.0
      %4107 = vmatprep.subr.mxu0 0.0
      %4108 = vmatpush1.msra.mxu0 0.0
      %4109 = vmatprep.subr.mxu0 0.0
      %4110 = vmatpush1.msra.mxu0 0.0
      %4111 = vmatprep.subr.mxu0 0.0
      %4112 = vmatpush1.msra.mxu0 0.0
      %4113 = vmatprep.subr.mxu0 0.0
      %4114 = vmatpush1.msra.mxu0 0.0
      %4115 = vmatprep.subr.mxu0 0.0
      %4116 = vmatpush1.msra.mxu0 0.0
      %4117 = vmatprep.subr.mxu0 0.0
      %4118 = vmatpush1.msra.mxu0 0.0
      %4119 = vmatprep.subr.mxu0 0.0
      %4120 = vmatpush1.msra.mxu0 0.0
      %4121 = vmatprep.subr.mxu0 0.0
      %4122 = vmatpush1.msra.mxu0 0.0
      %4123 = vmatprep.subr.mxu0 0.0
      %4124 = vmatpush1.msra.mxu0 0.0
      %4125 = vmatprep.mubr.f32.mxu0 0.0
      %4126 = vmatmul.mubr.f32.gmra.mrb[0].mxu0 %v4032
      %v4127 = vpop.f32.mrb[0].mxu0
      %v4128 = vadd.f32 0.0, %v4127
      %v4129 = vpop.f32.mrb[0].mxu0
      %4130 = vmatprep.mubr.f32.mxu0 0.0
      %4131 = vmatmul.mubr.f32.gmra.mrb[0].mxu0 %v4035
      %v4132 = vpop.f32.mrb[0].mxu0
      %v4133 = vadd.f32 0.0, %v4132
      %v4134 = vpop.f32.mrb[0].mxu0
      %4135 = vmatprep.mubr.f32.mxu0 0.0
      %4136 = vmatmul.mubr.f32.gmra.mrb[0].mxu0 %v4038
      %v4137 = vpop.f32.mrb[0].mxu0
      %v4138 = vadd.f32 0.0, %v4137
      %v4139 = vpop.f32.mrb[0].mxu0
      %4140 = vmatprep.mubr.f32.mxu0 0.0
      %4141 = vmatmul.mubr.f32.gmra.mrb[0].mxu0 %v4041
      %v4142 = vpop.f32.mrb[0].mxu0
      %v4143 = vadd.f32 0.0, %v4142
      %v4144 = vpop.f32.mrb[0].mxu0
      %4145 = vmatprep.mubr.f32.mxu0 0.0
      %4146 = vmatmul.mubr.f32.gmra.mrb[0].mxu0 %v4044
      %v4147 = vpop.f32.mrb[0].mxu0
      %v4148 = vadd.f32 0.0, %v4147
      %v4149 = vpop.f32.mrb[0].mxu0
      %4150 = vmatprep.mubr.f32.mxu0 0.0
      %4151 = vmatmul.mubr.f32.gmra.mrb[0].mxu0 %v4047
      %v4152 = vpop.f32.mrb[0].mxu0
      %v4153 = vadd.f32 0.0, %v4152
      %v4154 = vpop.f32.mrb[0].mxu0
      %4155 = vmatprep.mubr.f32.mxu0 0.0
      %4156 = vmatmul.mubr.f32.gmra.mrb[0].mxu0 %v4050
      %v4157 = vpop.f32.mrb[0].mxu0
      %v4158 = vadd.f32 0.0, %v4157
      %v4159 = vpop.f32.mrb[0].mxu0
      %4160 = vmatprep.mubr.f32.mxu0 0.0
      %4161 = vmatmul.mubr.f32.gmra.mrb[0].mxu0 %v4053
      %v4162 = vpop.f32.mrb[0].mxu0
      %v4163 = vadd.f32 0.0, %v4162
      %v4164 = vpop.f32.mrb[0].mxu0
      %4165 = vmatprep.mubr.f32.mxu0 0.0
      %4166 = vmatmul.mubr.f32.gmra.mrb[0].mxu0 %v4056
      %v4167 = vpop.f32.mrb[0].mxu0
      %v4168 = vadd.f32 0.0, %v4167
      %v4169 = vpop.f32.mrb[0].mxu0
      %4170 = vmatprep.mubr.f32.mxu0 0.0
      %4171 = vmatmul.mubr.f32.gmra.mrb[0].mxu0 %v4059
      %v4172 = vpop.f32.mrb[0].mxu0
      %v4173 = vadd.f32 0.0, %v4172
      %v4174 = vpop.f32.mrb[0].mxu0
      %4175 = vdwg.mxu0
      %v4176 = vadd.f32 %v4009, %v4128
      %v4177 = vadd.f32 %v4010, %v4133
      %v4178 = vadd.f32 %v4011, %v4138
      %v4179 = vadd.f32 %v4012, %v4143
      %v4180 = vadd.f32 %v4013, %v4148
      %v4181 = vadd.f32 %v4014, %v4153
      %v4182 = vadd.f32 %v4015, %v4158
      %v4183 = vadd.f32 %v4016, %v4163
      %v4184 = vadd.f32 %v4017, %v4168
      %v4185 = vadd.f32 %v4018, %v4173
      %v4186 = vld [vmem:[%s709 + $0xb] sm:$0xff]
      %v4187 = vld [vmem:[%s709 + $0x13] sm:$0xff]
      %v4188 = vld [vmem:[%s709 + $0x1b] sm:$0xff]
      %v4189 = vld [vmem:[%s709 + $0x23] sm:$0xff]
      %v4190 = vld [vmem:[%s709 + $0x2b] sm:$0xff]
      %v4191 = vld [vmem:[%s709 + $0x33] sm:$0xff]
      %v4192 = vld [vmem:[%s709 + $0x3b] sm:$0xff]
      %v4193 = vld [vmem:[%s709 + $0x43] sm:$0xff]
      %v4194 = vld [vmem:[%s709 + $0x4b] sm:$0xff]
      %v4195 = vld [vmem:[%s709 + $0x53] sm:$0xff]
      %s4196 = scalar_lea.vmem %s4, 80
      %v4197 = vld [vmem:[%s4196] sm:$0xff]
      %v4199 = vsel %vm497, %v4186, 0
      %v4202 = vsel %vm497, %v4187, 0
      %v4205 = vsel %vm497, %v4188, 0
      %v4208 = vsel %vm497, %v4189, 0
      %v4211 = vsel %vm497, %v4190, 0
      %v4214 = vsel %vm497, %v4191, 0
      %v4217 = vsel %vm497, %v4192, 0
      %v4220 = vsel %vm497, %v4193, 0
      %v4223 = vsel %vm497, %v4194, 0
      %v4226 = vsel %vm497, %v4195, 0
      %4228 = vmatprep.subr.mxu0 0.0
      %4229 = vmatpush1.msra.mxu0 %v4197
      %4230 = vmatprep.subr.mxu0 0.0
      %4231 = vmatpush1.msra.mxu0 0.0
      %4232 = vmatprep.subr.mxu0 0.0
      %4233 = vmatpush1.msra.mxu0 0.0
      %4234 = vmatprep.subr.mxu0 0.0
      %4235 = vmatpush1.msra.mxu0 0.0
      %4236 = vmatprep.subr.mxu0 0.0
      %4237 = vmatpush1.msra.mxu0 0.0
      %4238 = vmatprep.subr.mxu0 0.0
      %4239 = vmatpush1.msra.mxu0 0.0
      %4240 = vmatprep.subr.mxu0 0.0
      %4241 = vmatpush1.msra.mxu0 0.0
      %4242 = vmatprep.subr.mxu0 0.0
      %4243 = vmatpush1.msra.mxu0 0.0
      %4244 = vmatprep.subr.mxu0 0.0
      %4245 = vmatpush1.msra.mxu0 0.0
      %4246 = vmatprep.subr.mxu0 0.0
      %4247 = vmatpush1.msra.mxu0 0.0
      %4248 = vmatprep.subr.mxu0 0.0
      %4249 = vmatpush1.msra.mxu0 0.0
      %4250 = vmatprep.subr.mxu0 0.0
      %4251 = vmatpush1.msra.mxu0 0.0
      %4252 = vmatprep.subr.mxu0 0.0
      %4253 = vmatpush1.msra.mxu0 0.0
      %4254 = vmatprep.subr.mxu0 0.0
      %4255 = vmatpush1.msra.mxu0 0.0
      %4256 = vmatprep.subr.mxu0 0.0
      %4257 = vmatpush1.msra.mxu0 0.0
      %4258 = vmatprep.subr.mxu0 0.0
      %4259 = vmatpush1.msra.mxu0 0.0
      %4260 = vmatprep.subr.mxu0 0.0
      %4261 = vmatpush1.msra.mxu0 0.0
      %4262 = vmatprep.subr.mxu0 0.0
      %4263 = vmatpush1.msra.mxu0 0.0
      %4264 = vmatprep.subr.mxu0 0.0
      %4265 = vmatpush1.msra.mxu0 0.0
      %4266 = vmatprep.subr.mxu0 0.0
      %4267 = vmatpush1.msra.mxu0 0.0
      %4268 = vmatprep.subr.mxu0 0.0
      %4269 = vmatpush1.msra.mxu0 0.0
      %4270 = vmatprep.subr.mxu0 0.0
      %4271 = vmatpush1.msra.mxu0 0.0
      %4272 = vmatprep.subr.mxu0 0.0
      %4273 = vmatpush1.msra.mxu0 0.0
      %4274 = vmatprep.subr.mxu0 0.0
      %4275 = vmatpush1.msra.mxu0 0.0
      %4276 = vmatprep.subr.mxu0 0.0
      %4277 = vmatpush1.msra.mxu0 0.0
      %4278 = vmatprep.subr.mxu0 0.0
      %4279 = vmatpush1.msra.mxu0 0.0
      %4280 = vmatprep.subr.mxu0 0.0
      %4281 = vmatpush1.msra.mxu0 0.0
      %4282 = vmatprep.subr.mxu0 0.0
      %4283 = vmatpush1.msra.mxu0 0.0
      %4284 = vmatprep.subr.mxu0 0.0
      %4285 = vmatpush1.msra.mxu0 0.0
      %4286 = vmatprep.subr.mxu0 0.0
      %4287 = vmatpush1.msra.mxu0 0.0
      %4288 = vmatprep.subr.mxu0 0.0
      %4289 = vmatpush1.msra.mxu0 0.0
      %4290 = vmatprep.subr.mxu0 0.0
      %4291 = vmatpush1.msra.mxu0 0.0
      %4292 = vmatprep.mubr.f32.mxu0 0.0
      %4293 = vmatmul.mubr.f32.gmra.mrb[0].mxu0 %v4199
      %v4294 = vpop.f32.mrb[0].mxu0
      %v4295 = vadd.f32 0.0, %v4294
      %v4296 = vpop.f32.mrb[0].mxu0
      %4297 = vmatprep.mubr.f32.mxu0 0.0
      %4298 = vmatmul.mubr.f32.gmra.mrb[0].mxu0 %v4202
      %v4299 = vpop.f32.mrb[0].mxu0
      %v4300 = vadd.f32 0.0, %v4299
      %v4301 = vpop.f32.mrb[0].mxu0
      %4302 = vmatprep.mubr.f32.mxu0 0.0
      %4303 = vmatmul.mubr.f32.gmra.mrb[0].mxu0 %v4205
      %v4304 = vpop.f32.mrb[0].mxu0
      %v4305 = vadd.f32 0.0, %v4304
      %v4306 = vpop.f32.mrb[0].mxu0
      %4307 = vmatprep.mubr.f32.mxu0 0.0
      %4308 = vmatmul.mubr.f32.gmra.mrb[0].mxu0 %v4208
      %v4309 = vpop.f32.mrb[0].mxu0
      %v4310 = vadd.f32 0.0, %v4309
      %v4311 = vpop.f32.mrb[0].mxu0
      %4312 = vmatprep.mubr.f32.mxu0 0.0
      %4313 = vmatmul.mubr.f32.gmra.mrb[0].mxu0 %v4211
      %v4314 = vpop.f32.mrb[0].mxu0
      %v4315 = vadd.f32 0.0, %v4314
      %v4316 = vpop.f32.mrb[0].mxu0
      %4317 = vmatprep.mubr.f32.mxu0 0.0
      %4318 = vmatmul.mubr.f32.gmra.mrb[0].mxu0 %v4214
      %v4319 = vpop.f32.mrb[0].mxu0
      %v4320 = vadd.f32 0.0, %v4319
      %v4321 = vpop.f32.mrb[0].mxu0
      %4322 = vmatprep.mubr.f32.mxu0 0.0
      %4323 = vmatmul.mubr.f32.gmra.mrb[0].mxu0 %v4217
      %v4324 = vpop.f32.mrb[0].mxu0
      %v4325 = vadd.f32 0.0, %v4324
      %v4326 = vpop.f32.mrb[0].mxu0
      %4327 = vmatprep.mubr.f32.mxu0 0.0
      %4328 = vmatmul.mubr.f32.gmra.mrb[0].mxu0 %v4220
      %v4329 = vpop.f32.mrb[0].mxu0
      %v4330 = vadd.f32 0.0, %v4329
      %v4331 = vpop.f32.mrb[0].mxu0
      %4332 = vmatprep.mubr.f32.mxu0 0.0
      %4333 = vmatmul.mubr.f32.gmra.mrb[0].mxu0 %v4223
      %v4334 = vpop.f32.mrb[0].mxu0
      %v4335 = vadd.f32 0.0, %v4334
      %v4336 = vpop.f32.mrb[0].mxu0
      %4337 = vmatprep.mubr.f32.mxu0 0.0
      %4338 = vmatmul.mubr.f32.gmra.mrb[0].mxu0 %v4226
      %v4339 = vpop.f32.mrb[0].mxu0
      %v4340 = vadd.f32 0.0, %v4339
      %v4341 = vpop.f32.mrb[0].mxu0
      %4342 = vdwg.mxu0
      %v4343 = vadd.f32 %v4176, %v4295
      %v4344 = vadd.f32 %v4177, %v4300
      %v4345 = vadd.f32 %v4178, %v4305
      %v4346 = vadd.f32 %v4179, %v4310
      %v4347 = vadd.f32 %v4180, %v4315
      %v4348 = vadd.f32 %v4181, %v4320
      %v4349 = vadd.f32 %v4182, %v4325
      %v4350 = vadd.f32 %v4183, %v4330
      %v4351 = vadd.f32 %v4184, %v4335
      %v4352 = vadd.f32 %v4185, %v4340
      %v4353 = vld [vmem:[%s626 + $0xc] sm:$0xff]
      %v4354 = vld [vmem:[%s626 + $0x14] sm:$0xff]
      %v4355 = vld [vmem:[%s626 + $0x1c] sm:$0xff]
      %v4356 = vld [vmem:[%s626 + $0x24] sm:$0xff]
      %v4357 = vld [vmem:[%s626 + $0x2c] sm:$0xff]
      %v4358 = vld [vmem:[%s626 + $0x34] sm:$0xff]
      %v4359 = vld [vmem:[%s626 + $0x3c] sm:$0xff]
      %v4360 = vld [vmem:[%s626 + $0x44] sm:$0xff]
      %v4361 = vld [vmem:[%s626 + $0x4c] sm:$0xff]
      %v4362 = vld [vmem:[%s626 + $0x54] sm:$0xff]
      %s4363 = scalar_lea.vmem %s3, 88
      %v4364 = vld [vmem:[%s4363] sm:$0xff]
      %v4366 = vsel %vm497, %v4353, 0
      %v4369 = vsel %vm497, %v4354, 0
      %v4372 = vsel %vm497, %v4355, 0
      %v4375 = vsel %vm497, %v4356, 0
      %v4378 = vsel %vm497, %v4357, 0
      %v4381 = vsel %vm497, %v4358, 0
      %v4384 = vsel %vm497, %v4359, 0
      %v4387 = vsel %vm497, %v4360, 0
      %v4390 = vsel %vm497, %v4361, 0
      %v4393 = vsel %vm497, %v4362, 0
      %4395 = vmatprep.subr.mxu0 0.0
      %4396 = vmatpush1.msra.mxu0 %v4364
      %4397 = vmatprep.subr.mxu0 0.0
      %4398 = vmatpush1.msra.mxu0 0.0
      %4399 = vmatprep.subr.mxu0 0.0
      %4400 = vmatpush1.msra.mxu0 0.0
      %4401 = vmatprep.subr.mxu0 0.0
      %4402 = vmatpush1.msra.mxu0 0.0
      %4403 = vmatprep.subr.mxu0 0.0
      %4404 = vmatpush1.msra.mxu0 0.0
      %4405 = vmatprep.subr.mxu0 0.0
      %4406 = vmatpush1.msra.mxu0 0.0
      %4407 = vmatprep.subr.mxu0 0.0
      %4408 = vmatpush1.msra.mxu0 0.0
      %4409 = vmatprep.subr.mxu0 0.0
      %4410 = vmatpush1.msra.mxu0 0.0
      %4411 = vmatprep.subr.mxu0 0.0
      %4412 = vmatpush1.msra.mxu0 0.0
      %4413 = vmatprep.subr.mxu0 0.0
      %4414 = vmatpush1.msra.mxu0 0.0
      %4415 = vmatprep.subr.mxu0 0.0
      %4416 = vmatpush1.msra.mxu0 0.0
      %4417 = vmatprep.subr.mxu0 0.0
      %4418 = vmatpush1.msra.mxu0 0.0
      %4419 = vmatprep.subr.mxu0 0.0
      %4420 = vmatpush1.msra.mxu0 0.0
      %4421 = vmatprep.subr.mxu0 0.0
      %4422 = vmatpush1.msra.mxu0 0.0
      %4423 = vmatprep.subr.mxu0 0.0
      %4424 = vmatpush1.msra.mxu0 0.0
      %4425 = vmatprep.subr.mxu0 0.0
      %4426 = vmatpush1.msra.mxu0 0.0
      %4427 = vmatprep.subr.mxu0 0.0
      %4428 = vmatpush1.msra.mxu0 0.0
      %4429 = vmatprep.subr.mxu0 0.0
      %4430 = vmatpush1.msra.mxu0 0.0
      %4431 = vmatprep.subr.mxu0 0.0
      %4432 = vmatpush1.msra.mxu0 0.0
      %4433 = vmatprep.subr.mxu0 0.0
      %4434 = vmatpush1.msra.mxu0 0.0
      %4435 = vmatprep.subr.mxu0 0.0
      %4436 = vmatpush1.msra.mxu0 0.0
      %4437 = vmatprep.subr.mxu0 0.0
      %4438 = vmatpush1.msra.mxu0 0.0
      %4439 = vmatprep.subr.mxu0 0.0
      %4440 = vmatpush1.msra.mxu0 0.0
      %4441 = vmatprep.subr.mxu0 0.0
      %4442 = vmatpush1.msra.mxu0 0.0
      %4443 = vmatprep.subr.mxu0 0.0
      %4444 = vmatpush1.msra.mxu0 0.0
      %4445 = vmatprep.subr.mxu0 0.0
      %4446 = vmatpush1.msra.mxu0 0.0
      %4447 = vmatprep.subr.mxu0 0.0
      %4448 = vmatpush1.msra.mxu0 0.0
      %4449 = vmatprep.subr.mxu0 0.0
      %4450 = vmatpush1.msra.mxu0 0.0
      %4451 = vmatprep.subr.mxu0 0.0
      %4452 = vmatpush1.msra.mxu0 0.0
      %4453 = vmatprep.subr.mxu0 0.0
      %4454 = vmatpush1.msra.mxu0 0.0
      %4455 = vmatprep.subr.mxu0 0.0
      %4456 = vmatpush1.msra.mxu0 0.0
      %4457 = vmatprep.subr.mxu0 0.0
      %4458 = vmatpush1.msra.mxu0 0.0
      %4459 = vmatprep.mubr.f32.mxu0 0.0
      %4460 = vmatmul.mubr.f32.gmra.mrb[0].mxu0 %v4366
      %v4461 = vpop.f32.mrb[0].mxu0
      %v4462 = vadd.f32 0.0, %v4461
      %v4463 = vpop.f32.mrb[0].mxu0
      %4464 = vmatprep.mubr.f32.mxu0 0.0
      %4465 = vmatmul.mubr.f32.gmra.mrb[0].mxu0 %v4369
      %v4466 = vpop.f32.mrb[0].mxu0
      %v4467 = vadd.f32 0.0, %v4466
      %v4468 = vpop.f32.mrb[0].mxu0
      %4469 = vmatprep.mubr.f32.mxu0 0.0
      %4470 = vmatmul.mubr.f32.gmra.mrb[0].mxu0 %v4372
      %v4471 = vpop.f32.mrb[0].mxu0
      %v4472 = vadd.f32 0.0, %v4471
      %v4473 = vpop.f32.mrb[0].mxu0
      %4474 = vmatprep.mubr.f32.mxu0 0.0
      %4475 = vmatmul.mubr.f32.gmra.mrb[0].mxu0 %v4375
      %v4476 = vpop.f32.mrb[0].mxu0
      %v4477 = vadd.f32 0.0, %v4476
      %v4478 = vpop.f32.mrb[0].mxu0
      %4479 = vmatprep.mubr.f32.mxu0 0.0
      %4480 = vmatmul.mubr.f32.gmra.mrb[0].mxu0 %v4378
      %v4481 = vpop.f32.mrb[0].mxu0
      %v4482 = vadd.f32 0.0, %v4481
      %v4483 = vpop.f32.mrb[0].mxu0
      %4484 = vmatprep.mubr.f32.mxu0 0.0
      %4485 = vmatmul.mubr.f32.gmra.mrb[0].mxu0 %v4381
      %v4486 = vpop.f32.mrb[0].mxu0
      %v4487 = vadd.f32 0.0, %v4486
      %v4488 = vpop.f32.mrb[0].mxu0
      %4489 = vmatprep.mubr.f32.mxu0 0.0
      %4490 = vmatmul.mubr.f32.gmra.mrb[0].mxu0 %v4384
      %v4491 = vpop.f32.mrb[0].mxu0
      %v4492 = vadd.f32 0.0, %v4491
      %v4493 = vpop.f32.mrb[0].mxu0
      %4494 = vmatprep.mubr.f32.mxu0 0.0
      %4495 = vmatmul.mubr.f32.gmra.mrb[0].mxu0 %v4387
      %v4496 = vpop.f32.mrb[0].mxu0
      %v4497 = vadd.f32 0.0, %v4496
      %v4498 = vpop.f32.mrb[0].mxu0
      %4499 = vmatprep.mubr.f32.mxu0 0.0
      %4500 = vmatmul.mubr.f32.gmra.mrb[0].mxu0 %v4390
      %v4501 = vpop.f32.mrb[0].mxu0
      %v4502 = vadd.f32 0.0, %v4501
      %v4503 = vpop.f32.mrb[0].mxu0
      %4504 = vmatprep.mubr.f32.mxu0 0.0
      %4505 = vmatmul.mubr.f32.gmra.mrb[0].mxu0 %v4393
      %v4506 = vpop.f32.mrb[0].mxu0
      %v4507 = vadd.f32 0.0, %v4506
      %v4508 = vpop.f32.mrb[0].mxu0
      %4509 = vdwg.mxu0
      %v4510 = vadd.f32 %v4343, %v4462
      %v4511 = vadd.f32 %v4344, %v4467
      %v4512 = vadd.f32 %v4345, %v4472
      %v4513 = vadd.f32 %v4346, %v4477
      %v4514 = vadd.f32 %v4347, %v4482
      %v4515 = vadd.f32 %v4348, %v4487
      %v4516 = vadd.f32 %v4349, %v4492
      %v4517 = vadd.f32 %v4350, %v4497
      %v4518 = vadd.f32 %v4351, %v4502
      %v4519 = vadd.f32 %v4352, %v4507
      %v4520 = vld [vmem:[%s1178 + $0xc] sm:$0xff]
      %v4521 = vld [vmem:[%s1178 + $0x14] sm:$0xff]
      %v4522 = vld [vmem:[%s1178 + $0x1c] sm:$0xff]
      %v4523 = vld [vmem:[%s1178 + $0x24] sm:$0xff]
      %v4524 = vld [vmem:[%s1178 + $0x2c] sm:$0xff]
      %v4525 = vld [vmem:[%s1178 + $0x34] sm:$0xff]
      %v4526 = vld [vmem:[%s1178 + $0x3c] sm:$0xff]
      %v4527 = vld [vmem:[%s1178 + $0x44] sm:$0xff]
      %v4528 = vld [vmem:[%s1178 + $0x4c] sm:$0xff]
      %v4529 = vld [vmem:[%s1178 + $0x54] sm:$0xff]
      %s4530 = scalar_lea.vmem %s4, 88
      %v4531 = vld [vmem:[%s4530] sm:$0xff]
      %v4533 = vsel %vm497, %v4520, 0
      %v4536 = vsel %vm497, %v4521, 0
      %v4539 = vsel %vm497, %v4522, 0
      %v4542 = vsel %vm497, %v4523, 0
      %v4545 = vsel %vm497, %v4524, 0
      %v4548 = vsel %vm497, %v4525, 0
      %v4551 = vsel %vm497, %v4526, 0
      %v4554 = vsel %vm497, %v4527, 0
      %v4557 = vsel %vm497, %v4528, 0
      %v4560 = vsel %vm497, %v4529, 0
      %4562 = vmatprep.subr.mxu0 0.0
      %4563 = vmatpush1.msra.mxu0 %v4531
      %4564 = vmatprep.subr.mxu0 0.0
      %4565 = vmatpush1.msra.mxu0 0.0
      %4566 = vmatprep.subr.mxu0 0.0
      %4567 = vmatpush1.msra.mxu0 0.0
      %4568 = vmatprep.subr.mxu0 0.0
      %4569 = vmatpush1.msra.mxu0 0.0
      %4570 = vmatprep.subr.mxu0 0.0
      %4571 = vmatpush1.msra.mxu0 0.0
      %4572 = vmatprep.subr.mxu0 0.0
      %4573 = vmatpush1.msra.mxu0 0.0
      %4574 = vmatprep.subr.mxu0 0.0
      %4575 = vmatpush1.msra.mxu0 0.0
      %4576 = vmatprep.subr.mxu0 0.0
      %4577 = vmatpush1.msra.mxu0 0.0
      %4578 = vmatprep.subr.mxu0 0.0
      %4579 = vmatpush1.msra.mxu0 0.0
      %4580 = vmatprep.subr.mxu0 0.0
      %4581 = vmatpush1.msra.mxu0 0.0
      %4582 = vmatprep.subr.mxu0 0.0
      %4583 = vmatpush1.msra.mxu0 0.0
      %4584 = vmatprep.subr.mxu0 0.0
      %4585 = vmatpush1.msra.mxu0 0.0
      %4586 = vmatprep.subr.mxu0 0.0
      %4587 = vmatpush1.msra.mxu0 0.0
      %4588 = vmatprep.subr.mxu0 0.0
      %4589 = vmatpush1.msra.mxu0 0.0
      %4590 = vmatprep.subr.mxu0 0.0
      %4591 = vmatpush1.msra.mxu0 0.0
      %4592 = vmatprep.subr.mxu0 0.0
      %4593 = vmatpush1.msra.mxu0 0.0
      %4594 = vmatprep.subr.mxu0 0.0
      %4595 = vmatpush1.msra.mxu0 0.0
      %4596 = vmatprep.subr.mxu0 0.0
      %4597 = vmatpush1.msra.mxu0 0.0
      %4598 = vmatprep.subr.mxu0 0.0
      %4599 = vmatpush1.msra.mxu0 0.0
      %4600 = vmatprep.subr.mxu0 0.0
      %4601 = vmatpush1.msra.mxu0 0.0
      %4602 = vmatprep.subr.mxu0 0.0
      %4603 = vmatpush1.msra.mxu0 0.0
      %4604 = vmatprep.subr.mxu0 0.0
      %4605 = vmatpush1.msra.mxu0 0.0
      %4606 = vmatprep.subr.mxu0 0.0
      %4607 = vmatpush1.msra.mxu0 0.0
      %4608 = vmatprep.subr.mxu0 0.0
      %4609 = vmatpush1.msra.mxu0 0.0
      %4610 = vmatprep.subr.mxu0 0.0
      %4611 = vmatpush1.msra.mxu0 0.0
      %4612 = vmatprep.subr.mxu0 0.0
      %4613 = vmatpush1.msra.mxu0 0.0
      %4614 = vmatprep.subr.mxu0 0.0
      %4615 = vmatpush1.msra.mxu0 0.0
      %4616 = vmatprep.subr.mxu0 0.0
      %4617 = vmatpush1.msra.mxu0 0.0
      %4618 = vmatprep.subr.mxu0 0.0
      %4619 = vmatpush1.msra.mxu0 0.0
      %4620 = vmatprep.subr.mxu0 0.0
      %4621 = vmatpush1.msra.mxu0 0.0
      %4622 = vmatprep.subr.mxu0 0.0
      %4623 = vmatpush1.msra.mxu0 0.0
      %4624 = vmatprep.subr.mxu0 0.0
      %4625 = vmatpush1.msra.mxu0 0.0
      %4626 = vmatprep.mubr.f32.mxu0 0.0
      %4627 = vmatmul.mubr.f32.gmra.mrb[0].mxu0 %v4533
      %v4628 = vpop.f32.mrb[0].mxu0
      %v4629 = vadd.f32 0.0, %v4628
      %v4630 = vpop.f32.mrb[0].mxu0
      %4631 = vmatprep.mubr.f32.mxu0 0.0
      %4632 = vmatmul.mubr.f32.gmra.mrb[0].mxu0 %v4536
      %v4633 = vpop.f32.mrb[0].mxu0
      %v4634 = vadd.f32 0.0, %v4633
      %v4635 = vpop.f32.mrb[0].mxu0
      %4636 = vmatprep.mubr.f32.mxu0 0.0
      %4637 = vmatmul.mubr.f32.gmra.mrb[0].mxu0 %v4539
      %v4638 = vpop.f32.mrb[0].mxu0
      %v4639 = vadd.f32 0.0, %v4638
      %v4640 = vpop.f32.mrb[0].mxu0
      %4641 = vmatprep.mubr.f32.mxu0 0.0
      %4642 = vmatmul.mubr.f32.gmra.mrb[0].mxu0 %v4542
      %v4643 = vpop.f32.mrb[0].mxu0
      %v4644 = vadd.f32 0.0, %v4643
      %v4645 = vpop.f32.mrb[0].mxu0
      %4646 = vmatprep.mubr.f32.mxu0 0.0
      %4647 = vmatmul.mubr.f32.gmra.mrb[0].mxu0 %v4545
      %v4648 = vpop.f32.mrb[0].mxu0
      %v4649 = vadd.f32 0.0, %v4648
      %v4650 = vpop.f32.mrb[0].mxu0
      %4651 = vmatprep.mubr.f32.mxu0 0.0
      %4652 = vmatmul.mubr.f32.gmra.mrb[0].mxu0 %v4548
      %v4653 = vpop.f32.mrb[0].mxu0
      %v4654 = vadd.f32 0.0, %v4653
      %v4655 = vpop.f32.mrb[0].mxu0
      %4656 = vmatprep.mubr.f32.mxu0 0.0
      %4657 = vmatmul.mubr.f32.gmra.mrb[0].mxu0 %v4551
      %v4658 = vpop.f32.mrb[0].mxu0
      %v4659 = vadd.f32 0.0, %v4658
      %v4660 = vpop.f32.mrb[0].mxu0
      %4661 = vmatprep.mubr.f32.mxu0 0.0
      %4662 = vmatmul.mubr.f32.gmra.mrb[0].mxu0 %v4554
      %v4663 = vpop.f32.mrb[0].mxu0
      %v4664 = vadd.f32 0.0, %v4663
      %v4665 = vpop.f32.mrb[0].mxu0
      %4666 = vmatprep.mubr.f32.mxu0 0.0
      %4667 = vmatmul.mubr.f32.gmra.mrb[0].mxu0 %v4557
      %v4668 = vpop.f32.mrb[0].mxu0
      %v4669 = vadd.f32 0.0, %v4668
      %v4670 = vpop.f32.mrb[0].mxu0
      %4671 = vmatprep.mubr.f32.mxu0 0.0
      %4672 = vmatmul.mubr.f32.gmra.mrb[0].mxu0 %v4560
      %v4673 = vpop.f32.mrb[0].mxu0
      %v4674 = vadd.f32 0.0, %v4673
      %v4675 = vpop.f32.mrb[0].mxu0
      %4676 = vdwg.mxu0
      %v4677 = vadd.f32 %v4510, %v4629
      %v4678 = vadd.f32 %v4511, %v4634
      %v4679 = vadd.f32 %v4512, %v4639
      %v4680 = vadd.f32 %v4513, %v4644
      %v4681 = vadd.f32 %v4514, %v4649
      %v4682 = vadd.f32 %v4515, %v4654
      %v4683 = vadd.f32 %v4516, %v4659
      %v4684 = vadd.f32 %v4517, %v4664
      %v4685 = vadd.f32 %v4518, %v4669
      %v4686 = vadd.f32 %v4519, %v4674
      %v4687 = vld [vmem:[%s569 + $0x14] sm:$0xff]
      %v4688 = vld [vmem:[%s569 + $0x1c] sm:$0xff]
      %v4689 = vld [vmem:[%s569 + $0x24] sm:$0xff]
      %v4690 = vld [vmem:[%s569 + $0x2c] sm:$0xff]
      %v4691 = vld [vmem:[%s569 + $0x34] sm:$0xff]
      %v4692 = vld [vmem:[%s569 + $0x3c] sm:$0xff]
      %v4693 = vld [vmem:[%s569 + $0x44] sm:$0xff]
      %v4694 = vld [vmem:[%s569 + $0x4c] sm:$0xff]
      %v4695 = vld [vmem:[%s569 + $0x54] sm:$0xff]
      %v4696 = vld [vmem:[%s569 + $0x5c] sm:$0xff]
      %s4697 = scalar_lea.vmem %s3, 96
      %v4698 = vld [vmem:[%s4697] sm:$0xff]
      %v4700 = vsel %vm497, %v4687, 0
      %v4703 = vsel %vm497, %v4688, 0
      %v4706 = vsel %vm497, %v4689, 0
      %v4709 = vsel %vm497, %v4690, 0
      %v4712 = vsel %vm497, %v4691, 0
      %v4715 = vsel %vm497, %v4692, 0
      %v4718 = vsel %vm497, %v4693, 0
      %v4721 = vsel %vm497, %v4694, 0
      %v4724 = vsel %vm497, %v4695, 0
      %v4727 = vsel %vm497, %v4696, 0
      %4729 = vmatprep.subr.mxu0 0.0
      %4730 = vmatpush1.msra.mxu0 %v4698
      %4731 = vmatprep.subr.mxu0 0.0
      %4732 = vmatpush1.msra.mxu0 0.0
      %4733 = vmatprep.subr.mxu0 0.0
      %4734 = vmatpush1.msra.mxu0 0.0
      %4735 = vmatprep.subr.mxu0 0.0
      %4736 = vmatpush1.msra.mxu0 0.0
      %4737 = vmatprep.subr.mxu0 0.0
      %4738 = vmatpush1.msra.mxu0 0.0
      %4739 = vmatprep.subr.mxu0 0.0
      %4740 = vmatpush1.msra.mxu0 0.0
      %4741 = vmatprep.subr.mxu0 0.0
      %4742 = vmatpush1.msra.mxu0 0.0
      %4743 = vmatprep.subr.mxu0 0.0
      %4744 = vmatpush1.msra.mxu0 0.0
      %4745 = vmatprep.subr.mxu0 0.0
      %4746 = vmatpush1.msra.mxu0 0.0
      %4747 = vmatprep.subr.mxu0 0.0
      %4748 = vmatpush1.msra.mxu0 0.0
      %4749 = vmatprep.subr.mxu0 0.0
      %4750 = vmatpush1.msra.mxu0 0.0
      %4751 = vmatprep.subr.mxu0 0.0
      %4752 = vmatpush1.msra.mxu0 0.0
      %4753 = vmatprep.subr.mxu0 0.0
      %4754 = vmatpush1.msra.mxu0 0.0
      %4755 = vmatprep.subr.mxu0 0.0
      %4756 = vmatpush1.msra.mxu0 0.0
      %4757 = vmatprep.subr.mxu0 0.0
      %4758 = vmatpush1.msra.mxu0 0.0
      %4759 = vmatprep.subr.mxu0 0.0
      %4760 = vmatpush1.msra.mxu0 0.0
      %4761 = vmatprep.subr.mxu0 0.0
      %4762 = vmatpush1.msra.mxu0 0.0
      %4763 = vmatprep.subr.mxu0 0.0
      %4764 = vmatpush1.msra.mxu0 0.0
      %4765 = vmatprep.subr.mxu0 0.0
      %4766 = vmatpush1.msra.mxu0 0.0
      %4767 = vmatprep.subr.mxu0 0.0
      %4768 = vmatpush1.msra.mxu0 0.0
      %4769 = vmatprep.subr.mxu0 0.0
      %4770 = vmatpush1.msra.mxu0 0.0
      %4771 = vmatprep.subr.mxu0 0.0
      %4772 = vmatpush1.msra.mxu0 0.0
      %4773 = vmatprep.subr.mxu0 0.0
      %4774 = vmatpush1.msra.mxu0 0.0
      %4775 = vmatprep.subr.mxu0 0.0
      %4776 = vmatpush1.msra.mxu0 0.0
      %4777 = vmatprep.subr.mxu0 0.0
      %4778 = vmatpush1.msra.mxu0 0.0
      %4779 = vmatprep.subr.mxu0 0.0
      %4780 = vmatpush1.msra.mxu0 0.0
      %4781 = vmatprep.subr.mxu0 0.0
      %4782 = vmatpush1.msra.mxu0 0.0
      %4783 = vmatprep.subr.mxu0 0.0
      %4784 = vmatpush1.msra.mxu0 0.0
      %4785 = vmatprep.subr.mxu0 0.0
      %4786 = vmatpush1.msra.mxu0 0.0
      %4787 = vmatprep.subr.mxu0 0.0
      %4788 = vmatpush1.msra.mxu0 0.0
      %4789 = vmatprep.subr.mxu0 0.0
      %4790 = vmatpush1.msra.mxu0 0.0
      %4791 = vmatprep.subr.mxu0 0.0
      %4792 = vmatpush1.msra.mxu0 0.0
      %4793 = vmatprep.mubr.f32.mxu0 0.0
      %4794 = vmatmul.mubr.f32.gmra.mrb[0].mxu0 %v4700
      %v4795 = vpop.f32.mrb[0].mxu0
      %v4796 = vadd.f32 0.0, %v4795
      %v4797 = vpop.f32.mrb[0].mxu0
      %4798 = vmatprep.mubr.f32.mxu0 0.0
      %4799 = vmatmul.mubr.f32.gmra.mrb[0].mxu0 %v4703
      %v4800 = vpop.f32.mrb[0].mxu0
      %v4801 = vadd.f32 0.0, %v4800
      %v4802 = vpop.f32.mrb[0].mxu0
      %4803 = vmatprep.mubr.f32.mxu0 0.0
      %4804 = vmatmul.mubr.f32.gmra.mrb[0].mxu0 %v4706
      %v4805 = vpop.f32.mrb[0].mxu0
      %v4806 = vadd.f32 0.0, %v4805
      %v4807 = vpop.f32.mrb[0].mxu0
      %4808 = vmatprep.mubr.f32.mxu0 0.0
      %4809 = vmatmul.mubr.f32.gmra.mrb[0].mxu0 %v4709
      %v4810 = vpop.f32.mrb[0].mxu0
      %v4811 = vadd.f32 0.0, %v4810
      %v4812 = vpop.f32.mrb[0].mxu0
      %4813 = vmatprep.mubr.f32.mxu0 0.0
      %4814 = vmatmul.mubr.f32.gmra.mrb[0].mxu0 %v4712
      %v4815 = vpop.f32.mrb[0].mxu0
      %v4816 = vadd.f32 0.0, %v4815
      %v4817 = vpop.f32.mrb[0].mxu0
      %4818 = vmatprep.mubr.f32.mxu0 0.0
      %4819 = vmatmul.mubr.f32.gmra.mrb[0].mxu0 %v4715
      %v4820 = vpop.f32.mrb[0].mxu0
      %v4821 = vadd.f32 0.0, %v4820
      %v4822 = vpop.f32.mrb[0].mxu0
      %4823 = vmatprep.mubr.f32.mxu0 0.0
      %4824 = vmatmul.mubr.f32.gmra.mrb[0].mxu0 %v4718
      %v4825 = vpop.f32.mrb[0].mxu0
      %v4826 = vadd.f32 0.0, %v4825
      %v4827 = vpop.f32.mrb[0].mxu0
      %4828 = vmatprep.mubr.f32.mxu0 0.0
      %4829 = vmatmul.mubr.f32.gmra.mrb[0].mxu0 %v4721
      %v4830 = vpop.f32.mrb[0].mxu0
      %v4831 = vadd.f32 0.0, %v4830
      %v4832 = vpop.f32.mrb[0].mxu0
      %4833 = vmatprep.mubr.f32.mxu0 0.0
      %4834 = vmatmul.mubr.f32.gmra.mrb[0].mxu0 %v4724
      %v4835 = vpop.f32.mrb[0].mxu0
      %v4836 = vadd.f32 0.0, %v4835
      %v4837 = vpop.f32.mrb[0].mxu0
      %4838 = vmatprep.mubr.f32.mxu0 0.0
      %4839 = vmatmul.mubr.f32.gmra.mrb[0].mxu0 %v4727
      %v4840 = vpop.f32.mrb[0].mxu0
      %v4841 = vadd.f32 0.0, %v4840
      %v4842 = vpop.f32.mrb[0].mxu0
      %4843 = vdwg.mxu0
      %v4844 = vadd.f32 %v4677, %v4796
      %v4845 = vadd.f32 %v4678, %v4801
      %v4846 = vadd.f32 %v4679, %v4806
      %v4847 = vadd.f32 %v4680, %v4811
      %v4848 = vadd.f32 %v4681, %v4816
      %v4849 = vadd.f32 %v4682, %v4821
      %v4850 = vadd.f32 %v4683, %v4826
      %v4851 = vadd.f32 %v4684, %v4831
      %v4852 = vadd.f32 %v4685, %v4836
      %v4853 = vadd.f32 %v4686, %v4841
      %v4854 = vld [vmem:[%s2181 + $0x14] sm:$0xff]
      %v4855 = vld [vmem:[%s2181 + $0x1c] sm:$0xff]
      %v4856 = vld [vmem:[%s2181 + $0x24] sm:$0xff]
      %v4857 = vld [vmem:[%s2181 + $0x2c] sm:$0xff]
      %v4858 = vld [vmem:[%s2181 + $0x34] sm:$0xff]
      %v4859 = vld [vmem:[%s2181 + $0x3c] sm:$0xff]
      %v4860 = vld [vmem:[%s2181 + $0x44] sm:$0xff]
      %v4861 = vld [vmem:[%s2181 + $0x4c] sm:$0xff]
      %v4862 = vld [vmem:[%s2181 + $0x54] sm:$0xff]
      %v4863 = vld [vmem:[%s2181 + $0x5c] sm:$0xff]
      %s4864 = scalar_lea.vmem %s4, 96
      %v4865 = vld [vmem:[%s4864] sm:$0xff]
      %v4867 = vsel %vm497, %v4854, 0
      %v4870 = vsel %vm497, %v4855, 0
      %v4873 = vsel %vm497, %v4856, 0
      %v4876 = vsel %vm497, %v4857, 0
      %v4879 = vsel %vm497, %v4858, 0
      %v4882 = vsel %vm497, %v4859, 0
      %v4885 = vsel %vm497, %v4860, 0
      %v4888 = vsel %vm497, %v4861, 0
      %v4891 = vsel %vm497, %v4862, 0
      %v4894 = vsel %vm497, %v4863, 0
      %4896 = vmatprep.subr.mxu0 0.0
      %4897 = vmatpush1.msra.mxu0 %v4865
      %4898 = vmatprep.subr.mxu0 0.0
      %4899 = vmatpush1.msra.mxu0 0.0
      %4900 = vmatprep.subr.mxu0 0.0
      %4901 = vmatpush1.msra.mxu0 0.0
      %4902 = vmatprep.subr.mxu0 0.0
      %4903 = vmatpush1.msra.mxu0 0.0
      %4904 = vmatprep.subr.mxu0 0.0
      %4905 = vmatpush1.msra.mxu0 0.0
      %4906 = vmatprep.subr.mxu0 0.0
      %4907 = vmatpush1.msra.mxu0 0.0
      %4908 = vmatprep.subr.mxu0 0.0
      %4909 = vmatpush1.msra.mxu0 0.0
      %4910 = vmatprep.subr.mxu0 0.0
      %4911 = vmatpush1.msra.mxu0 0.0
      %4912 = vmatprep.subr.mxu0 0.0
      %4913 = vmatpush1.msra.mxu0 0.0
      %4914 = vmatprep.subr.mxu0 0.0
      %4915 = vmatpush1.msra.mxu0 0.0
      %4916 = vmatprep.subr.mxu0 0.0
      %4917 = vmatpush1.msra.mxu0 0.0
      %4918 = vmatprep.subr.mxu0 0.0
      %4919 = vmatpush1.msra.mxu0 0.0
      %4920 = vmatprep.subr.mxu0 0.0
      %4921 = vmatpush1.msra.mxu0 0.0
      %4922 = vmatprep.subr.mxu0 0.0
      %4923 = vmatpush1.msra.mxu0 0.0
      %4924 = vmatprep.subr.mxu0 0.0
      %4925 = vmatpush1.msra.mxu0 0.0
      %4926 = vmatprep.subr.mxu0 0.0
      %4927 = vmatpush1.msra.mxu0 0.0
      %4928 = vmatprep.subr.mxu0 0.0
      %4929 = vmatpush1.msra.mxu0 0.0
      %4930 = vmatprep.subr.mxu0 0.0
      %4931 = vmatpush1.msra.mxu0 0.0
      %4932 = vmatprep.subr.mxu0 0.0
      %4933 = vmatpush1.msra.mxu0 0.0
      %4934 = vmatprep.subr.mxu0 0.0
      %4935 = vmatpush1.msra.mxu0 0.0
      %4936 = vmatprep.subr.mxu0 0.0
      %4937 = vmatpush1.msra.mxu0 0.0
      %4938 = vmatprep.subr.mxu0 0.0
      %4939 = vmatpush1.msra.mxu0 0.0
      %4940 = vmatprep.subr.mxu0 0.0
      %4941 = vmatpush1.msra.mxu0 0.0
      %4942 = vmatprep.subr.mxu0 0.0
      %4943 = vmatpush1.msra.mxu0 0.0
      %4944 = vmatprep.subr.mxu0 0.0
      %4945 = vmatpush1.msra.mxu0 0.0
      %4946 = vmatprep.subr.mxu0 0.0
      %4947 = vmatpush1.msra.mxu0 0.0
      %4948 = vmatprep.subr.mxu0 0.0
      %4949 = vmatpush1.msra.mxu0 0.0
      %4950 = vmatprep.subr.mxu0 0.0
      %4951 = vmatpush1.msra.mxu0 0.0
      %4952 = vmatprep.subr.mxu0 0.0
      %4953 = vmatpush1.msra.mxu0 0.0
      %4954 = vmatprep.subr.mxu0 0.0
      %4955 = vmatpush1.msra.mxu0 0.0
      %4956 = vmatprep.subr.mxu0 0.0
      %4957 = vmatpush1.msra.mxu0 0.0
      %4958 = vmatprep.subr.mxu0 0.0
      %4959 = vmatpush1.msra.mxu0 0.0
      %4960 = vmatprep.mubr.f32.mxu0 0.0
      %4961 = vmatmul.mubr.f32.gmra.mrb[0].mxu0 %v4867
      %v4962 = vpop.f32.mrb[0].mxu0
      %v4963 = vadd.f32 0.0, %v4962
      %v4964 = vpop.f32.mrb[0].mxu0
      %4965 = vmatprep.mubr.f32.mxu0 0.0
      %4966 = vmatmul.mubr.f32.gmra.mrb[0].mxu0 %v4870
      %v4967 = vpop.f32.mrb[0].mxu0
      %v4968 = vadd.f32 0.0, %v4967
      %v4969 = vpop.f32.mrb[0].mxu0
      %4970 = vmatprep.mubr.f32.mxu0 0.0
      %4971 = vmatmul.mubr.f32.gmra.mrb[0].mxu0 %v4873
      %v4972 = vpop.f32.mrb[0].mxu0
      %v4973 = vadd.f32 0.0, %v4972
      %v4974 = vpop.f32.mrb[0].mxu0
      %4975 = vmatprep.mubr.f32.mxu0 0.0
      %4976 = vmatmul.mubr.f32.gmra.mrb[0].mxu0 %v4876
      %v4977 = vpop.f32.mrb[0].mxu0
      %v4978 = vadd.f32 0.0, %v4977
      %v4979 = vpop.f32.mrb[0].mxu0
      %4980 = vmatprep.mubr.f32.mxu0 0.0
      %4981 = vmatmul.mubr.f32.gmra.mrb[0].mxu0 %v4879
      %v4982 = vpop.f32.mrb[0].mxu0
      %v4983 = vadd.f32 0.0, %v4982
      %v4984 = vpop.f32.mrb[0].mxu0
      %4985 = vmatprep.mubr.f32.mxu0 0.0
      %4986 = vmatmul.mubr.f32.gmra.mrb[0].mxu0 %v4882
      %v4987 = vpop.f32.mrb[0].mxu0
      %v4988 = vadd.f32 0.0, %v4987
      %v4989 = vpop.f32.mrb[0].mxu0
      %4990 = vmatprep.mubr.f32.mxu0 0.0
      %4991 = vmatmul.mubr.f32.gmra.mrb[0].mxu0 %v4885
      %v4992 = vpop.f32.mrb[0].mxu0
      %v4993 = vadd.f32 0.0, %v4992
      %v4994 = vpop.f32.mrb[0].mxu0
      %4995 = vmatprep.mubr.f32.mxu0 0.0
      %4996 = vmatmul.mubr.f32.gmra.mrb[0].mxu0 %v4888
      %v4997 = vpop.f32.mrb[0].mxu0
      %v4998 = vadd.f32 0.0, %v4997
      %v4999 = vpop.f32.mrb[0].mxu0
      %5000 = vmatprep.mubr.f32.mxu0 0.0
      %5001 = vmatmul.mubr.f32.gmra.mrb[0].mxu0 %v4891
      %v5002 = vpop.f32.mrb[0].mxu0
      %v5003 = vadd.f32 0.0, %v5002
      %v5004 = vpop.f32.mrb[0].mxu0
      %5005 = vmatprep.mubr.f32.mxu0 0.0
      %5006 = vmatmul.mubr.f32.gmra.mrb[0].mxu0 %v4894
      %v5007 = vpop.f32.mrb[0].mxu0
      %v5008 = vadd.f32 0.0, %v5007
      %v5009 = vpop.f32.mrb[0].mxu0
      %5010 = vdwg.mxu0
      %v5011 = vadd.f32 %v4844, %v4963
      %v5012 = vadd.f32 %v4845, %v4968
      %v5013 = vadd.f32 %v4846, %v4973
      %v5014 = vadd.f32 %v4847, %v4978
      %v5015 = vadd.f32 %v4848, %v4983
      %v5016 = vadd.f32 %v4849, %v4988
      %v5017 = vadd.f32 %v4850, %v4993
      %v5018 = vadd.f32 %v4851, %v4998
      %v5019 = vadd.f32 %v4852, %v5003
      %v5020 = vadd.f32 %v4853, %v5008
      %v5021 = vld [vmem:[#allocation2 + $0x15] sm:$0xff]
      %v5022 = vld [vmem:[#allocation2 + $0x1d] sm:$0xff]
      %v5023 = vld [vmem:[#allocation2 + $0x25] sm:$0xff]
      %v5024 = vld [vmem:[#allocation2 + $0x2d] sm:$0xff]
      %v5025 = vld [vmem:[#allocation2 + $0x35] sm:$0xff]
      %v5026 = vld [vmem:[#allocation2 + $0x3d] sm:$0xff]
      %v5027 = vld [vmem:[#allocation2 + $0x45] sm:$0xff]
      %v5028 = vld [vmem:[#allocation2 + $0x4d] sm:$0xff]
      %v5029 = vld [vmem:[#allocation2 + $0x55] sm:$0xff]
      %v5030 = vld [vmem:[#allocation2 + $0x5d] sm:$0xff]
      %s5031 = scalar_lea.vmem %s3, 104
      %v5032 = vld [vmem:[%s5031] sm:$0xff]
      %v5034 = vsel %vm497, %v5021, 0
      %v5037 = vsel %vm497, %v5022, 0
      %v5040 = vsel %vm497, %v5023, 0
      %v5043 = vsel %vm497, %v5024, 0
      %v5046 = vsel %vm497, %v5025, 0
      %v5049 = vsel %vm497, %v5026, 0
      %v5052 = vsel %vm497, %v5027, 0
      %v5055 = vsel %vm497, %v5028, 0
      %v5058 = vsel %vm497, %v5029, 0
      %v5061 = vsel %vm497, %v5030, 0
      %5063 = vmatprep.subr.mxu0 0.0
      %5064 = vmatpush1.msra.mxu0 %v5032
      %5065 = vmatprep.subr.mxu0 0.0
      %5066 = vmatpush1.msra.mxu0 0.0
      %5067 = vmatprep.subr.mxu0 0.0
      %5068 = vmatpush1.msra.mxu0 0.0
      %5069 = vmatprep.subr.mxu0 0.0
      %5070 = vmatpush1.msra.mxu0 0.0
      %5071 = vmatprep.subr.mxu0 0.0
      %5072 = vmatpush1.msra.mxu0 0.0
      %5073 = vmatprep.subr.mxu0 0.0
      %5074 = vmatpush1.msra.mxu0 0.0
      %5075 = vmatprep.subr.mxu0 0.0
      %5076 = vmatpush1.msra.mxu0 0.0
      %5077 = vmatprep.subr.mxu0 0.0
      %5078 = vmatpush1.msra.mxu0 0.0
      %5079 = vmatprep.subr.mxu0 0.0
      %5080 = vmatpush1.msra.mxu0 0.0
      %5081 = vmatprep.subr.mxu0 0.0
      %5082 = vmatpush1.msra.mxu0 0.0
      %5083 = vmatprep.subr.mxu0 0.0
      %5084 = vmatpush1.msra.mxu0 0.0
      %5085 = vmatprep.subr.mxu0 0.0
      %5086 = vmatpush1.msra.mxu0 0.0
      %5087 = vmatprep.subr.mxu0 0.0
      %5088 = vmatpush1.msra.mxu0 0.0
      %5089 = vmatprep.subr.mxu0 0.0
      %5090 = vmatpush1.msra.mxu0 0.0
      %5091 = vmatprep.subr.mxu0 0.0
      %5092 = vmatpush1.msra.mxu0 0.0
      %5093 = vmatprep.subr.mxu0 0.0
      %5094 = vmatpush1.msra.mxu0 0.0
      %5095 = vmatprep.subr.mxu0 0.0
      %5096 = vmatpush1.msra.mxu0 0.0
      %5097 = vmatprep.subr.mxu0 0.0
      %5098 = vmatpush1.msra.mxu0 0.0
      %5099 = vmatprep.subr.mxu0 0.0
      %5100 = vmatpush1.msra.mxu0 0.0
      %5101 = vmatprep.subr.mxu0 0.0
      %5102 = vmatpush1.msra.mxu0 0.0
      %5103 = vmatprep.subr.mxu0 0.0
      %5104 = vmatpush1.msra.mxu0 0.0
      %5105 = vmatprep.subr.mxu0 0.0
      %5106 = vmatpush1.msra.mxu0 0.0
      %5107 = vmatprep.subr.mxu0 0.0
      %5108 = vmatpush1.msra.mxu0 0.0
      %5109 = vmatprep.subr.mxu0 0.0
      %5110 = vmatpush1.msra.mxu0 0.0
      %5111 = vmatprep.subr.mxu0 0.0
      %5112 = vmatpush1.msra.mxu0 0.0
      %5113 = vmatprep.subr.mxu0 0.0
      %5114 = vmatpush1.msra.mxu0 0.0
      %5115 = vmatprep.subr.mxu0 0.0
      %5116 = vmatpush1.msra.mxu0 0.0
      %5117 = vmatprep.subr.mxu0 0.0
      %5118 = vmatpush1.msra.mxu0 0.0
      %5119 = vmatprep.subr.mxu0 0.0
      %5120 = vmatpush1.msra.mxu0 0.0
      %5121 = vmatprep.subr.mxu0 0.0
      %5122 = vmatpush1.msra.mxu0 0.0
      %5123 = vmatprep.subr.mxu0 0.0
      %5124 = vmatpush1.msra.mxu0 0.0
      %5125 = vmatprep.subr.mxu0 0.0
      %5126 = vmatpush1.msra.mxu0 0.0
      %5127 = vmatprep.mubr.f32.mxu0 0.0
      %5128 = vmatmul.mubr.f32.gmra.mrb[0].mxu0 %v5034
      %v5129 = vpop.f32.mrb[0].mxu0
      %v5130 = vadd.f32 0.0, %v5129
      %v5131 = vpop.f32.mrb[0].mxu0
      %5132 = vmatprep.mubr.f32.mxu0 0.0
      %5133 = vmatmul.mubr.f32.gmra.mrb[0].mxu0 %v5037
      %v5134 = vpop.f32.mrb[0].mxu0
      %v5135 = vadd.f32 0.0, %v5134
      %v5136 = vpop.f32.mrb[0].mxu0
      %5137 = vmatprep.mubr.f32.mxu0 0.0
      %5138 = vmatmul.mubr.f32.gmra.mrb[0].mxu0 %v5040
      %v5139 = vpop.f32.mrb[0].mxu0
      %v5140 = vadd.f32 0.0, %v5139
      %v5141 = vpop.f32.mrb[0].mxu0
      %5142 = vmatprep.mubr.f32.mxu0 0.0
      %5143 = vmatmul.mubr.f32.gmra.mrb[0].mxu0 %v5043
      %v5144 = vpop.f32.mrb[0].mxu0
      %v5145 = vadd.f32 0.0, %v5144
      %v5146 = vpop.f32.mrb[0].mxu0
      %5147 = vmatprep.mubr.f32.mxu0 0.0
      %5148 = vmatmul.mubr.f32.gmra.mrb[0].mxu0 %v5046
      %v5149 = vpop.f32.mrb[0].mxu0
      %v5150 = vadd.f32 0.0, %v5149
      %v5151 = vpop.f32.mrb[0].mxu0
      %5152 = vmatprep.mubr.f32.mxu0 0.0
      %5153 = vmatmul.mubr.f32.gmra.mrb[0].mxu0 %v5049
      %v5154 = vpop.f32.mrb[0].mxu0
      %v5155 = vadd.f32 0.0, %v5154
      %v5156 = vpop.f32.mrb[0].mxu0
      %5157 = vmatprep.mubr.f32.mxu0 0.0
      %5158 = vmatmul.mubr.f32.gmra.mrb[0].mxu0 %v5052
      %v5159 = vpop.f32.mrb[0].mxu0
      %v5160 = vadd.f32 0.0, %v5159
      %v5161 = vpop.f32.mrb[0].mxu0
      %5162 = vmatprep.mubr.f32.mxu0 0.0
      %5163 = vmatmul.mubr.f32.gmra.mrb[0].mxu0 %v5055
      %v5164 = vpop.f32.mrb[0].mxu0
      %v5165 = vadd.f32 0.0, %v5164
      %v5166 = vpop.f32.mrb[0].mxu0
      %5167 = vmatprep.mubr.f32.mxu0 0.0
      %5168 = vmatmul.mubr.f32.gmra.mrb[0].mxu0 %v5058
      %v5169 = vpop.f32.mrb[0].mxu0
      %v5170 = vadd.f32 0.0, %v5169
      %v5171 = vpop.f32.mrb[0].mxu0
      %5172 = vmatprep.mubr.f32.mxu0 0.0
      %5173 = vmatmul.mubr.f32.gmra.mrb[0].mxu0 %v5061
      %v5174 = vpop.f32.mrb[0].mxu0
      %v5175 = vadd.f32 0.0, %v5174
      %v5176 = vpop.f32.mrb[0].mxu0
      %5177 = vdwg.mxu0
      %v5178 = vadd.f32 %v5011, %v5130
      %v5179 = vadd.f32 %v5012, %v5135
      %v5180 = vadd.f32 %v5013, %v5140
      %v5181 = vadd.f32 %v5014, %v5145
      %v5182 = vadd.f32 %v5015, %v5150
      %v5183 = vadd.f32 %v5016, %v5155
      %v5184 = vadd.f32 %v5017, %v5160
      %v5185 = vadd.f32 %v5018, %v5165
      %v5186 = vadd.f32 %v5019, %v5170
      %v5187 = vadd.f32 %v5020, %v5175
      %v5188 = vld [vmem:[%s293 + $0x15] sm:$0xff]
      %v5189 = vld [vmem:[%s293 + $0x1d] sm:$0xff]
      %v5190 = vld [vmem:[%s293 + $0x25] sm:$0xff]
      %v5191 = vld [vmem:[%s293 + $0x2d] sm:$0xff]
      %v5192 = vld [vmem:[%s293 + $0x35] sm:$0xff]
      %v5193 = vld [vmem:[%s293 + $0x3d] sm:$0xff]
      %v5194 = vld [vmem:[%s293 + $0x45] sm:$0xff]
      %v5195 = vld [vmem:[%s293 + $0x4d] sm:$0xff]
      %v5196 = vld [vmem:[%s293 + $0x55] sm:$0xff]
      %v5197 = vld [vmem:[%s293 + $0x5d] sm:$0xff]
      %s5198 = scalar_lea.vmem %s4, 104
      %v5199 = vld [vmem:[%s5198] sm:$0xff]
      %v5201 = vsel %vm497, %v5188, 0
      %v5204 = vsel %vm497, %v5189, 0
      %v5207 = vsel %vm497, %v5190, 0
      %v5210 = vsel %vm497, %v5191, 0
      %v5213 = vsel %vm497, %v5192, 0
      %v5216 = vsel %vm497, %v5193, 0
      %v5219 = vsel %vm497, %v5194, 0
      %v5222 = vsel %vm497, %v5195, 0
      %v5225 = vsel %vm497, %v5196, 0
      %v5228 = vsel %vm497, %v5197, 0
      %5230 = vmatprep.subr.mxu0 0.0
      %5231 = vmatpush1.msra.mxu0 %v5199
      %5232 = vmatprep.subr.mxu0 0.0
      %5233 = vmatpush1.msra.mxu0 0.0
      %5234 = vmatprep.subr.mxu0 0.0
      %5235 = vmatpush1.msra.mxu0 0.0
      %5236 = vmatprep.subr.mxu0 0.0
      %5237 = vmatpush1.msra.mxu0 0.0
      %5238 = vmatprep.subr.mxu0 0.0
      %5239 = vmatpush1.msra.mxu0 0.0
      %5240 = vmatprep.subr.mxu0 0.0
      %5241 = vmatpush1.msra.mxu0 0.0
      %5242 = vmatprep.subr.mxu0 0.0
      %5243 = vmatpush1.msra.mxu0 0.0
      %5244 = vmatprep.subr.mxu0 0.0
      %5245 = vmatpush1.msra.mxu0 0.0
      %5246 = vmatprep.subr.mxu0 0.0
      %5247 = vmatpush1.msra.mxu0 0.0
      %5248 = vmatprep.subr.mxu0 0.0
      %5249 = vmatpush1.msra.mxu0 0.0
      %5250 = vmatprep.subr.mxu0 0.0
      %5251 = vmatpush1.msra.mxu0 0.0
      %5252 = vmatprep.subr.mxu0 0.0
      %5253 = vmatpush1.msra.mxu0 0.0
      %5254 = vmatprep.subr.mxu0 0.0
      %5255 = vmatpush1.msra.mxu0 0.0
      %5256 = vmatprep.subr.mxu0 0.0
      %5257 = vmatpush1.msra.mxu0 0.0
      %5258 = vmatprep.subr.mxu0 0.0
      %5259 = vmatpush1.msra.mxu0 0.0
      %5260 = vmatprep.subr.mxu0 0.0
      %5261 = vmatpush1.msra.mxu0 0.0
      %5262 = vmatprep.subr.mxu0 0.0
      %5263 = vmatpush1.msra.mxu0 0.0
      %5264 = vmatprep.subr.mxu0 0.0
      %5265 = vmatpush1.msra.mxu0 0.0
      %5266 = vmatprep.subr.mxu0 0.0
      %5267 = vmatpush1.msra.mxu0 0.0
      %5268 = vmatprep.subr.mxu0 0.0
      %5269 = vmatpush1.msra.mxu0 0.0
      %5270 = vmatprep.subr.mxu0 0.0
      %5271 = vmatpush1.msra.mxu0 0.0
      %5272 = vmatprep.subr.mxu0 0.0
      %5273 = vmatpush1.msra.mxu0 0.0
      %5274 = vmatprep.subr.mxu0 0.0
      %5275 = vmatpush1.msra.mxu0 0.0
      %5276 = vmatprep.subr.mxu0 0.0
      %5277 = vmatpush1.msra.mxu0 0.0
      %5278 = vmatprep.subr.mxu0 0.0
      %5279 = vmatpush1.msra.mxu0 0.0
      %5280 = vmatprep.subr.mxu0 0.0
      %5281 = vmatpush1.msra.mxu0 0.0
      %5282 = vmatprep.subr.mxu0 0.0
      %5283 = vmatpush1.msra.mxu0 0.0
      %5284 = vmatprep.subr.mxu0 0.0
      %5285 = vmatpush1.msra.mxu0 0.0
      %5286 = vmatprep.subr.mxu0 0.0
      %5287 = vmatpush1.msra.mxu0 0.0
      %5288 = vmatprep.subr.mxu0 0.0
      %5289 = vmatpush1.msra.mxu0 0.0
      %5290 = vmatprep.subr.mxu0 0.0
      %5291 = vmatpush1.msra.mxu0 0.0
      %5292 = vmatprep.subr.mxu0 0.0
      %5293 = vmatpush1.msra.mxu0 0.0
      %5294 = vmatprep.mubr.f32.mxu0 0.0
      %5295 = vmatmul.mubr.f32.gmra.mrb[0].mxu0 %v5201
      %v5296 = vpop.f32.mrb[0].mxu0
      %v5297 = vadd.f32 0.0, %v5296
      %v5298 = vpop.f32.mrb[0].mxu0
      %5299 = vmatprep.mubr.f32.mxu0 0.0
      %5300 = vmatmul.mubr.f32.gmra.mrb[0].mxu0 %v5204
      %v5301 = vpop.f32.mrb[0].mxu0
      %v5302 = vadd.f32 0.0, %v5301
      %v5303 = vpop.f32.mrb[0].mxu0
      %5304 = vmatprep.mubr.f32.mxu0 0.0
      %5305 = vmatmul.mubr.f32.gmra.mrb[0].mxu0 %v5207
      %v5306 = vpop.f32.mrb[0].mxu0
      %v5307 = vadd.f32 0.0, %v5306
      %v5308 = vpop.f32.mrb[0].mxu0
      %5309 = vmatprep.mubr.f32.mxu0 0.0
      %5310 = vmatmul.mubr.f32.gmra.mrb[0].mxu0 %v5210
      %v5311 = vpop.f32.mrb[0].mxu0
      %v5312 = vadd.f32 0.0, %v5311
      %v5313 = vpop.f32.mrb[0].mxu0
      %5314 = vmatprep.mubr.f32.mxu0 0.0
      %5315 = vmatmul.mubr.f32.gmra.mrb[0].mxu0 %v5213
      %v5316 = vpop.f32.mrb[0].mxu0
      %v5317 = vadd.f32 0.0, %v5316
      %v5318 = vpop.f32.mrb[0].mxu0
      %5319 = vmatprep.mubr.f32.mxu0 0.0
      %5320 = vmatmul.mubr.f32.gmra.mrb[0].mxu0 %v5216
      %v5321 = vpop.f32.mrb[0].mxu0
      %v5322 = vadd.f32 0.0, %v5321
      %v5323 = vpop.f32.mrb[0].mxu0
      %5324 = vmatprep.mubr.f32.mxu0 0.0
      %5325 = vmatmul.mubr.f32.gmra.mrb[0].mxu0 %v5219
      %v5326 = vpop.f32.mrb[0].mxu0
      %v5327 = vadd.f32 0.0, %v5326
      %v5328 = vpop.f32.mrb[0].mxu0
      %5329 = vmatprep.mubr.f32.mxu0 0.0
      %5330 = vmatmul.mubr.f32.gmra.mrb[0].mxu0 %v5222
      %v5331 = vpop.f32.mrb[0].mxu0
      %v5332 = vadd.f32 0.0, %v5331
      %v5333 = vpop.f32.mrb[0].mxu0
      %5334 = vmatprep.mubr.f32.mxu0 0.0
      %5335 = vmatmul.mubr.f32.gmra.mrb[0].mxu0 %v5225
      %v5336 = vpop.f32.mrb[0].mxu0
      %v5337 = vadd.f32 0.0, %v5336
      %v5338 = vpop.f32.mrb[0].mxu0
      %5339 = vmatprep.mubr.f32.mxu0 0.0
      %5340 = vmatmul.mubr.f32.gmra.mrb[0].mxu0 %v5228
      %v5341 = vpop.f32.mrb[0].mxu0
      %v5342 = vadd.f32 0.0, %v5341
      %v5343 = vpop.f32.mrb[0].mxu0
      %5344 = vdwg.mxu0
      %v5345 = vadd.f32 %v5178, %v5297
      %v5346 = vadd.f32 %v5179, %v5302
      %v5347 = vadd.f32 %v5180, %v5307
      %v5348 = vadd.f32 %v5181, %v5312
      %v5349 = vadd.f32 %v5182, %v5317
      %v5350 = vadd.f32 %v5183, %v5322
      %v5351 = vadd.f32 %v5184, %v5327
      %v5352 = vadd.f32 %v5185, %v5332
      %v5353 = vadd.f32 %v5186, %v5337
      %v5354 = vadd.f32 %v5187, %v5342
      %v5355 = vld [vmem:[%s569 + $0x15] sm:$0xff]
      %v5356 = vld [vmem:[%s569 + $0x1d] sm:$0xff]
      %v5357 = vld [vmem:[%s569 + $0x25] sm:$0xff]
      %v5358 = vld [vmem:[%s569 + $0x2d] sm:$0xff]
      %v5359 = vld [vmem:[%s569 + $0x35] sm:$0xff]
      %v5360 = vld [vmem:[%s569 + $0x3d] sm:$0xff]
      %v5361 = vld [vmem:[%s569 + $0x45] sm:$0xff]
      %v5362 = vld [vmem:[%s569 + $0x4d] sm:$0xff]
      %v5363 = vld [vmem:[%s569 + $0x55] sm:$0xff]
      %v5364 = vld [vmem:[%s569 + $0x5d] sm:$0xff]
      %s5365 = scalar_lea.vmem %s3, 112
      %v5366 = vld [vmem:[%s5365] sm:$0xff]
      %v5368 = vsel %vm497, %v5355, 0
      %v5371 = vsel %vm497, %v5356, 0
      %v5374 = vsel %vm497, %v5357, 0
      %v5377 = vsel %vm497, %v5358, 0
      %v5380 = vsel %vm497, %v5359, 0
      %v5383 = vsel %vm497, %v5360, 0
      %v5386 = vsel %vm497, %v5361, 0
      %v5389 = vsel %vm497, %v5362, 0
      %v5392 = vsel %vm497, %v5363, 0
      %v5395 = vsel %vm497, %v5364, 0
      %5397 = vmatprep.subr.mxu0 0.0
      %5398 = vmatpush1.msra.mxu0 %v5366
      %5399 = vmatprep.subr.mxu0 0.0
      %5400 = vmatpush1.msra.mxu0 0.0
      %5401 = vmatprep.subr.mxu0 0.0
      %5402 = vmatpush1.msra.mxu0 0.0
      %5403 = vmatprep.subr.mxu0 0.0
      %5404 = vmatpush1.msra.mxu0 0.0
      %5405 = vmatprep.subr.mxu0 0.0
      %5406 = vmatpush1.msra.mxu0 0.0
      %5407 = vmatprep.subr.mxu0 0.0
      %5408 = vmatpush1.msra.mxu0 0.0
      %5409 = vmatprep.subr.mxu0 0.0
      %5410 = vmatpush1.msra.mxu0 0.0
      %5411 = vmatprep.subr.mxu0 0.0
      %5412 = vmatpush1.msra.mxu0 0.0
      %5413 = vmatprep.subr.mxu0 0.0
      %5414 = vmatpush1.msra.mxu0 0.0
      %5415 = vmatprep.subr.mxu0 0.0
      %5416 = vmatpush1.msra.mxu0 0.0
      %5417 = vmatprep.subr.mxu0 0.0
      %5418 = vmatpush1.msra.mxu0 0.0
      %5419 = vmatprep.subr.mxu0 0.0
      %5420 = vmatpush1.msra.mxu0 0.0
      %5421 = vmatprep.subr.mxu0 0.0
      %5422 = vmatpush1.msra.mxu0 0.0
      %5423 = vmatprep.subr.mxu0 0.0
      %5424 = vmatpush1.msra.mxu0 0.0
      %5425 = vmatprep.subr.mxu0 0.0
      %5426 = vmatpush1.msra.mxu0 0.0
      %5427 = vmatprep.subr.mxu0 0.0
      %5428 = vmatpush1.msra.mxu0 0.0
      %5429 = vmatprep.subr.mxu0 0.0
      %5430 = vmatpush1.msra.mxu0 0.0
      %5431 = vmatprep.subr.mxu0 0.0
      %5432 = vmatpush1.msra.mxu0 0.0
      %5433 = vmatprep.subr.mxu0 0.0
      %5434 = vmatpush1.msra.mxu0 0.0
      %5435 = vmatprep.subr.mxu0 0.0
      %5436 = vmatpush1.msra.mxu0 0.0
      %5437 = vmatprep.subr.mxu0 0.0
      %5438 = vmatpush1.msra.mxu0 0.0
      %5439 = vmatprep.subr.mxu0 0.0
      %5440 = vmatpush1.msra.mxu0 0.0
      %5441 = vmatprep.subr.mxu0 0.0
      %5442 = vmatpush1.msra.mxu0 0.0
      %5443 = vmatprep.subr.mxu0 0.0
      %5444 = vmatpush1.msra.mxu0 0.0
      %5445 = vmatprep.subr.mxu0 0.0
      %5446 = vmatpush1.msra.mxu0 0.0
      %5447 = vmatprep.subr.mxu0 0.0
      %5448 = vmatpush1.msra.mxu0 0.0
      %5449 = vmatprep.subr.mxu0 0.0
      %5450 = vmatpush1.msra.mxu0 0.0
      %5451 = vmatprep.subr.mxu0 0.0
      %5452 = vmatpush1.msra.mxu0 0.0
      %5453 = vmatprep.subr.mxu0 0.0
      %5454 = vmatpush1.msra.mxu0 0.0
      %5455 = vmatprep.subr.mxu0 0.0
      %5456 = vmatpush1.msra.mxu0 0.0
      %5457 = vmatprep.subr.mxu0 0.0
      %5458 = vmatpush1.msra.mxu0 0.0
      %5459 = vmatprep.subr.mxu0 0.0
      %5460 = vmatpush1.msra.mxu0 0.0
      %5461 = vmatprep.mubr.f32.mxu0 0.0
      %5462 = vmatmul.mubr.f32.gmra.mrb[0].mxu0 %v5368
      %v5463 = vpop.f32.mrb[0].mxu0
      %v5464 = vadd.f32 0.0, %v5463
      %v5465 = vpop.f32.mrb[0].mxu0
      %5466 = vmatprep.mubr.f32.mxu0 0.0
      %5467 = vmatmul.mubr.f32.gmra.mrb[0].mxu0 %v5371
      %v5468 = vpop.f32.mrb[0].mxu0
      %v5469 = vadd.f32 0.0, %v5468
      %v5470 = vpop.f32.mrb[0].mxu0
      %5471 = vmatprep.mubr.f32.mxu0 0.0
      %5472 = vmatmul.mubr.f32.gmra.mrb[0].mxu0 %v5374
      %v5473 = vpop.f32.mrb[0].mxu0
      %v5474 = vadd.f32 0.0, %v5473
      %v5475 = vpop.f32.mrb[0].mxu0
      %5476 = vmatprep.mubr.f32.mxu0 0.0
      %5477 = vmatmul.mubr.f32.gmra.mrb[0].mxu0 %v5377
      %v5478 = vpop.f32.mrb[0].mxu0
      %v5479 = vadd.f32 0.0, %v5478
      %v5480 = vpop.f32.mrb[0].mxu0
      %5481 = vmatprep.mubr.f32.mxu0 0.0
      %5482 = vmatmul.mubr.f32.gmra.mrb[0].mxu0 %v5380
      %v5483 = vpop.f32.mrb[0].mxu0
      %v5484 = vadd.f32 0.0, %v5483
      %v5485 = vpop.f32.mrb[0].mxu0
      %5486 = vmatprep.mubr.f32.mxu0 0.0
      %5487 = vmatmul.mubr.f32.gmra.mrb[0].mxu0 %v5383
      %v5488 = vpop.f32.mrb[0].mxu0
      %v5489 = vadd.f32 0.0, %v5488
      %v5490 = vpop.f32.mrb[0].mxu0
      %5491 = vmatprep.mubr.f32.mxu0 0.0
      %5492 = vmatmul.mubr.f32.gmra.mrb[0].mxu0 %v5386
      %v5493 = vpop.f32.mrb[0].mxu0
      %v5494 = vadd.f32 0.0, %v5493
      %v5495 = vpop.f32.mrb[0].mxu0
      %5496 = vmatprep.mubr.f32.mxu0 0.0
      %5497 = vmatmul.mubr.f32.gmra.mrb[0].mxu0 %v5389
      %v5498 = vpop.f32.mrb[0].mxu0
      %v5499 = vadd.f32 0.0, %v5498
      %v5500 = vpop.f32.mrb[0].mxu0
      %5501 = vmatprep.mubr.f32.mxu0 0.0
      %5502 = vmatmul.mubr.f32.gmra.mrb[0].mxu0 %v5392
      %v5503 = vpop.f32.mrb[0].mxu0
      %v5504 = vadd.f32 0.0, %v5503
      %v5505 = vpop.f32.mrb[0].mxu0
      %5506 = vmatprep.mubr.f32.mxu0 0.0
      %5507 = vmatmul.mubr.f32.gmra.mrb[0].mxu0 %v5395
      %v5508 = vpop.f32.mrb[0].mxu0
      %v5509 = vadd.f32 0.0, %v5508
      %v5510 = vpop.f32.mrb[0].mxu0
      %5511 = vdwg.mxu0
      %v5512 = vadd.f32 %v5345, %v5464
      %v5513 = vadd.f32 %v5346, %v5469
      %v5514 = vadd.f32 %v5347, %v5474
      %v5515 = vadd.f32 %v5348, %v5479
      %v5516 = vadd.f32 %v5349, %v5484
      %v5517 = vadd.f32 %v5350, %v5489
      %v5518 = vadd.f32 %v5351, %v5494
      %v5519 = vadd.f32 %v5352, %v5499
      %v5520 = vadd.f32 %v5353, %v5504
      %v5521 = vadd.f32 %v5354, %v5509
      %v5522 = vld [vmem:[%s2181 + $0x15] sm:$0xff]
      %v5523 = vld [vmem:[%s2181 + $0x1d] sm:$0xff]
      %v5524 = vld [vmem:[%s2181 + $0x25] sm:$0xff]
      %v5525 = vld [vmem:[%s2181 + $0x2d] sm:$0xff]
      %v5526 = vld [vmem:[%s2181 + $0x35] sm:$0xff]
      %v5527 = vld [vmem:[%s2181 + $0x3d] sm:$0xff]
      %v5528 = vld [vmem:[%s2181 + $0x45] sm:$0xff]
      %v5529 = vld [vmem:[%s2181 + $0x4d] sm:$0xff]
      %v5530 = vld [vmem:[%s2181 + $0x55] sm:$0xff]
      %v5531 = vld [vmem:[%s2181 + $0x5d] sm:$0xff]
      %s5532 = scalar_lea.vmem %s4, 112
      %v5533 = vld [vmem:[%s5532] sm:$0xff]
      %v5535 = vsel %vm497, %v5522, 0
      %v5538 = vsel %vm497, %v5523, 0
      %v5541 = vsel %vm497, %v5524, 0
      %v5544 = vsel %vm497, %v5525, 0
      %v5547 = vsel %vm497, %v5526, 0
      %v5550 = vsel %vm497, %v5527, 0
      %v5553 = vsel %vm497, %v5528, 0
      %v5556 = vsel %vm497, %v5529, 0
      %v5559 = vsel %vm497, %v5530, 0
      %v5562 = vsel %vm497, %v5531, 0
      %5564 = vmatprep.subr.mxu0 0.0
      %5565 = vmatpush1.msra.mxu0 %v5533
      %5566 = vmatprep.subr.mxu0 0.0
      %5567 = vmatpush1.msra.mxu0 0.0
      %5568 = vmatprep.subr.mxu0 0.0
      %5569 = vmatpush1.msra.mxu0 0.0
      %5570 = vmatprep.subr.mxu0 0.0
      %5571 = vmatpush1.msra.mxu0 0.0
      %5572 = vmatprep.subr.mxu0 0.0
      %5573 = vmatpush1.msra.mxu0 0.0
      %5574 = vmatprep.subr.mxu0 0.0
      %5575 = vmatpush1.msra.mxu0 0.0
      %5576 = vmatprep.subr.mxu0 0.0
      %5577 = vmatpush1.msra.mxu0 0.0
      %5578 = vmatprep.subr.mxu0 0.0
      %5579 = vmatpush1.msra.mxu0 0.0
      %5580 = vmatprep.subr.mxu0 0.0
      %5581 = vmatpush1.msra.mxu0 0.0
      %5582 = vmatprep.subr.mxu0 0.0
      %5583 = vmatpush1.msra.mxu0 0.0
      %5584 = vmatprep.subr.mxu0 0.0
      %5585 = vmatpush1.msra.mxu0 0.0
      %5586 = vmatprep.subr.mxu0 0.0
      %5587 = vmatpush1.msra.mxu0 0.0
      %5588 = vmatprep.subr.mxu0 0.0
      %5589 = vmatpush1.msra.mxu0 0.0
      %5590 = vmatprep.subr.mxu0 0.0
      %5591 = vmatpush1.msra.mxu0 0.0
      %5592 = vmatprep.subr.mxu0 0.0
      %5593 = vmatpush1.msra.mxu0 0.0
      %5594 = vmatprep.subr.mxu0 0.0
      %5595 = vmatpush1.msra.mxu0 0.0
      %5596 = vmatprep.subr.mxu0 0.0
      %5597 = vmatpush1.msra.mxu0 0.0
      %5598 = vmatprep.subr.mxu0 0.0
      %5599 = vmatpush1.msra.mxu0 0.0
      %5600 = vmatprep.subr.mxu0 0.0
      %5601 = vmatpush1.msra.mxu0 0.0
      %5602 = vmatprep.subr.mxu0 0.0
      %5603 = vmatpush1.msra.mxu0 0.0
      %5604 = vmatprep.subr.mxu0 0.0
      %5605 = vmatpush1.msra.mxu0 0.0
      %5606 = vmatprep.subr.mxu0 0.0
      %5607 = vmatpush1.msra.mxu0 0.0
      %5608 = vmatprep.subr.mxu0 0.0
      %5609 = vmatpush1.msra.mxu0 0.0
      %5610 = vmatprep.subr.mxu0 0.0
      %5611 = vmatpush1.msra.mxu0 0.0
      %5612 = vmatprep.subr.mxu0 0.0
      %5613 = vmatpush1.msra.mxu0 0.0
      %5614 = vmatprep.subr.mxu0 0.0
      %5615 = vmatpush1.msra.mxu0 0.0
      %5616 = vmatprep.subr.mxu0 0.0
      %5617 = vmatpush1.msra.mxu0 0.0
      %5618 = vmatprep.subr.mxu0 0.0
      %5619 = vmatpush1.msra.mxu0 0.0
      %5620 = vmatprep.subr.mxu0 0.0
      %5621 = vmatpush1.msra.mxu0 0.0
      %5622 = vmatprep.subr.mxu0 0.0
      %5623 = vmatpush1.msra.mxu0 0.0
      %5624 = vmatprep.subr.mxu0 0.0
      %5625 = vmatpush1.msra.mxu0 0.0
      %5626 = vmatprep.subr.mxu0 0.0
      %5627 = vmatpush1.msra.mxu0 0.0
      %5628 = vmatprep.mubr.f32.mxu0 0.0
      %5629 = vmatmul.mubr.f32.gmra.mrb[0].mxu0 %v5535
      %v5630 = vpop.f32.mrb[0].mxu0
      %v5631 = vadd.f32 0.0, %v5630
      %v5632 = vpop.f32.mrb[0].mxu0
      %5633 = vmatprep.mubr.f32.mxu0 0.0
      %5634 = vmatmul.mubr.f32.gmra.mrb[0].mxu0 %v5538
      %v5635 = vpop.f32.mrb[0].mxu0
      %v5636 = vadd.f32 0.0, %v5635
      %v5637 = vpop.f32.mrb[0].mxu0
      %5638 = vmatprep.mubr.f32.mxu0 0.0
      %5639 = vmatmul.mubr.f32.gmra.mrb[0].mxu0 %v5541
      %v5640 = vpop.f32.mrb[0].mxu0
      %v5641 = vadd.f32 0.0, %v5640
      %v5642 = vpop.f32.mrb[0].mxu0
      %5643 = vmatprep.mubr.f32.mxu0 0.0
      %5644 = vmatmul.mubr.f32.gmra.mrb[0].mxu0 %v5544
      %v5645 = vpop.f32.mrb[0].mxu0
      %v5646 = vadd.f32 0.0, %v5645
      %v5647 = vpop.f32.mrb[0].mxu0
      %5648 = vmatprep.mubr.f32.mxu0 0.0
      %5649 = vmatmul.mubr.f32.gmra.mrb[0].mxu0 %v5547
      %v5650 = vpop.f32.mrb[0].mxu0
      %v5651 = vadd.f32 0.0, %v5650
      %v5652 = vpop.f32.mrb[0].mxu0
      %5653 = vmatprep.mubr.f32.mxu0 0.0
      %5654 = vmatmul.mubr.f32.gmra.mrb[0].mxu0 %v5550
      %v5655 = vpop.f32.mrb[0].mxu0
      %v5656 = vadd.f32 0.0, %v5655
      %v5657 = vpop.f32.mrb[0].mxu0
      %5658 = vmatprep.mubr.f32.mxu0 0.0
      %5659 = vmatmul.mubr.f32.gmra.mrb[0].mxu0 %v5553
      %v5660 = vpop.f32.mrb[0].mxu0
      %v5661 = vadd.f32 0.0, %v5660
      %v5662 = vpop.f32.mrb[0].mxu0
      %5663 = vmatprep.mubr.f32.mxu0 0.0
      %5664 = vmatmul.mubr.f32.gmra.mrb[0].mxu0 %v5556
      %v5665 = vpop.f32.mrb[0].mxu0
      %v5666 = vadd.f32 0.0, %v5665
      %v5667 = vpop.f32.mrb[0].mxu0
      %5668 = vmatprep.mubr.f32.mxu0 0.0
      %5669 = vmatmul.mubr.f32.gmra.mrb[0].mxu0 %v5559
      %v5670 = vpop.f32.mrb[0].mxu0
      %v5671 = vadd.f32 0.0, %v5670
      %v5672 = vpop.f32.mrb[0].mxu0
      %5673 = vmatprep.mubr.f32.mxu0 0.0
      %5674 = vmatmul.mubr.f32.gmra.mrb[0].mxu0 %v5562
      %v5675 = vpop.f32.mrb[0].mxu0
      %v5676 = vadd.f32 0.0, %v5675
      %v5677 = vpop.f32.mrb[0].mxu0
      %5678 = vdwg.mxu0
      %v5679 = vadd.f32 %v5512, %v5631
      %v5680 = vadd.f32 %v5513, %v5636
      %v5681 = vadd.f32 %v5514, %v5641
      %v5682 = vadd.f32 %v5515, %v5646
      %v5683 = vadd.f32 %v5516, %v5651
      %v5684 = vadd.f32 %v5517, %v5656
      %v5685 = vadd.f32 %v5518, %v5661
      %v5686 = vadd.f32 %v5519, %v5666
      %v5687 = vadd.f32 %v5520, %v5671
      %v5688 = vadd.f32 %v5521, %v5676
      %v5689 = vld [vmem:[#allocation2 + $0x16] sm:$0xff]
      %v5690 = vld [vmem:[#allocation2 + $0x1e] sm:$0xff]
      %v5691 = vld [vmem:[#allocation2 + $0x26] sm:$0xff]
      %v5692 = vld [vmem:[#allocation2 + $0x2e] sm:$0xff]
      %v5693 = vld [vmem:[#allocation2 + $0x36] sm:$0xff]
      %v5694 = vld [vmem:[#allocation2 + $0x3e] sm:$0xff]
      %v5695 = vld [vmem:[#allocation2 + $0x46] sm:$0xff]
      %v5696 = vld [vmem:[#allocation2 + $0x4e] sm:$0xff]
      %v5697 = vld [vmem:[#allocation2 + $0x56] sm:$0xff]
      %v5698 = vld [vmem:[#allocation2 + $0x5e] sm:$0xff]
      %s5699 = scalar_lea.vmem %s3, 120
      %v5700 = vld [vmem:[%s5699] sm:$0xff]
      %v5702 = vsel %vm497, %v5689, 0
      %v5705 = vsel %vm497, %v5690, 0
      %v5708 = vsel %vm497, %v5691, 0
      %v5711 = vsel %vm497, %v5692, 0
      %v5714 = vsel %vm497, %v5693, 0
      %v5717 = vsel %vm497, %v5694, 0
      %v5720 = vsel %vm497, %v5695, 0
      %v5723 = vsel %vm497, %v5696, 0
      %v5726 = vsel %vm497, %v5697, 0
      %v5729 = vsel %vm497, %v5698, 0
      %5731 = vmatprep.subr.mxu0 0.0
      %5732 = vmatpush1.msra.mxu0 %v5700
      %5733 = vmatprep.subr.mxu0 0.0
      %5734 = vmatpush1.msra.mxu0 0.0
      %5735 = vmatprep.subr.mxu0 0.0
      %5736 = vmatpush1.msra.mxu0 0.0
      %5737 = vmatprep.subr.mxu0 0.0
      %5738 = vmatpush1.msra.mxu0 0.0
      %5739 = vmatprep.subr.mxu0 0.0
      %5740 = vmatpush1.msra.mxu0 0.0
      %5741 = vmatprep.subr.mxu0 0.0
      %5742 = vmatpush1.msra.mxu0 0.0
      %5743 = vmatprep.subr.mxu0 0.0
      %5744 = vmatpush1.msra.mxu0 0.0
      %5745 = vmatprep.subr.mxu0 0.0
      %5746 = vmatpush1.msra.mxu0 0.0
      %5747 = vmatprep.subr.mxu0 0.0
      %5748 = vmatpush1.msra.mxu0 0.0
      %5749 = vmatprep.subr.mxu0 0.0
      %5750 = vmatpush1.msra.mxu0 0.0
      %5751 = vmatprep.subr.mxu0 0.0
      %5752 = vmatpush1.msra.mxu0 0.0
      %5753 = vmatprep.subr.mxu0 0.0
      %5754 = vmatpush1.msra.mxu0 0.0
      %5755 = vmatprep.subr.mxu0 0.0
      %5756 = vmatpush1.msra.mxu0 0.0
      %5757 = vmatprep.subr.mxu0 0.0
      %5758 = vmatpush1.msra.mxu0 0.0
      %5759 = vmatprep.subr.mxu0 0.0
      %5760 = vmatpush1.msra.mxu0 0.0
      %5761 = vmatprep.subr.mxu0 0.0
      %5762 = vmatpush1.msra.mxu0 0.0
      %5763 = vmatprep.subr.mxu0 0.0
      %5764 = vmatpush1.msra.mxu0 0.0
      %5765 = vmatprep.subr.mxu0 0.0
      %5766 = vmatpush1.msra.mxu0 0.0
      %5767 = vmatprep.subr.mxu0 0.0
      %5768 = vmatpush1.msra.mxu0 0.0
      %5769 = vmatprep.subr.mxu0 0.0
      %5770 = vmatpush1.msra.mxu0 0.0
      %5771 = vmatprep.subr.mxu0 0.0
      %5772 = vmatpush1.msra.mxu0 0.0
      %5773 = vmatprep.subr.mxu0 0.0
      %5774 = vmatpush1.msra.mxu0 0.0
      %5775 = vmatprep.subr.mxu0 0.0
      %5776 = vmatpush1.msra.mxu0 0.0
      %5777 = vmatprep.subr.mxu0 0.0
      %5778 = vmatpush1.msra.mxu0 0.0
      %5779 = vmatprep.subr.mxu0 0.0
      %5780 = vmatpush1.msra.mxu0 0.0
      %5781 = vmatprep.subr.mxu0 0.0
      %5782 = vmatpush1.msra.mxu0 0.0
      %5783 = vmatprep.subr.mxu0 0.0
      %5784 = vmatpush1.msra.mxu0 0.0
      %5785 = vmatprep.subr.mxu0 0.0
      %5786 = vmatpush1.msra.mxu0 0.0
      %5787 = vmatprep.subr.mxu0 0.0
      %5788 = vmatpush1.msra.mxu0 0.0
      %5789 = vmatprep.subr.mxu0 0.0
      %5790 = vmatpush1.msra.mxu0 0.0
      %5791 = vmatprep.subr.mxu0 0.0
      %5792 = vmatpush1.msra.mxu0 0.0
      %5793 = vmatprep.subr.mxu0 0.0
      %5794 = vmatpush1.msra.mxu0 0.0
      %5795 = vmatprep.mubr.f32.mxu0 0.0
      %5796 = vmatmul.mubr.f32.gmra.mrb[0].mxu0 %v5702
      %v5797 = vpop.f32.mrb[0].mxu0
      %v5798 = vadd.f32 0.0, %v5797
      %v5799 = vpop.f32.mrb[0].mxu0
      %5800 = vmatprep.mubr.f32.mxu0 0.0
      %5801 = vmatmul.mubr.f32.gmra.mrb[0].mxu0 %v5705
      %v5802 = vpop.f32.mrb[0].mxu0
      %v5803 = vadd.f32 0.0, %v5802
      %v5804 = vpop.f32.mrb[0].mxu0
      %5805 = vmatprep.mubr.f32.mxu0 0.0
      %5806 = vmatmul.mubr.f32.gmra.mrb[0].mxu0 %v5708
      %v5807 = vpop.f32.mrb[0].mxu0
      %v5808 = vadd.f32 0.0, %v5807
      %v5809 = vpop.f32.mrb[0].mxu0
      %5810 = vmatprep.mubr.f32.mxu0 0.0
      %5811 = vmatmul.mubr.f32.gmra.mrb[0].mxu0 %v5711
      %v5812 = vpop.f32.mrb[0].mxu0
      %v5813 = vadd.f32 0.0, %v5812
      %v5814 = vpop.f32.mrb[0].mxu0
      %5815 = vmatprep.mubr.f32.mxu0 0.0
      %5816 = vmatmul.mubr.f32.gmra.mrb[0].mxu0 %v5714
      %v5817 = vpop.f32.mrb[0].mxu0
      %v5818 = vadd.f32 0.0, %v5817
      %v5819 = vpop.f32.mrb[0].mxu0
      %5820 = vmatprep.mubr.f32.mxu0 0.0
      %5821 = vmatmul.mubr.f32.gmra.mrb[0].mxu0 %v5717
      %v5822 = vpop.f32.mrb[0].mxu0
      %v5823 = vadd.f32 0.0, %v5822
      %v5824 = vpop.f32.mrb[0].mxu0
      %5825 = vmatprep.mubr.f32.mxu0 0.0
      %5826 = vmatmul.mubr.f32.gmra.mrb[0].mxu0 %v5720
      %v5827 = vpop.f32.mrb[0].mxu0
      %v5828 = vadd.f32 0.0, %v5827
      %v5829 = vpop.f32.mrb[0].mxu0
      %5830 = vmatprep.mubr.f32.mxu0 0.0
      %5831 = vmatmul.mubr.f32.gmra.mrb[0].mxu0 %v5723
      %v5832 = vpop.f32.mrb[0].mxu0
      %v5833 = vadd.f32 0.0, %v5832
      %v5834 = vpop.f32.mrb[0].mxu0
      %5835 = vmatprep.mubr.f32.mxu0 0.0
      %5836 = vmatmul.mubr.f32.gmra.mrb[0].mxu0 %v5726
      %v5837 = vpop.f32.mrb[0].mxu0
      %v5838 = vadd.f32 0.0, %v5837
      %v5839 = vpop.f32.mrb[0].mxu0
      %5840 = vmatprep.mubr.f32.mxu0 0.0
      %5841 = vmatmul.mubr.f32.gmra.mrb[0].mxu0 %v5729
      %v5842 = vpop.f32.mrb[0].mxu0
      %v5843 = vadd.f32 0.0, %v5842
      %v5844 = vpop.f32.mrb[0].mxu0
      %5845 = vdwg.mxu0
      %v5846 = vadd.f32 %v5679, %v5798
      %v5847 = vadd.f32 %v5680, %v5803
      %v5848 = vadd.f32 %v5681, %v5808
      %v5849 = vadd.f32 %v5682, %v5813
      %v5850 = vadd.f32 %v5683, %v5818
      %v5851 = vadd.f32 %v5684, %v5823
      %v5852 = vadd.f32 %v5685, %v5828
      %v5853 = vadd.f32 %v5686, %v5833
      %v5854 = vadd.f32 %v5687, %v5838
      %v5855 = vadd.f32 %v5688, %v5843
      %v5856 = vld [vmem:[%s293 + $0x16] sm:$0xff]
      %v5857 = vld [vmem:[%s293 + $0x1e] sm:$0xff]
      %v5858 = vld [vmem:[%s293 + $0x26] sm:$0xff]
      %v5859 = vld [vmem:[%s293 + $0x2e] sm:$0xff]
      %v5860 = vld [vmem:[%s293 + $0x36] sm:$0xff]
      %v5861 = vld [vmem:[%s293 + $0x3e] sm:$0xff]
      %v5862 = vld [vmem:[%s293 + $0x46] sm:$0xff]
      %v5863 = vld [vmem:[%s293 + $0x4e] sm:$0xff]
      %v5864 = vld [vmem:[%s293 + $0x56] sm:$0xff]
      %v5865 = vld [vmem:[%s293 + $0x5e] sm:$0xff]
      %s5866 = scalar_lea.vmem %s4, 120
      %v5867 = vld [vmem:[%s5866] sm:$0xff]
      %v5869 = vsel %vm497, %v5856, 0
      %v5872 = vsel %vm497, %v5857, 0
      %v5875 = vsel %vm497, %v5858, 0
      %v5878 = vsel %vm497, %v5859, 0
      %v5881 = vsel %vm497, %v5860, 0
      %v5884 = vsel %vm497, %v5861, 0
      %v5887 = vsel %vm497, %v5862, 0
      %v5890 = vsel %vm497, %v5863, 0
      %v5893 = vsel %vm497, %v5864, 0
      %v5896 = vsel %vm497, %v5865, 0
      %5898 = vmatprep.subr.mxu0 0.0
      %5899 = vmatpush1.msra.mxu0 %v5867
      %5900 = vmatprep.subr.mxu0 0.0
      %5901 = vmatpush1.msra.mxu0 0.0
      %5902 = vmatprep.subr.mxu0 0.0
      %5903 = vmatpush1.msra.mxu0 0.0
      %5904 = vmatprep.subr.mxu0 0.0
      %5905 = vmatpush1.msra.mxu0 0.0
      %5906 = vmatprep.subr.mxu0 0.0
      %5907 = vmatpush1.msra.mxu0 0.0
      %5908 = vmatprep.subr.mxu0 0.0
      %5909 = vmatpush1.msra.mxu0 0.0
      %5910 = vmatprep.subr.mxu0 0.0
      %5911 = vmatpush1.msra.mxu0 0.0
      %5912 = vmatprep.subr.mxu0 0.0
      %5913 = vmatpush1.msra.mxu0 0.0
      %5914 = vmatprep.subr.mxu0 0.0
      %5915 = vmatpush1.msra.mxu0 0.0
      %5916 = vmatprep.subr.mxu0 0.0
      %5917 = vmatpush1.msra.mxu0 0.0
      %5918 = vmatprep.subr.mxu0 0.0
      %5919 = vmatpush1.msra.mxu0 0.0
      %5920 = vmatprep.subr.mxu0 0.0
      %5921 = vmatpush1.msra.mxu0 0.0
      %5922 = vmatprep.subr.mxu0 0.0
      %5923 = vmatpush1.msra.mxu0 0.0
      %5924 = vmatprep.subr.mxu0 0.0
      %5925 = vmatpush1.msra.mxu0 0.0
      %5926 = vmatprep.subr.mxu0 0.0
      %5927 = vmatpush1.msra.mxu0 0.0
      %5928 = vmatprep.subr.mxu0 0.0
      %5929 = vmatpush1.msra.mxu0 0.0
      %5930 = vmatprep.subr.mxu0 0.0
      %5931 = vmatpush1.msra.mxu0 0.0
      %5932 = vmatprep.subr.mxu0 0.0
      %5933 = vmatpush1.msra.mxu0 0.0
      %5934 = vmatprep.subr.mxu0 0.0
      %5935 = vmatpush1.msra.mxu0 0.0
      %5936 = vmatprep.subr.mxu0 0.0
      %5937 = vmatpush1.msra.mxu0 0.0
      %5938 = vmatprep.subr.mxu0 0.0
      %5939 = vmatpush1.msra.mxu0 0.0
      %5940 = vmatprep.subr.mxu0 0.0
      %5941 = vmatpush1.msra.mxu0 0.0
      %5942 = vmatprep.subr.mxu0 0.0
      %5943 = vmatpush1.msra.mxu0 0.0
      %5944 = vmatprep.subr.mxu0 0.0
      %5945 = vmatpush1.msra.mxu0 0.0
      %5946 = vmatprep.subr.mxu0 0.0
      %5947 = vmatpush1.msra.mxu0 0.0
      %5948 = vmatprep.subr.mxu0 0.0
      %5949 = vmatpush1.msra.mxu0 0.0
      %5950 = vmatprep.subr.mxu0 0.0
      %5951 = vmatpush1.msra.mxu0 0.0
      %5952 = vmatprep.subr.mxu0 0.0
      %5953 = vmatpush1.msra.mxu0 0.0
      %5954 = vmatprep.subr.mxu0 0.0
      %5955 = vmatpush1.msra.mxu0 0.0
      %5956 = vmatprep.subr.mxu0 0.0
      %5957 = vmatpush1.msra.mxu0 0.0
      %5958 = vmatprep.subr.mxu0 0.0
      %5959 = vmatpush1.msra.mxu0 0.0
      %5960 = vmatprep.subr.mxu0 0.0
      %5961 = vmatpush1.msra.mxu0 0.0
      %5962 = vmatprep.mubr.f32.mxu0 0.0
      %5963 = vmatmul.mubr.f32.gmra.mrb[0].mxu0 %v5869
      %v5964 = vpop.f32.mrb[0].mxu0
      %v5965 = vadd.f32 0.0, %v5964
      %v5966 = vpop.f32.mrb[0].mxu0
      %5967 = vmatprep.mubr.f32.mxu0 0.0
      %5968 = vmatmul.mubr.f32.gmra.mrb[0].mxu0 %v5872
      %v5969 = vpop.f32.mrb[0].mxu0
      %v5970 = vadd.f32 0.0, %v5969
      %v5971 = vpop.f32.mrb[0].mxu0
      %5972 = vmatprep.mubr.f32.mxu0 0.0
      %5973 = vmatmul.mubr.f32.gmra.mrb[0].mxu0 %v5875
      %v5974 = vpop.f32.mrb[0].mxu0
      %v5975 = vadd.f32 0.0, %v5974
      %v5976 = vpop.f32.mrb[0].mxu0
      %5977 = vmatprep.mubr.f32.mxu0 0.0
      %5978 = vmatmul.mubr.f32.gmra.mrb[0].mxu0 %v5878
      %v5979 = vpop.f32.mrb[0].mxu0
      %v5980 = vadd.f32 0.0, %v5979
      %v5981 = vpop.f32.mrb[0].mxu0
      %5982 = vmatprep.mubr.f32.mxu0 0.0
      %5983 = vmatmul.mubr.f32.gmra.mrb[0].mxu0 %v5881
      %v5984 = vpop.f32.mrb[0].mxu0
      %v5985 = vadd.f32 0.0, %v5984
      %v5986 = vpop.f32.mrb[0].mxu0
      %5987 = vmatprep.mubr.f32.mxu0 0.0
      %5988 = vmatmul.mubr.f32.gmra.mrb[0].mxu0 %v5884
      %v5989 = vpop.f32.mrb[0].mxu0
      %v5990 = vadd.f32 0.0, %v5989
      %v5991 = vpop.f32.mrb[0].mxu0
      %5992 = vmatprep.mubr.f32.mxu0 0.0
      %5993 = vmatmul.mubr.f32.gmra.mrb[0].mxu0 %v5887
      %v5994 = vpop.f32.mrb[0].mxu0
      %v5995 = vadd.f32 0.0, %v5994
      %v5996 = vpop.f32.mrb[0].mxu0
      %5997 = vmatprep.mubr.f32.mxu0 0.0
      %5998 = vmatmul.mubr.f32.gmra.mrb[0].mxu0 %v5890
      %v5999 = vpop.f32.mrb[0].mxu0
      %v6000 = vadd.f32 0.0, %v5999
      %v6001 = vpop.f32.mrb[0].mxu0
      %6002 = vmatprep.mubr.f32.mxu0 0.0
      %6003 = vmatmul.mubr.f32.gmra.mrb[0].mxu0 %v5893
      %v6004 = vpop.f32.mrb[0].mxu0
      %v6005 = vadd.f32 0.0, %v6004
      %v6006 = vpop.f32.mrb[0].mxu0
      %6007 = vmatprep.mubr.f32.mxu0 0.0
      %6008 = vmatmul.mubr.f32.gmra.mrb[0].mxu0 %v5896
      %v6009 = vpop.f32.mrb[0].mxu0
      %v6010 = vadd.f32 0.0, %v6009
      %v6011 = vpop.f32.mrb[0].mxu0
      %6012 = vdwg.mxu0
      %v6013 = vadd.f32 %v5846, %v5965
      %v6014 = vadd.f32 %v5847, %v5970
      %v6015 = vadd.f32 %v5848, %v5975
      %v6016 = vadd.f32 %v5849, %v5980
      %v6017 = vadd.f32 %v5850, %v5985
      %v6018 = vadd.f32 %v5851, %v5990
      %v6019 = vadd.f32 %v5852, %v5995
      %v6020 = vadd.f32 %v5853, %v6000
      %v6021 = vadd.f32 %v5854, %v6005
      %v6022 = vadd.f32 %v5855, %v6010
      %v6023 = vld [vmem:[%s5] sm:$0x1]
      %v6025 = vlaneseq
      %v6026 = vshrl.u32 %v6025, 7
      %v6027 = vsub.s32 0, %v6026
      %v6028 = vrot.slane %v6023, %v6027
      %v6030 = vmul.f32 %v6013, %v6028
      %v6031 = vmul.f32 %v6014, %v6028
      %v6032 = vmul.f32 %v6015, %v6028
      %v6033 = vmul.f32 %v6016, %v6028
      %v6034 = vmul.f32 %v6017, %v6028
      %v6035 = vmul.f32 %v6018, %v6028
      %v6036 = vmul.f32 %v6019, %v6028
      %v6037 = vmul.f32 %v6020, %v6028
      %v6038 = vmul.f32 %v6021, %v6028
      %v6039 = vmul.f32 %v6022, %v6028
      %v6040 = vld [vmem:[%s6] sm:$0x1]
      %v6042 = vlaneseq
      %v6043 = vshrl.u32 %v6042, 7
      %v6044 = vsub.s32 0, %v6043
      %v6045 = vrot.slane %v6040, %v6044
      %v6047 = vadd.f32 %v6030, %v6045
      %v6048 = vadd.f32 %v6031, %v6045
      %v6049 = vadd.f32 %v6032, %v6045
      %v6050 = vadd.f32 %v6033, %v6045
      %v6051 = vadd.f32 %v6034, %v6045
      %v6052 = vadd.f32 %v6035, %v6045
      %v6053 = vadd.f32 %v6036, %v6045
      %v6054 = vadd.f32 %v6037, %v6045
      %v6055 = vadd.f32 %v6038, %v6045
      %v6056 = vadd.f32 %v6039, %v6045
      %v6057 = vmax.f32 %v6047, 0.0
      %v6058 = vmax.f32 %v6048, 0.0
      %v6059 = vmax.f32 %v6049, 0.0
      %v6060 = vmax.f32 %v6050, 0.0
      %v6061 = vmax.f32 %v6051, 0.0
      %v6062 = vmax.f32 %v6052, 0.0
      %v6063 = vmax.f32 %v6053, 0.0
      %v6064 = vmax.f32 %v6054, 0.0
      %v6065 = vmax.f32 %v6055, 0.0
      %v6066 = vmax.f32 %v6056, 0.0
      %vm6067 = vcmask 261120
      %6068 = vst.msk [vmem:[%s298] sm:$0xff] %vm6067, %v6057
      %6069 = vst.msk [vmem:[%s298 + $0x8] sm:$0xff] %vm6067, %v6058
      %6070 = vst.msk [vmem:[%s298 + $0x10] sm:$0xff] %vm6067, %v6059
      %6071 = vst.msk [vmem:[%s298 + $0x18] sm:$0xff] %vm6067, %v6060
      %6072 = vst.msk [vmem:[%s298 + $0x20] sm:$0xff] %vm6067, %v6061
      %6073 = vst.msk [vmem:[%s298 + $0x28] sm:$0xff] %vm6067, %v6062
      %6074 = vst.msk [vmem:[%s298 + $0x30] sm:$0xff] %vm6067, %v6063
      %6075 = vst.msk [vmem:[%s298 + $0x38] sm:$0xff] %vm6067, %v6064
      %6076 = vst.msk [vmem:[%s298 + $0x40] sm:$0xff] %vm6067, %v6065
      %6077 = vst.msk [vmem:[%s298 + $0x48] sm:$0xff] %vm6067, %v6066
      %p6078 = scmp.lt.s32.totalorder %s18, 1
      %s6079 = scalar_select %p6078, %s18, 1
      %s6080 = smul.addr %s6079, 10
      %s6081 = smul.addr %s6080, 8
      %s6082 = scalar_lea.vmem %s7, %s6081
      // Predicated region
      $region49: #{tpu_custom_call.1} parent=47 // pred_check
        %p6083 = pneg %p193
      $region50: #{tpu_custom_call.1} parent=47 // pred_check_branch
        %6085 = sbr.rel (%p6083) target = $region52
      $region51: #{tpu_custom_call.1} parent=47 // pred_region
        _
      $region52: #{tpu_custom_call.1} parent=47 // pred_fallthru
        _
    $region48: #{tpu_custom_call.1} parent=5 // pred_fallthru
      _
    %p6086 = scmp.le.s32.totalorder 2, %s13
    // Predicated region
    $region53: #{tpu_custom_call.1} parent=5 // pred_check
      %p6087 = pneg %p6086
    $region54: #{tpu_custom_call.1} parent=5 // pred_check_branch
      %6089 = sbr.rel (%p6087) target = $region56
    $region55: #{tpu_custom_call.1} parent=5 // pred_region
      %s6090 = ssub.s32 %s13, 2
      // Predicated region
      $region57: #{tpu_custom_call.1} parent=55 // pred_check
        %p6091 = pneg %p199
      $region58: #{tpu_custom_call.1} parent=55 // pred_check_branch
        %6093 = sbr.rel (%p6091) target = $region60
      $region59: #{tpu_custom_call.1} parent=55 // pred_region
        %p6094 = scmp.lt.s32.totalorder %s19, 1
        %s6095 = scalar_select %p6094, %s19, 1
        %s6096 = smul.addr %s6095, 10
        %s6097 = smul.addr %s6096, 8
        %s6098 = scalar_lea.vmem %s7, %s6097
      $region60: #{tpu_custom_call.1} parent=55 // pred_fallthru
        _
    $region56: #{tpu_custom_call.1} parent=5 // pred_fallthru
      _
  $region6: #{tpu_custom_call.1} parent=0 // loop_footer
    %s17 = sadd.s32 1, %s13
  $region7: #{tpu_custom_call.1} parent=0 // loop_footer_branch
    %12 = sbr.rel target = $region3
  $region8: #{tpu_custom_call.1} parent=0 // loop_exit
    _

</llo_original>
